<compile_context>
chip_gen: v7x
topology: tpu7x:2x2x1
jax: 0.10.0
libtpu: 0.0.40
codegen_flags: <defaults>
</compile_context>

<pallas_src>
import functools

import jax
import jax.numpy as jnp
from jax.experimental import pallas as pl
from jax.experimental.pallas import tpu as pltpu


def _perceiver_attn_kernel(x_ref, lat_ref, ln_ref, wlat_ref, wkv_ref, wout_ref,
                           o_ref, head_acc_ref, *, heads, dim_head, eps,
                           block_bt, n1, n2, compute_dtype):
    TB = block_bt
    inner = heads * dim_head
    f32 = jnp.float32
    exact_softmax = jnp.dtype(compute_dtype) == jnp.dtype(jnp.float32)

    # ---- LayerNorms (f32 math, cast once to compute_dtype) -----------------
    ln = ln_ref[...].astype(f32)                  # (4, D): gm, bm, gl, bl

    def layernorm(t_ref, g, bta):
        t = t_ref[...].astype(f32)
        mu = jnp.mean(t, axis=-1, keepdims=True)
        var = jnp.mean((t - mu) * (t - mu), axis=-1, keepdims=True)
        return ((t - mu) * jax.lax.rsqrt(var + eps) * g + bta).astype(compute_dtype)

    xn = layernorm(x_ref, ln[0], ln[1])           # (TB*n1, D)  norm_media
    latn = layernorm(lat_ref, ln[2], ln[3])       # (TB*n2, D)  norm_latents

    # ---- Fused projections: two wide-N MXU matmuls --------------------------
    # w_lat = [wq*scale | wk | wv] (D, 3*inner);  w_kv = [wk | wv] (D, 2*inner)
    qkv_l = jnp.dot(latn, wlat_ref[...], preferred_element_type=compute_dtype)  # (TB*n2, 3*inner)
    kv_x = jnp.dot(xn, wkv_ref[...], preferred_element_type=compute_dtype)      # (TB*n1, 2*inner)

    q3 = qkv_l[:, :inner].reshape(TB, n2, inner)
    kl3 = qkv_l[:, inner:2 * inner].reshape(TB, n2, inner)
    vl3 = qkv_l[:, 2 * inner:].reshape(TB, n2, inner)
    kx3 = kv_x[:, :inner].reshape(TB, n1, inner)
    vx3 = kv_x[:, inner:].reshape(TB, n1, inner)

    # ---- Attention: static head loop, TB-batched 3-D einsums ---------------
    # Two-block softmax over keys = [media tokens ; latent tokens] (no concat
    # of the kv input).  Each head's output is stored into the VMEM slab at
    # its lane offset, so no per-head lane concat and no live head_outs list.
    for h in range(heads):
        sl = slice(h * dim_head, (h + 1) * dim_head)
        qh = q3[:, :, sl]                                            # (TB, n2, dh)
        sim_x = jnp.einsum('bqd,bkd->bqk', qh, kx3[:, :, sl],
                           preferred_element_type=f32)               # (TB, n2, n1)
        sim_l = jnp.einsum('bqd,bkd->bqk', qh, kl3[:, :, sl],
                           preferred_element_type=f32)               # (TB, n2, n2)
        m = jnp.maximum(jnp.max(sim_x, axis=-1, keepdims=True),
                        jnp.max(sim_l, axis=-1, keepdims=True))
        p_x = jnp.exp(sim_x - m)
        p_l = jnp.exp(sim_l - m)
        denom = (jnp.sum(p_x, axis=-1, keepdims=True)
                 + jnp.sum(p_l, axis=-1, keepdims=True))
        num = (jnp.einsum('bqk,bkd->bqd', p_x.astype(compute_dtype),
                          vx3[:, :, sl], preferred_element_type=f32)
               + jnp.einsum('bqk,bkd->bqd', p_l.astype(compute_dtype),
                            vl3[:, :, sl], preferred_element_type=f32))
        if exact_softmax:
            o_h = num / denom                       # exact on the f32 path
        else:
            o_h = num * pl.reciprocal(denom, approx=True)   # EUP, bf16 path
        head_acc_ref[:, sl] = o_h.reshape(TB * n2, dim_head).astype(compute_dtype)

    # ---- Output projection: one K=inner MXU matmul --------------------------
    o_ref[...] = jnp.dot(head_acc_ref[...], wout_ref[...],
                         preferred_element_type=f32).astype(o_ref.dtype)


def _vmem_budget_bytes():
    """Generation-aware scoped-VMEM target (v7x has 64 MiB, v5e/v6e 128 MiB)."""
    try:
        kind = jax.devices()[0].device_kind.lower()
    except Exception:  # e.g. interpret mode on CPU
        kind = ""
    if "v7" in kind or "7x" in kind:
        return 48 * 1024 * 1024
    return 96 * 1024 * 1024


def _vmem_estimate_bytes(block_bt, n1, n2, D, inner, in_bytes, cd_bytes):
    """Rough per-grid-step VMEM footprint (double-buffered I/O + residents)."""
    rows_x = block_bt * n1
    rows_l = block_bt * n2
    # Pipelined blocks (x, latents, out), double-buffered.
    blocks = 2 * (rows_x * D + 2 * rows_l * D) * in_bytes
    # Resident weights (fused lat weight, kv weight, out weight) + LN params,
    # conservatively counted double-buffered.
    weights = 2 * ((D * 3 * inner + D * 2 * inner + inner * D) * cd_bytes
                   + 4 * D * 4)
    # Head-output scratch slab.
    scratch = rows_l * inner * cd_bytes
    # Live intermediates: LN outputs, projections, one head's sim/p tensors,
    # output accumulator (f32).
    interm = (rows_x + rows_l) * D * 4
    interm += (rows_l * 3 * inner + rows_x * 2 * inner) * cd_bytes
    interm += 3 * rows_l * (n1 + n2) * 4
    interm += rows_l * D * 4
    return int(blocks + weights + scratch + 1.25 * interm)


def _choose_block_bt(BT, n1, n2, D, inner, in_bytes, cd_bytes, budget,
                     target_rows=512):
    """Pick how many (b, T) slices to batch per grid step (VMEM-aware)."""
    divisors = [d for d in range(1, BT + 1) if BT % d == 0]
    # Keep block row counts (8,*)-friendly unless the block is the full array.
    ok = [d for d in divisors
          if d == BT or ((d * n1) % 8 == 0 and (d * n2) % 8 == 0)]
    if not ok:
        ok = [BT]
    fitting = [d for d in ok
               if _vmem_estimate_bytes(d, n1, n2, D, inner, in_bytes,
                                       cd_bytes) <= budget]
    if not fitting:
        fitting = [ok[0]]
    # Smallest fitting divisor whose q rows reach target_rows, else biggest.
    tb = next((d for d in fitting if d * n2 >= target_rows), fitting[-1])
    # Keep >= 2 grid steps when possible (both v7x TensorCores get work).
    if BT // tb == 1 and BT >= 2:
        smaller = [d for d in fitting if d < tb]
        if smaller:
            tb = smaller[-1]
    # Prefer an even grid length so the "parallel" axis splits evenly over
    # the two v7x TensorCores.
    if (BT // tb) > 1 and (BT // tb) % 2 == 1:
        evens = [d for d in fitting if d <= tb and (BT // d) % 2 == 0]
        if evens:
            tb = evens[-1]
    return tb


def perceiver_attention(x, latents, params, *, heads, dim_head, eps=1e-5,
                        compute_dtype=jnp.bfloat16, block_bt=None,
                        vmem_limit_bytes=None):
    """x: (b, T, n1, D), latents: (b, T, n2, D) -> (b, T, n2, D).

    vision_attn_masks is not supported (None path only).
    # TODO(synk): vision_attn_masks (-inf attention bias) path not implemented.
    # TODO(synk): if a deployed D is not a multiple of 128, reshape the output
    # to a lane-dense slab (last dim >= 128) to avoid masked partial stores.
    """
    b, T, n1, D = x.shape
    n2 = latents.shape[2]
    BT = b * T
    inner = heads * dim_head
    scale = dim_head ** (-0.5)

    in_bytes = jnp.dtype(x.dtype).itemsize
    cd_bytes = jnp.dtype(compute_dtype).itemsize
    budget = _vmem_budget_bytes()

    if block_bt is None:
        block_bt = _choose_block_bt(BT, n1, n2, D, inner, in_bytes, cd_bytes,
                                    budget)
    assert BT % block_bt == 0, (BT, block_bt)
    grid_len = BT // block_bt

    # Lane-dense 2-D views: rows are (bt, token).
    xf = x.reshape(BT * n1, D)
    lf = latents.reshape(BT * n2, D)

    # Pack the four LayerNorm parameter vectors into one (4, D) array.
    ln = jnp.stack([params["gamma_media"], params["beta_media"],
                    params["gamma_latents"], params["beta_latents"]],
                   axis=0).astype(jnp.float32)

    # Fused weights (scale folded into wq); compute_dtype halves weight DMA.
    wq_scaled = params["wq"].astype(jnp.float32) * scale        # (D, inner)
    wkv = params["wkv"].astype(jnp.float32)                     # (D, 2*inner) = [wk|wv]
    w_lat = jnp.concatenate([wq_scaled, wkv], axis=1).astype(compute_dtype)  # (D, 3*inner)
    w_kv = wkv.astype(compute_dtype)                            # (D, 2*inner)
    wout = params["wout"].astype(compute_dtype)                 # (inner, D)

    kernel = functools.partial(
        _perceiver_attn_kernel, heads=heads, dim_head=dim_head, eps=eps,
        block_bt=block_bt, n1=n1, n2=n2, compute_dtype=compute_dtype)

    if vmem_limit_bytes is None:
        est = _vmem_estimate_bytes(block_bt, n1, n2, D, inner, in_bytes,
                                   cd_bytes)
        vmem_limit_bytes = int(min(budget, max(32 * 1024 * 1024, est)))

    out = pl.pallas_call(
        kernel,
        out_shape=jax.ShapeDtypeStruct((BT * n2, D), x.dtype),
        grid_spec=pltpu.PrefetchScalarGridSpec(
            num_scalar_prefetch=0,
            grid=(grid_len,),
            in_specs=[
                pl.BlockSpec((block_bt * n1, D), lambda i: (i, 0)),   # x
                pl.BlockSpec((block_bt * n2, D), lambda i: (i, 0)),   # latents
                pl.BlockSpec((4, D), lambda i: (0, 0)),               # LN params
                pl.BlockSpec((D, 3 * inner), lambda i: (0, 0)),       # [wq*s|wk|wv]
                pl.BlockSpec((D, 2 * inner), lambda i: (0, 0)),       # [wk|wv]
                pl.BlockSpec((inner, D), lambda i: (0, 0)),           # wout
            ],
            out_specs=pl.BlockSpec((block_bt * n2, D), lambda i: (i, 0)),
            scratch_shapes=[pltpu.VMEM((block_bt * n2, inner), compute_dtype)],
        ),
        compiler_params=pltpu.CompilerParams(
            dimension_semantics=("parallel",),
            vmem_limit_bytes=vmem_limit_bytes),
    )(xf, lf, ln, w_lat, w_kv, wout)

    return out.reshape(b, T, n2, D)


def perceiver_attention_ref(x, latents, params, *, heads, dim_head, eps=1e-5):
    """Pure-JAX f32 reference mirroring the PyTorch forward."""
    scale = dim_head ** (-0.5)

    def ln(t, g, b):
        mu = jnp.mean(t, axis=-1, keepdims=True)
        var = jnp.mean((t - mu) ** 2, axis=-1, keepdims=True)
        return (t - mu) / jnp.sqrt(var + eps) * g + b

    xn = ln(x, params["gamma_media"], params["beta_media"])
    latn = ln(latents, params["gamma_latents"], params["beta_latents"])

    q = latn @ params["wq"]
    kv_in = jnp.concatenate([xn, latn], axis=-2)
    kv = kv_in @ params["wkv"]
    inner = heads * dim_head
    k, v = kv[..., :inner], kv[..., inner:]

    def split_heads(t):  # b t n (h d) -> b h t n d
        b_, T_, n_, _ = t.shape
        return jnp.transpose(t.reshape(b_, T_, n_, heads, dim_head),
                             (0, 3, 1, 2, 4))

    q, k, v = split_heads(q), split_heads(k), split_heads(v)
    q = q * scale
    sim = jnp.einsum("bhtid,bhtjd->bhtij", q, k)
    sim = sim - jnp.max(sim, axis=-1, keepdims=True)
    attn = jax.nn.softmax(sim, axis=-1)
    out = jnp.einsum("bhtij,bhtjd->bhtid", attn, v)
    out = jnp.transpose(out, (0, 2, 3, 1, 4))  # b t n h d
    b_, T_, n_, _, _ = out.shape
    out = out.reshape(b_, T_, n_, inner)
    return out @ params["wout"]


if __name__ == "__main__":
    # Small shapes consistent with the module: dim=32, heads=4, dim_head=8.
    b, T, n1, n2, D = 2, 2, 16, 8, 32
    heads, dim_head = 4, 8
    inner = heads * dim_head

    key = jax.random.PRNGKey(0)
    k1, k2, k3, k4, k5, k6, k7, k8, k9 = jax.random.split(key, 9)

    x = jax.random.normal(k1, (b, T, n1, D), dtype=jnp.float32)
    latents = jax.random.normal(k2, (b, T, n2, D), dtype=jnp.float32)

    params = {
        "gamma_media": 1.0 + 0.1 * jax.random.normal(k3, (D,), dtype=jnp.float32),
        "beta_media": 0.1 * jax.random.normal(k4, (D,), dtype=jnp.float32),
        "gamma_latents": 1.0 + 0.1 * jax.random.normal(k5, (D,), dtype=jnp.float32),
        "beta_latents": 0.1 * jax.random.normal(k6, (D,), dtype=jnp.float32),
        "wq": jax.random.normal(k7, (D, inner), dtype=jnp.float32) / jnp.sqrt(D),
        "wkv": jax.random.normal(k8, (D, 2 * inner), dtype=jnp.float32) / jnp.sqrt(D),
        "wout": jax.random.normal(k9, (inner, D), dtype=jnp.float32) / jnp.sqrt(inner),
    }

    ref = perceiver_attention_ref(x, latents, params, heads=heads, dim_head=dim_head)

    # f32 compute path: tight check (exact softmax division on this path).
    out_f32 = perceiver_attention(x, latents, params, heads=heads,
                                  dim_head=dim_head, compute_dtype=jnp.float32)
    out_f32 = jax.block_until_ready(out_f32)
    assert out_f32.shape == (b, T, n2, D), out_f32.shape
    assert jnp.allclose(out_f32, ref, atol=2e-3, rtol=2e-3), \
        float(jnp.max(jnp.abs(out_f32 - ref)))

    # Default bf16 fast path (loose check: bf16 MXU inputs, f32 accumulation).
    out_bf16 = perceiver_attention(x, latents, params, heads=heads,
                                   dim_head=dim_head)
    out_bf16 = jax.block_until_ready(out_bf16)
    assert out_bf16.shape == (b, T, n2, D), out_bf16.shape
    assert jnp.allclose(out_bf16, ref, atol=5e-2, rtol=5e-2), \
        float(jnp.max(jnp.abs(out_bf16 - ref)))

    print("KERNEL_OK")
</pallas_src>

<mosaic_0001>
module attributes {stable_mosaic.version = 11 : i64} {
  func.func @_perceiver_attn_kernel(%arg0: i32, %arg1: memref<32x32xf32, #tpu.memory_space<vmem>>, %arg2: memref<16x32xf32, #tpu.memory_space<vmem>>, %arg3: memref<4x32xf32, #tpu.memory_space<vmem>>, %arg4: memref<32x96xf32, #tpu.memory_space<vmem>>, %arg5: memref<32x64xf32, #tpu.memory_space<vmem>>, %arg6: memref<32x32xf32, #tpu.memory_space<vmem>>, %arg7: memref<16x32xf32, #tpu.memory_space<vmem>>, %arg8: memref<16x32xf32, #tpu.memory_space<vmem>>) attributes {dimension_semantics = [#tpu.dimension_semantics<parallel>], iteration_bounds = array<i64: 2>, scalar_prefetch = 0 : i64, scratch_operands = 1 : i64, tpu.core_type = #tpu.core_type<tc>, window_params = [{transform_indices = @transform_0, window_bounds = array<i64: 32, 32>}, {transform_indices = @transform_1, window_bounds = array<i64: 16, 32>}, {pipeline_mode = #tpu.pipeline_mode<synchronous>, transform_indices = @transform_2, window_bounds = array<i64: 4, 32>}, {pipeline_mode = #tpu.pipeline_mode<synchronous>, transform_indices = @transform_3, window_bounds = array<i64: 32, 96>}, {pipeline_mode = #tpu.pipeline_mode<synchronous>, transform_indices = @transform_4, window_bounds = array<i64: 32, 64>}, {pipeline_mode = #tpu.pipeline_mode<synchronous>, transform_indices = @transform_5, window_bounds = array<i64: 32, 32>}, {transform_indices = @transform_6, window_bounds = array<i64: 16, 32>}]} {
    %c0 = arith.constant 0 : index
    %c0_0 = arith.constant 0 : index
    %0 = vector.load %arg3[%c0, %c0_0] : memref<4x32xf32, #tpu.memory_space<vmem>>, vector<4x32xf32>
    %1 = vector.extract_strided_slice %0 {offsets = [0, 0], sizes = [1, 32], strides = [1, 1]} : vector<4x32xf32> to vector<1x32xf32>
    %2 = vector.shape_cast %1 : vector<1x32xf32> to vector<32xf32>
    %3 = vector.extract_strided_slice %0 {offsets = [1, 0], sizes = [1, 32], strides = [1, 1]} : vector<4x32xf32> to vector<1x32xf32>
    %4 = vector.shape_cast %3 : vector<1x32xf32> to vector<32xf32>
    %c0_1 = arith.constant 0 : index
    %c0_2 = arith.constant 0 : index
    %5 = vector.load %arg1[%c0_1, %c0_2] : memref<32x32xf32, #tpu.memory_space<vmem>>, vector<32x32xf32>
    %cst = arith.constant dense<0.000000e+00> : vector<32xf32>
    %6 = vector.multi_reduction <add>, %5, %cst [1] : vector<32x32xf32> to vector<32xf32>
    %7 = vector.shape_cast %6 : vector<32xf32> to vector<32x1xf32>
    %cst_3 = arith.constant 3.200000e+01 : f32
    %8 = vector.broadcast %cst_3 : f32 to vector<32x1xf32>
    %9 = arith.divf %7, %8 : vector<32x1xf32>
    %10 = vector.broadcast %9 : vector<32x1xf32> to vector<32x32xf32>
    %11 = arith.subf %5, %10 : vector<32x32xf32>
    %12 = vector.broadcast %9 : vector<32x1xf32> to vector<32x32xf32>
    %13 = arith.subf %5, %12 : vector<32x32xf32>
    %14 = arith.mulf %11, %13 : vector<32x32xf32>
    %cst_4 = arith.constant dense<0.000000e+00> : vector<32xf32>
    %15 = vector.multi_reduction <add>, %14, %cst_4 [1] : vector<32x32xf32> to vector<32xf32>
    %16 = vector.shape_cast %15 : vector<32xf32> to vector<32x1xf32>
    %cst_5 = arith.constant 3.200000e+01 : f32
    %17 = vector.broadcast %cst_5 : f32 to vector<32x1xf32>
    %18 = arith.divf %16, %17 : vector<32x1xf32>
    %19 = vector.broadcast %9 : vector<32x1xf32> to vector<32x32xf32>
    %20 = arith.subf %5, %19 : vector<32x32xf32>
    %cst_6 = arith.constant 9.99999974E-6 : f32
    %21 = vector.broadcast %cst_6 : f32 to vector<32x1xf32>
    %22 = arith.addf %18, %21 : vector<32x1xf32>
    %23 = math.rsqrt %22 : vector<32x1xf32>
    %24 = vector.broadcast %23 : vector<32x1xf32> to vector<32x32xf32>
    %25 = arith.mulf %20, %24 : vector<32x32xf32>
    %26 = vector.shape_cast %2 : vector<32xf32> to vector<1x32xf32>
    %27 = vector.broadcast %26 : vector<1x32xf32> to vector<32x32xf32>
    %28 = arith.mulf %25, %27 : vector<32x32xf32>
    %29 = vector.shape_cast %4 : vector<32xf32> to vector<1x32xf32>
    %30 = vector.broadcast %29 : vector<1x32xf32> to vector<32x32xf32>
    %31 = arith.addf %28, %30 : vector<32x32xf32>
    %32 = vector.extract_strided_slice %0 {offsets = [2, 0], sizes = [1, 32], strides = [1, 1]} : vector<4x32xf32> to vector<1x32xf32>
    %33 = vector.shape_cast %32 : vector<1x32xf32> to vector<32xf32>
    %34 = vector.extract_strided_slice %0 {offsets = [3, 0], sizes = [1, 32], strides = [1, 1]} : vector<4x32xf32> to vector<1x32xf32>
    %35 = vector.shape_cast %34 : vector<1x32xf32> to vector<32xf32>
    %c0_7 = arith.constant 0 : index
    %c0_8 = arith.constant 0 : index
    %36 = vector.load %arg2[%c0_7, %c0_8] : memref<16x32xf32, #tpu.memory_space<vmem>>, vector<16x32xf32>
    %cst_9 = arith.constant dense<0.000000e+00> : vector<16xf32>
    %37 = vector.multi_reduction <add>, %36, %cst_9 [1] : vector<16x32xf32> to vector<16xf32>
    %38 = vector.shape_cast %37 : vector<16xf32> to vector<16x1xf32>
    %cst_10 = arith.constant 3.200000e+01 : f32
    %39 = vector.broadcast %cst_10 : f32 to vector<16x1xf32>
    %40 = arith.divf %38, %39 : vector<16x1xf32>
    %41 = vector.broadcast %40 : vector<16x1xf32> to vector<16x32xf32>
    %42 = arith.subf %36, %41 : vector<16x32xf32>
    %43 = vector.broadcast %40 : vector<16x1xf32> to vector<16x32xf32>
    %44 = arith.subf %36, %43 : vector<16x32xf32>
    %45 = arith.mulf %42, %44 : vector<16x32xf32>
    %cst_11 = arith.constant dense<0.000000e+00> : vector<16xf32>
    %46 = vector.multi_reduction <add>, %45, %cst_11 [1] : vector<16x32xf32> to vector<16xf32>
    %47 = vector.shape_cast %46 : vector<16xf32> to vector<16x1xf32>
    %cst_12 = arith.constant 3.200000e+01 : f32
    %48 = vector.broadcast %cst_12 : f32 to vector<16x1xf32>
    %49 = arith.divf %47, %48 : vector<16x1xf32>
    %50 = vector.broadcast %40 : vector<16x1xf32> to vector<16x32xf32>
    %51 = arith.subf %36, %50 : vector<16x32xf32>
    %cst_13 = arith.constant 9.99999974E-6 : f32
    %52 = vector.broadcast %cst_13 : f32 to vector<16x1xf32>
    %53 = arith.addf %49, %52 : vector<16x1xf32>
    %54 = math.rsqrt %53 : vector<16x1xf32>
    %55 = vector.broadcast %54 : vector<16x1xf32> to vector<16x32xf32>
    %56 = arith.mulf %51, %55 : vector<16x32xf32>
    %57 = vector.shape_cast %33 : vector<32xf32> to vector<1x32xf32>
    %58 = vector.broadcast %57 : vector<1x32xf32> to vector<16x32xf32>
    %59 = arith.mulf %56, %58 : vector<16x32xf32>
    %60 = vector.shape_cast %35 : vector<32xf32> to vector<1x32xf32>
    %61 = vector.broadcast %60 : vector<1x32xf32> to vector<16x32xf32>
    %62 = arith.addf %59, %61 : vector<16x32xf32>
    %c0_14 = arith.constant 0 : index
    %c0_15 = arith.constant 0 : index
    %63 = vector.load %arg4[%c0_14, %c0_15] : memref<32x96xf32, #tpu.memory_space<vmem>>, vector<32x96xf32>
    %cst_16 = arith.constant dense<0.000000e+00> : vector<16x96xf32>
    %64 = tpu.matmul %62, %63, %cst_16 {dimension_numbers = #tpu.dot_dimension_numbers<[1], [0], [0], [1], [0, 0, 1, 1], [], []>} : vector<16x32xf32>, vector<32x96xf32>, vector<16x96xf32> -> vector<16x96xf32>
    %c0_17 = arith.constant 0 : index
    %c0_18 = arith.constant 0 : index
    %65 = vector.load %arg5[%c0_17, %c0_18] : memref<32x64xf32, #tpu.memory_space<vmem>>, vector<32x64xf32>
    %cst_19 = arith.constant dense<0.000000e+00> : vector<32x64xf32>
    %66 = tpu.matmul %31, %65, %cst_19 {dimension_numbers = #tpu.dot_dimension_numbers<[1], [0], [0], [1], [0, 0, 1, 1], [], []>} : vector<32x32xf32>, vector<32x64xf32>, vector<32x64xf32> -> vector<32x64xf32>
    %67 = vector.extract_strided_slice %64 {offsets = [0, 0], sizes = [16, 32], strides = [1, 1]} : vector<16x96xf32> to vector<16x32xf32>
    %68 = vector.shape_cast %67 : vector<16x32xf32> to vector<2x8x32xf32>
    %69 = vector.extract_strided_slice %64 {offsets = [0, 32], sizes = [16, 32], strides = [1, 1]} : vector<16x96xf32> to vector<16x32xf32>
    %70 = vector.shape_cast %69 : vector<16x32xf32> to vector<2x8x32xf32>
    %71 = vector.extract_strided_slice %64 {offsets = [0, 64], sizes = [16, 32], strides = [1, 1]} : vector<16x96xf32> to vector<16x32xf32>
    %72 = vector.shape_cast %71 : vector<16x32xf32> to vector<2x8x32xf32>
    %73 = vector.extract_strided_slice %66 {offsets = [0, 0], sizes = [32, 32], strides = [1, 1]} : vector<32x64xf32> to vector<32x32xf32>
    %74 = vector.shape_cast %73 : vector<32x32xf32> to vector<2x16x32xf32>
    %75 = vector.extract_strided_slice %66 {offsets = [0, 32], sizes = [32, 32], strides = [1, 1]} : vector<32x64xf32> to vector<32x32xf32>
    %76 = vector.shape_cast %75 : vector<32x32xf32> to vector<2x16x32xf32>
    %77 = vector.extract_strided_slice %68 {offsets = [0, 0, 0], sizes = [2, 8, 8], strides = [1, 1, 1]} : vector<2x8x32xf32> to vector<2x8x8xf32>
    %78 = vector.extract_strided_slice %74 {offsets = [0, 0, 0], sizes = [2, 16, 8], strides = [1, 1, 1]} : vector<2x16x32xf32> to vector<2x16x8xf32>
    "tpu.trace_start"() <{level = 10 : i32, message = "bqd,bkd->bqk"}> : () -> ()
    %cst_20 = arith.constant dense<0.000000e+00> : vector<2x8x16xf32>
    %79 = tpu.matmul %77, %78, %cst_20 {dimension_numbers = #tpu.dot_dimension_numbers<[2], [2], [1], [1], [0, 0, 0, 1, 1, 1], [0], [0]>} : vector<2x8x8xf32>, vector<2x16x8xf32>, vector<2x8x16xf32> -> vector<2x8x16xf32>
    "tpu.trace_stop"() : () -> ()
    %80 = vector.extract_strided_slice %70 {offsets = [0, 0, 0], sizes = [2, 8, 8], strides = [1, 1, 1]} : vector<2x8x32xf32> to vector<2x8x8xf32>
    "tpu.trace_start"() <{level = 10 : i32, message = "bqd,bkd->bqk"}> : () -> ()
    %cst_21 = arith.constant dense<0.000000e+00> : vector<2x8x8xf32>
    %81 = tpu.matmul %77, %80, %cst_21 {dimension_numbers = #tpu.dot_dimension_numbers<[2], [2], [1], [1], [0, 0, 0, 1, 1, 1], [0], [0]>} : vector<2x8x8xf32>, vector<2x8x8xf32>, vector<2x8x8xf32> -> vector<2x8x8xf32>
    "tpu.trace_stop"() : () -> ()
    %cst_22 = arith.constant dense<0xFF800000> : vector<2x8xf32>
    %82 = vector.multi_reduction <maximumf>, %79, %cst_22 [2] : vector<2x8x16xf32> to vector<2x8xf32>
    %83 = vector.shape_cast %82 : vector<2x8xf32> to vector<2x8x1xf32>
    %cst_23 = arith.constant dense<0xFF800000> : vector<2x8xf32>
    %84 = vector.multi_reduction <maximumf>, %81, %cst_23 [2] : vector<2x8x8xf32> to vector<2x8xf32>
    %85 = vector.shape_cast %84 : vector<2x8xf32> to vector<2x8x1xf32>
    %86 = arith.maximumf %83, %85 : vector<2x8x1xf32>
    %87 = vector.broadcast %86 : vector<2x8x1xf32> to vector<2x8x16xf32>
    %88 = arith.subf %79, %87 : vector<2x8x16xf32>
    %89 = math.exp %88 : vector<2x8x16xf32>
    %90 = vector.broadcast %86 : vector<2x8x1xf32> to vector<2x8x8xf32>
    %91 = arith.subf %81, %90 : vector<2x8x8xf32>
    %92 = math.exp %91 : vector<2x8x8xf32>
    %cst_24 = arith.constant dense<0.000000e+00> : vector<2x8xf32>
    %93 = vector.multi_reduction <add>, %89, %cst_24 [2] : vector<2x8x16xf32> to vector<2x8xf32>
    %94 = vector.shape_cast %93 : vector<2x8xf32> to vector<2x8x1xf32>
    %cst_25 = arith.constant dense<0.000000e+00> : vector<2x8xf32>
    %95 = vector.multi_reduction <add>, %92, %cst_25 [2] : vector<2x8x8xf32> to vector<2x8xf32>
    %96 = vector.shape_cast %95 : vector<2x8xf32> to vector<2x8x1xf32>
    %97 = arith.addf %94, %96 : vector<2x8x1xf32>
    %98 = vector.extract_strided_slice %76 {offsets = [0, 0, 0], sizes = [2, 16, 8], strides = [1, 1, 1]} : vector<2x16x32xf32> to vector<2x16x8xf32>
    "tpu.trace_start"() <{level = 10 : i32, message = "bqk,bkd->bqd"}> : () -> ()
    %cst_26 = arith.constant dense<0.000000e+00> : vector<2x8x8xf32>
    %99 = tpu.matmul %89, %98, %cst_26 {dimension_numbers = #tpu.dot_dimension_numbers<[2], [1], [1], [2], [0, 0, 0, 1, 1, 2], [0], [0]>} : vector<2x8x16xf32>, vector<2x16x8xf32>, vector<2x8x8xf32> -> vector<2x8x8xf32>
    "tpu.trace_stop"() : () -> ()
    %100 = vector.extract_strided_slice %72 {offsets = [0, 0, 0], sizes = [2, 8, 8], strides = [1, 1, 1]} : vector<2x8x32xf32> to vector<2x8x8xf32>
    "tpu.trace_start"() <{level = 10 : i32, message = "bqk,bkd->bqd"}> : () -> ()
    %cst_27 = arith.constant dense<0.000000e+00> : vector<2x8x8xf32>
    %101 = tpu.matmul %92, %100, %cst_27 {dimension_numbers = #tpu.dot_dimension_numbers<[2], [1], [1], [2], [0, 0, 0, 1, 1, 2], [0], [0]>} : vector<2x8x8xf32>, vector<2x8x8xf32>, vector<2x8x8xf32> -> vector<2x8x8xf32>
    "tpu.trace_stop"() : () -> ()
    %102 = arith.addf %99, %101 : vector<2x8x8xf32>
    %103 = vector.broadcast %97 : vector<2x8x1xf32> to vector<2x8x8xf32>
    %104 = arith.divf %102, %103 : vector<2x8x8xf32>
    %105 = vector.shape_cast %104 : vector<2x8x8xf32> to vector<16x8xf32>
    %c0_28 = arith.constant 0 : index
    %c0_29 = arith.constant 0 : index
    %106 = vector.load %arg8[%c0_28, %c0_29] : memref<16x32xf32, #tpu.memory_space<vmem>>, vector<16x8xf32>
    tpu.vector_store %arg8[%c0_28, %c0_29], %105 {strides = array<i32>} : memref<16x32xf32, #tpu.memory_space<vmem>>, vector<16x8xf32>,
    %107 = vector.extract_strided_slice %68 {offsets = [0, 0, 8], sizes = [2, 8, 8], strides = [1, 1, 1]} : vector<2x8x32xf32> to vector<2x8x8xf32>
    %108 = vector.extract_strided_slice %74 {offsets = [0, 0, 8], sizes = [2, 16, 8], strides = [1, 1, 1]} : vector<2x16x32xf32> to vector<2x16x8xf32>
    "tpu.trace_start"() <{level = 10 : i32, message = "bqd,bkd->bqk"}> : () -> ()
    %cst_30 = arith.constant dense<0.000000e+00> : vector<2x8x16xf32>
    %109 = tpu.matmul %107, %108, %cst_30 {dimension_numbers = #tpu.dot_dimension_numbers<[2], [2], [1], [1], [0, 0, 0, 1, 1, 1], [0], [0]>} : vector<2x8x8xf32>, vector<2x16x8xf32>, vector<2x8x16xf32> -> vector<2x8x16xf32>
    "tpu.trace_stop"() : () -> ()
    %110 = vector.extract_strided_slice %70 {offsets = [0, 0, 8], sizes = [2, 8, 8], strides = [1, 1, 1]} : vector<2x8x32xf32> to vector<2x8x8xf32>
    "tpu.trace_start"() <{level = 10 : i32, message = "bqd,bkd->bqk"}> : () -> ()
    %cst_31 = arith.constant dense<0.000000e+00> : vector<2x8x8xf32>
    %111 = tpu.matmul %107, %110, %cst_31 {dimension_numbers = #tpu.dot_dimension_numbers<[2], [2], [1], [1], [0, 0, 0, 1, 1, 1], [0], [0]>} : vector<2x8x8xf32>, vector<2x8x8xf32>, vector<2x8x8xf32> -> vector<2x8x8xf32>
    "tpu.trace_stop"() : () -> ()
    %cst_32 = arith.constant dense<0xFF800000> : vector<2x8xf32>
    %112 = vector.multi_reduction <maximumf>, %109, %cst_32 [2] : vector<2x8x16xf32> to vector<2x8xf32>
    %113 = vector.shape_cast %112 : vector<2x8xf32> to vector<2x8x1xf32>
    %cst_33 = arith.constant dense<0xFF800000> : vector<2x8xf32>
    %114 = vector.multi_reduction <maximumf>, %111, %cst_33 [2] : vector<2x8x8xf32> to vector<2x8xf32>
    %115 = vector.shape_cast %114 : vector<2x8xf32> to vector<2x8x1xf32>
    %116 = arith.maximumf %113, %115 : vector<2x8x1xf32>
    %117 = vector.broadcast %116 : vector<2x8x1xf32> to vector<2x8x16xf32>
    %118 = arith.subf %109, %117 : vector<2x8x16xf32>
    %119 = math.exp %118 : vector<2x8x16xf32>
    %120 = vector.broadcast %116 : vector<2x8x1xf32> to vector<2x8x8xf32>
    %121 = arith.subf %111, %120 : vector<2x8x8xf32>
    %122 = math.exp %121 : vector<2x8x8xf32>
    %cst_34 = arith.constant dense<0.000000e+00> : vector<2x8xf32>
    %123 = vector.multi_reduction <add>, %119, %cst_34 [2] : vector<2x8x16xf32> to vector<2x8xf32>
    %124 = vector.shape_cast %123 : vector<2x8xf32> to vector<2x8x1xf32>
    %cst_35 = arith.constant dense<0.000000e+00> : vector<2x8xf32>
    %125 = vector.multi_reduction <add>, %122, %cst_35 [2] : vector<2x8x8xf32> to vector<2x8xf32>
    %126 = vector.shape_cast %125 : vector<2x8xf32> to vector<2x8x1xf32>
    %127 = arith.addf %124, %126 : vector<2x8x1xf32>
    %128 = vector.extract_strided_slice %76 {offsets = [0, 0, 8], sizes = [2, 16, 8], strides = [1, 1, 1]} : vector<2x16x32xf32> to vector<2x16x8xf32>
    "tpu.trace_start"() <{level = 10 : i32, message = "bqk,bkd->bqd"}> : () -> ()
    %cst_36 = arith.constant dense<0.000000e+00> : vector<2x8x8xf32>
    %129 = tpu.matmul %119, %128, %cst_36 {dimension_numbers = #tpu.dot_dimension_numbers<[2], [1], [1], [2], [0, 0, 0, 1, 1, 2], [0], [0]>} : vector<2x8x16xf32>, vector<2x16x8xf32>, vector<2x8x8xf32> -> vector<2x8x8xf32>
    "tpu.trace_stop"() : () -> ()
    %130 = vector.extract_strided_slice %72 {offsets = [0, 0, 8], sizes = [2, 8, 8], strides = [1, 1, 1]} : vector<2x8x32xf32> to vector<2x8x8xf32>
    "tpu.trace_start"() <{level = 10 : i32, message = "bqk,bkd->bqd"}> : () -> ()
    %cst_37 = arith.constant dense<0.000000e+00> : vector<2x8x8xf32>
    %131 = tpu.matmul %122, %130, %cst_37 {dimension_numbers = #tpu.dot_dimension_numbers<[2], [1], [1], [2], [0, 0, 0, 1, 1, 2], [0], [0]>} : vector<2x8x8xf32>, vector<2x8x8xf32>, vector<2x8x8xf32> -> vector<2x8x8xf32>
    "tpu.trace_stop"() : () -> ()
    %132 = arith.addf %129, %131 : vector<2x8x8xf32>
    %133 = vector.broadcast %127 : vector<2x8x1xf32> to vector<2x8x8xf32>
    %134 = arith.divf %132, %133 : vector<2x8x8xf32>
    %135 = vector.shape_cast %134 : vector<2x8x8xf32> to vector<16x8xf32>
    %c0_38 = arith.constant 0 : index
    %c8 = arith.constant 8 : index
    %136 = vector.load %arg8[%c0_38, %c8] : memref<16x32xf32, #tpu.memory_space<vmem>>, vector<16x8xf32>
    tpu.vector_store %arg8[%c0_38, %c8], %135 {strides = array<i32>} : memref<16x32xf32, #tpu.memory_space<vmem>>, vector<16x8xf32>,
    %137 = vector.extract_strided_slice %68 {offsets = [0, 0, 16], sizes = [2, 8, 8], strides = [1, 1, 1]} : vector<2x8x32xf32> to vector<2x8x8xf32>
    %138 = vector.extract_strided_slice %74 {offsets = [0, 0, 16], sizes = [2, 16, 8], strides = [1, 1, 1]} : vector<2x16x32xf32> to vector<2x16x8xf32>
    "tpu.trace_start"() <{level = 10 : i32, message = "bqd,bkd->bqk"}> : () -> ()
    %cst_39 = arith.constant dense<0.000000e+00> : vector<2x8x16xf32>
    %139 = tpu.matmul %137, %138, %cst_39 {dimension_numbers = #tpu.dot_dimension_numbers<[2], [2], [1], [1], [0, 0, 0, 1, 1, 1], [0], [0]>} : vector<2x8x8xf32>, vector<2x16x8xf32>, vector<2x8x16xf32> -> vector<2x8x16xf32>
    "tpu.trace_stop"() : () -> ()
    %140 = vector.extract_strided_slice %70 {offsets = [0, 0, 16], sizes = [2, 8, 8], strides = [1, 1, 1]} : vector<2x8x32xf32> to vector<2x8x8xf32>
    "tpu.trace_start"() <{level = 10 : i32, message = "bqd,bkd->bqk"}> : () -> ()
    %cst_40 = arith.constant dense<0.000000e+00> : vector<2x8x8xf32>
    %141 = tpu.matmul %137, %140, %cst_40 {dimension_numbers = #tpu.dot_dimension_numbers<[2], [2], [1], [1], [0, 0, 0, 1, 1, 1], [0], [0]>} : vector<2x8x8xf32>, vector<2x8x8xf32>, vector<2x8x8xf32> -> vector<2x8x8xf32>
    "tpu.trace_stop"() : () -> ()
    %cst_41 = arith.constant dense<0xFF800000> : vector<2x8xf32>
    %142 = vector.multi_reduction <maximumf>, %139, %cst_41 [2] : vector<2x8x16xf32> to vector<2x8xf32>
    %143 = vector.shape_cast %142 : vector<2x8xf32> to vector<2x8x1xf32>
    %cst_42 = arith.constant dense<0xFF800000> : vector<2x8xf32>
    %144 = vector.multi_reduction <maximumf>, %141, %cst_42 [2] : vector<2x8x8xf32> to vector<2x8xf32>
    %145 = vector.shape_cast %144 : vector<2x8xf32> to vector<2x8x1xf32>
    %146 = arith.maximumf %143, %145 : vector<2x8x1xf32>
    %147 = vector.broadcast %146 : vector<2x8x1xf32> to vector<2x8x16xf32>
    %148 = arith.subf %139, %147 : vector<2x8x16xf32>
    %149 = math.exp %148 : vector<2x8x16xf32>
    %150 = vector.broadcast %146 : vector<2x8x1xf32> to vector<2x8x8xf32>
    %151 = arith.subf %141, %150 : vector<2x8x8xf32>
    %152 = math.exp %151 : vector<2x8x8xf32>
    %cst_43 = arith.constant dense<0.000000e+00> : vector<2x8xf32>
    %153 = vector.multi_reduction <add>, %149, %cst_43 [2] : vector<2x8x16xf32> to vector<2x8xf32>
    %154 = vector.shape_cast %153 : vector<2x8xf32> to vector<2x8x1xf32>
    %cst_44 = arith.constant dense<0.000000e+00> : vector<2x8xf32>
    %155 = vector.multi_reduction <add>, %152, %cst_44 [2] : vector<2x8x8xf32> to vector<2x8xf32>
    %156 = vector.shape_cast %155 : vector<2x8xf32> to vector<2x8x1xf32>
    %157 = arith.addf %154, %156 : vector<2x8x1xf32>
    %158 = vector.extract_strided_slice %76 {offsets = [0, 0, 16], sizes = [2, 16, 8], strides = [1, 1, 1]} : vector<2x16x32xf32> to vector<2x16x8xf32>
    "tpu.trace_start"() <{level = 10 : i32, message = "bqk,bkd->bqd"}> : () -> ()
    %cst_45 = arith.constant dense<0.000000e+00> : vector<2x8x8xf32>
    %159 = tpu.matmul %149, %158, %cst_45 {dimension_numbers = #tpu.dot_dimension_numbers<[2], [1], [1], [2], [0, 0, 0, 1, 1, 2], [0], [0]>} : vector<2x8x16xf32>, vector<2x16x8xf32>, vector<2x8x8xf32> -> vector<2x8x8xf32>
    "tpu.trace_stop"() : () -> ()
    %160 = vector.extract_strided_slice %72 {offsets = [0, 0, 16], sizes = [2, 8, 8], strides = [1, 1, 1]} : vector<2x8x32xf32> to vector<2x8x8xf32>
    "tpu.trace_start"() <{level = 10 : i32, message = "bqk,bkd->bqd"}> : () -> ()
    %cst_46 = arith.constant dense<0.000000e+00> : vector<2x8x8xf32>
    %161 = tpu.matmul %152, %160, %cst_46 {dimension_numbers = #tpu.dot_dimension_numbers<[2], [1], [1], [2], [0, 0, 0, 1, 1, 2], [0], [0]>} : vector<2x8x8xf32>, vector<2x8x8xf32>, vector<2x8x8xf32> -> vector<2x8x8xf32>
    "tpu.trace_stop"() : () -> ()
    %162 = arith.addf %159, %161 : vector<2x8x8xf32>
    %163 = vector.broadcast %157 : vector<2x8x1xf32> to vector<2x8x8xf32>
    %164 = arith.divf %162, %163 : vector<2x8x8xf32>
    %165 = vector.shape_cast %164 : vector<2x8x8xf32> to vector<16x8xf32>
    %c0_47 = arith.constant 0 : index
    %c16 = arith.constant 16 : index
    %166 = vector.load %arg8[%c0_47, %c16] : memref<16x32xf32, #tpu.memory_space<vmem>>, vector<16x8xf32>
    tpu.vector_store %arg8[%c0_47, %c16], %165 {strides = array<i32>} : memref<16x32xf32, #tpu.memory_space<vmem>>, vector<16x8xf32>,
    %167 = vector.extract_strided_slice %68 {offsets = [0, 0, 24], sizes = [2, 8, 8], strides = [1, 1, 1]} : vector<2x8x32xf32> to vector<2x8x8xf32>
    %168 = vector.extract_strided_slice %74 {offsets = [0, 0, 24], sizes = [2, 16, 8], strides = [1, 1, 1]} : vector<2x16x32xf32> to vector<2x16x8xf32>
    "tpu.trace_start"() <{level = 10 : i32, message = "bqd,bkd->bqk"}> : () -> ()
    %cst_48 = arith.constant dense<0.000000e+00> : vector<2x8x16xf32>
    %169 = tpu.matmul %167, %168, %cst_48 {dimension_numbers = #tpu.dot_dimension_numbers<[2], [2], [1], [1], [0, 0, 0, 1, 1, 1], [0], [0]>} : vector<2x8x8xf32>, vector<2x16x8xf32>, vector<2x8x16xf32> -> vector<2x8x16xf32>
    "tpu.trace_stop"() : () -> ()
    %170 = vector.extract_strided_slice %70 {offsets = [0, 0, 24], sizes = [2, 8, 8], strides = [1, 1, 1]} : vector<2x8x32xf32> to vector<2x8x8xf32>
    "tpu.trace_start"() <{level = 10 : i32, message = "bqd,bkd->bqk"}> : () -> ()
    %cst_49 = arith.constant dense<0.000000e+00> : vector<2x8x8xf32>
    %171 = tpu.matmul %167, %170, %cst_49 {dimension_numbers = #tpu.dot_dimension_numbers<[2], [2], [1], [1], [0, 0, 0, 1, 1, 1], [0], [0]>} : vector<2x8x8xf32>, vector<2x8x8xf32>, vector<2x8x8xf32> -> vector<2x8x8xf32>
    "tpu.trace_stop"() : () -> ()
    %cst_50 = arith.constant dense<0xFF800000> : vector<2x8xf32>
    %172 = vector.multi_reduction <maximumf>, %169, %cst_50 [2] : vector<2x8x16xf32> to vector<2x8xf32>
    %173 = vector.shape_cast %172 : vector<2x8xf32> to vector<2x8x1xf32>
    %cst_51 = arith.constant dense<0xFF800000> : vector<2x8xf32>
    %174 = vector.multi_reduction <maximumf>, %171, %cst_51 [2] : vector<2x8x8xf32> to vector<2x8xf32>
    %175 = vector.shape_cast %174 : vector<2x8xf32> to vector<2x8x1xf32>
    %176 = arith.maximumf %173, %175 : vector<2x8x1xf32>
    %177 = vector.broadcast %176 : vector<2x8x1xf32> to vector<2x8x16xf32>
    %178 = arith.subf %169, %177 : vector<2x8x16xf32>
    %179 = math.exp %178 : vector<2x8x16xf32>
    %180 = vector.broadcast %176 : vector<2x8x1xf32> to vector<2x8x8xf32>
    %181 = arith.subf %171, %180 : vector<2x8x8xf32>
    %182 = math.exp %181 : vector<2x8x8xf32>
    %cst_52 = arith.constant dense<0.000000e+00> : vector<2x8xf32>
    %183 = vector.multi_reduction <add>, %179, %cst_52 [2] : vector<2x8x16xf32> to vector<2x8xf32>
    %184 = vector.shape_cast %183 : vector<2x8xf32> to vector<2x8x1xf32>
    %cst_53 = arith.constant dense<0.000000e+00> : vector<2x8xf32>
    %185 = vector.multi_reduction <add>, %182, %cst_53 [2] : vector<2x8x8xf32> to vector<2x8xf32>
    %186 = vector.shape_cast %185 : vector<2x8xf32> to vector<2x8x1xf32>
    %187 = arith.addf %184, %186 : vector<2x8x1xf32>
    %188 = vector.extract_strided_slice %76 {offsets = [0, 0, 24], sizes = [2, 16, 8], strides = [1, 1, 1]} : vector<2x16x32xf32> to vector<2x16x8xf32>
    "tpu.trace_start"() <{level = 10 : i32, message = "bqk,bkd->bqd"}> : () -> ()
    %cst_54 = arith.constant dense<0.000000e+00> : vector<2x8x8xf32>
    %189 = tpu.matmul %179, %188, %cst_54 {dimension_numbers = #tpu.dot_dimension_numbers<[2], [1], [1], [2], [0, 0, 0, 1, 1, 2], [0], [0]>} : vector<2x8x16xf32>, vector<2x16x8xf32>, vector<2x8x8xf32> -> vector<2x8x8xf32>
    "tpu.trace_stop"() : () -> ()
    %190 = vector.extract_strided_slice %72 {offsets = [0, 0, 24], sizes = [2, 8, 8], strides = [1, 1, 1]} : vector<2x8x32xf32> to vector<2x8x8xf32>
    "tpu.trace_start"() <{level = 10 : i32, message = "bqk,bkd->bqd"}> : () -> ()
    %cst_55 = arith.constant dense<0.000000e+00> : vector<2x8x8xf32>
    %191 = tpu.matmul %182, %190, %cst_55 {dimension_numbers = #tpu.dot_dimension_numbers<[2], [1], [1], [2], [0, 0, 0, 1, 1, 2], [0], [0]>} : vector<2x8x8xf32>, vector<2x8x8xf32>, vector<2x8x8xf32> -> vector<2x8x8xf32>
    "tpu.trace_stop"() : () -> ()
    %192 = arith.addf %189, %191 : vector<2x8x8xf32>
    %193 = vector.broadcast %187 : vector<2x8x1xf32> to vector<2x8x8xf32>
    %194 = arith.divf %192, %193 : vector<2x8x8xf32>
    %195 = vector.shape_cast %194 : vector<2x8x8xf32> to vector<16x8xf32>
    %c0_56 = arith.constant 0 : index
    %c24 = arith.constant 24 : index
    %196 = vector.load %arg8[%c0_56, %c24] : memref<16x32xf32, #tpu.memory_space<vmem>>, vector<16x8xf32>
    tpu.vector_store %arg8[%c0_56, %c24], %195 {strides = array<i32>} : memref<16x32xf32, #tpu.memory_space<vmem>>, vector<16x8xf32>,
    %c0_57 = arith.constant 0 : index
    %c0_58 = arith.constant 0 : index
    %197 = vector.load %arg8[%c0_57, %c0_58] : memref<16x32xf32, #tpu.memory_space<vmem>>, vector<16x32xf32>
    %c0_59 = arith.constant 0 : index
    %c0_60 = arith.constant 0 : index
    %198 = vector.load %arg6[%c0_59, %c0_60] : memref<32x32xf32, #tpu.memory_space<vmem>>, vector<32x32xf32>
    %cst_61 = arith.constant dense<0.000000e+00> : vector<16x32xf32>
    %199 = tpu.matmul %197, %198, %cst_61 {dimension_numbers = #tpu.dot_dimension_numbers<[1], [0], [0], [1], [0, 0, 1, 1], [], []>} : vector<16x32xf32>, vector<32x32xf32>, vector<16x32xf32> -> vector<16x32xf32>
    %c0_62 = arith.constant 0 : index
    %c0_63 = arith.constant 0 : index
    %200 = vector.load %arg7[%c0_62, %c0_63] : memref<16x32xf32, #tpu.memory_space<vmem>>, vector<16x32xf32>
    tpu.vector_store %arg7[%c0_62, %c0_63], %199 {strides = array<i32>} : memref<16x32xf32, #tpu.memory_space<vmem>>, vector<16x32xf32>,
    return
  }
  func.func @transform_0(%arg0: i32) -> (i32, i32) {
    %c0_i32 = arith.constant 0 : i32
    %c0_i32_0 = arith.constant 0 : i32
    return %arg0, %c0_i32 : i32, i32
  }
  func.func @transform_1(%arg0: i32) -> (i32, i32) {
    %c0_i32 = arith.constant 0 : i32
    %c0_i32_0 = arith.constant 0 : i32
    return %arg0, %c0_i32 : i32, i32
  }
  func.func @transform_2(%arg0: i32) -> (i32, i32) {
    %c0_i32 = arith.constant 0 : i32
    %c0_i32_0 = arith.constant 0 : i32
    %c0_i32_1 = arith.constant 0 : i32
    return %c0_i32, %c0_i32_0 : i32, i32
  }
  func.func @transform_3(%arg0: i32) -> (i32, i32) {
    %c0_i32 = arith.constant 0 : i32
    %c0_i32_0 = arith.constant 0 : i32
    %c0_i32_1 = arith.constant 0 : i32
    return %c0_i32, %c0_i32_0 : i32, i32
  }
  func.func @transform_4(%arg0: i32) -> (i32, i32) {
    %c0_i32 = arith.constant 0 : i32
    %c0_i32_0 = arith.constant 0 : i32
    %c0_i32_1 = arith.constant 0 : i32
    return %c0_i32, %c0_i32_0 : i32, i32
  }
  func.func @transform_5(%arg0: i32) -> (i32, i32) {
    %c0_i32 = arith.constant 0 : i32
    %c0_i32_0 = arith.constant 0 : i32
    %c0_i32_1 = arith.constant 0 : i32
    return %c0_i32, %c0_i32_0 : i32, i32
  }
  func.func @transform_6(%arg0: i32) -> (i32, i32) {
    %c0_i32 = arith.constant 0 : i32
    %c0_i32_0 = arith.constant 0 : i32
    return %arg0, %c0_i32 : i32, i32
  }
}

</mosaic_0001>

<llo_original>
// kernel: tpu_custom_call.1
$region0: #{tpu_custom_call.1}
  #allocation0 [shape = 'u32[]', space=smem, size = 0x4, offset = 0x4, fixed_abs, tag = 'smem constant byte address 0x4 - core index']
  #allocation1 [shape = 'u32[144,128]{1,0:T(1,128)}', space=vmem, size = 0x12000, scoped, tag = 'internal scratch']
  #allocation2 [shape = 'f32[16,32]{1,0:T(8,128)}', space=vmem, size = 0x2000, scoped, tag = 'scratch operand']
  %s0 = inlined_call_operand.vmem [shape: f32[64,32], index: 0, kind: input, shape index: {}]
  %s1 = inlined_call_operand.vmem [shape: f32[32,32], index: 1, kind: input, shape index: {}]
  %s2 = inlined_call_operand.vmem [shape: f32[4,32], index: 2, kind: input, shape index: {}]
  %s3 = inlined_call_operand.vmem [shape: f32[32,96], index: 3, kind: input, shape index: {}]
  %s4 = inlined_call_operand.vmem [shape: f32[32,64], index: 4, kind: input, shape index: {}]
  %s5 = inlined_call_operand.hbm [shape: f32[32,32], index: 5, kind: input, shape index: {}]
  %s6 = inlined_call_operand.hbm [shape: f32[32,32], index: 6, kind: output, shape index: {}]
  %s7 = sld [smem:[#allocation0]]
  $region61: #{tpu_custom_call.1} parent=0
    _
  %s9 = ssub.s32 1, %s7
  %s10 = scalar_select 0, %s9, %s7
  $region1: #{tpu_custom_call.1} parent=0
    #allocation3 [shape = 'u8[16384]{0}', space=vmem, size = 0x4000, scoped, tag = 'input window, operand 5, single buffered']
    #allocation4 [shape = 's32[2]{0}', space=sflag, size = 0x8, scoped, tag = 'scoped memory for tpu_custom_call.1']
    #allocation5 [shape = 's32[2]{0}', space=sflag, size = 0x8, scoped, tag = 'scoped memory for tpu_custom_call.1']
    #allocation6 [shape = 'u8[16384]{0}', space=vmem, size = 0x4000, scoped, tag = 'output window, operand 0']
    %11 = vsyncpa [#allocation4], 0
    %12 = vsyncpa [#allocation5], 0
    %s13 = scalar_lea.sflag [#allocation5], 1
    %14 = vsyncpa %s13, 0
    loop: start=0, step=1, limit=4
    $region2: #{tpu_custom_call.1} parent=1 // loop_pre_header
      _
    $region3: #{tpu_custom_call.1} parent=1 // loop_header
      %s16 = sphi 0, %s20
      %p17 = scmp.ge.s32.totalorder %s16, 4
      %s26 = sphi 0, %s28
      %s29 = sphi 0, %s26
      %s30 = sphi 0, %s29
      %s46 = sphi 0, %s30
      %s52 = sphi 0, %s54
      %s55 = sphi 0, %s52
      %s56 = sphi 0, %s55
      %s72 = sphi 0, %s56
      %s76 = sphi 0, %s76
      %s78 = sphi 0, %s76
      %s79 = sphi 0, %s78
      %s93 = sphi 0, %s79
      %s97 = sphi 0, %s97
      %s99 = sphi 0, %s97
      %s100 = sphi 0, %s99
      %s114 = sphi 0, %s100
      %s118 = sphi 0, %s118
      %s120 = sphi 0, %s118
      %s121 = sphi 0, %s120
      %s135 = sphi 0, %s121
      %s139 = sphi 0, %s139
      %s141 = sphi 0, %s139
      %s142 = sphi 0, %s141
      %s156 = sphi 0, %s142
      %s162 = sphi 0, %s164
      %s165 = sphi 0, %s162
      %s166 = sphi 0, %s165
      %s182 = sphi 0, %s166
    $region4: #{tpu_custom_call.1} parent=1 // loop_header_branch
      %19 = sbr.rel (%p17) target = $region8
    $region5: #{tpu_custom_call.1} parent=1 // loop_body
      %s21 = ssub.s32 %s16, 1
      %s22 = ssub.s32 %s16, 2
      %s23 = sadd.s32 %s16, 1
      %s24 = ssub.s32 %s16, %s23
      %p25 = scmp.eq.s32.totalorder %s24, 0
      %s27 = sadd.s32 %s26, 1
      %s28 = scalar_select %p25, %s26, %s27
      %p31 = pneg %p25
      %p32 = scmp.eq.s32.totalorder %s16, 1
      %p33 = por %p31, %p32
      %p34 = scmp.ne.s32.totalorder %s26, %s29
      %p35 = scmp.eq.s32.totalorder %s16, 0
      %p36 = por %p34, %p35
      %p37 = scmp.ne.s32.totalorder %s26, %s29
      %p38 = scmp.eq.s32.totalorder %s21, 1
      %p39 = por %p37, %p38
      %p40 = scmp.ne.s32.totalorder %s29, %s30
      %p41 = scmp.eq.s32.totalorder %s21, 0
      %p42 = por %p40, %p41
      %p43 = scmp.ne.s32.totalorder %s29, %s30
      %p44 = scmp.eq.s32.totalorder %s22, 1
      %p45 = por %p43, %p44
      %p47 = scmp.ne.s32.totalorder %s30, %s46
      %p48 = scmp.eq.s32.totalorder %s22, 0
      %p49 = por %p47, %p48
      %s50 = ssub.s32 %s16, %s23
      %p51 = scmp.eq.s32.totalorder %s50, 0
      %s53 = sadd.s32 %s52, 1
      %s54 = scalar_select %p51, %s52, %s53
      %p57 = pneg %p51
      %p58 = scmp.eq.s32.totalorder %s16, 1
      %p59 = por %p57, %p58
      %p60 = scmp.ne.s32.totalorder %s52, %s55
      %p61 = scmp.eq.s32.totalorder %s16, 0
      %p62 = por %p60, %p61
      %p63 = scmp.ne.s32.totalorder %s52, %s55
      %p64 = scmp.eq.s32.totalorder %s21, 1
      %p65 = por %p63, %p64
      %p66 = scmp.ne.s32.totalorder %s55, %s56
      %p67 = scmp.eq.s32.totalorder %s21, 0
      %p68 = por %p66, %p67
      %p69 = scmp.ne.s32.totalorder %s55, %s56
      %p70 = scmp.eq.s32.totalorder %s22, 1
      %p71 = por %p69, %p70
      %p73 = scmp.ne.s32.totalorder %s56, %s72
      %p74 = scmp.eq.s32.totalorder %s22, 0
      %p75 = por %p73, %p74
      %s77 = sadd.s32 %s76, 1
      %p80 = scmp.eq.s32.totalorder %s16, 1
      %p81 = scmp.ne.s32.totalorder %s76, %s78
      %p82 = scmp.eq.s32.totalorder %s16, 0
      %p83 = por %p81, %p82
      %p84 = scmp.ne.s32.totalorder %s76, %s78
      %p85 = scmp.eq.s32.totalorder %s21, 1
      %p86 = por %p84, %p85
      %p87 = scmp.ne.s32.totalorder %s78, %s79
      %p88 = scmp.eq.s32.totalorder %s21, 0
      %p89 = por %p87, %p88
      %p90 = scmp.ne.s32.totalorder %s78, %s79
      %p91 = scmp.eq.s32.totalorder %s22, 1
      %p92 = por %p90, %p91
      %p94 = scmp.ne.s32.totalorder %s79, %s93
      %p95 = scmp.eq.s32.totalorder %s22, 0
      %p96 = por %p94, %p95
      %s98 = sadd.s32 %s97, 1
      %p101 = scmp.eq.s32.totalorder %s16, 1
      %p102 = scmp.ne.s32.totalorder %s97, %s99
      %p103 = scmp.eq.s32.totalorder %s16, 0
      %p104 = por %p102, %p103
      %p105 = scmp.ne.s32.totalorder %s97, %s99
      %p106 = scmp.eq.s32.totalorder %s21, 1
      %p107 = por %p105, %p106
      %p108 = scmp.ne.s32.totalorder %s99, %s100
      %p109 = scmp.eq.s32.totalorder %s21, 0
      %p110 = por %p108, %p109
      %p111 = scmp.ne.s32.totalorder %s99, %s100
      %p112 = scmp.eq.s32.totalorder %s22, 1
      %p113 = por %p111, %p112
      %p115 = scmp.ne.s32.totalorder %s100, %s114
      %p116 = scmp.eq.s32.totalorder %s22, 0
      %p117 = por %p115, %p116
      %s119 = sadd.s32 %s118, 1
      %p122 = scmp.eq.s32.totalorder %s16, 1
      %p123 = scmp.ne.s32.totalorder %s118, %s120
      %p124 = scmp.eq.s32.totalorder %s16, 0
      %p125 = por %p123, %p124
      %p126 = scmp.ne.s32.totalorder %s118, %s120
      %p127 = scmp.eq.s32.totalorder %s21, 1
      %p128 = por %p126, %p127
      %p129 = scmp.ne.s32.totalorder %s120, %s121
      %p130 = scmp.eq.s32.totalorder %s21, 0
      %p131 = por %p129, %p130
      %p132 = scmp.ne.s32.totalorder %s120, %s121
      %p133 = scmp.eq.s32.totalorder %s22, 1
      %p134 = por %p132, %p133
      %p136 = scmp.ne.s32.totalorder %s121, %s135
      %p137 = scmp.eq.s32.totalorder %s22, 0
      %p138 = por %p136, %p137
      %s140 = sadd.s32 %s139, 1
      %p143 = scmp.eq.s32.totalorder %s16, 1
      %p144 = scmp.ne.s32.totalorder %s139, %s141
      %p145 = scmp.eq.s32.totalorder %s16, 0
      %p146 = por %p144, %p145
      %p147 = scmp.ne.s32.totalorder %s139, %s141
      %p148 = scmp.eq.s32.totalorder %s21, 1
      %p149 = por %p147, %p148
      %p150 = scmp.ne.s32.totalorder %s141, %s142
      %p151 = scmp.eq.s32.totalorder %s21, 0
      %p152 = por %p150, %p151
      %p153 = scmp.ne.s32.totalorder %s141, %s142
      %p154 = scmp.eq.s32.totalorder %s22, 1
      %p155 = por %p153, %p154
      %p157 = scmp.ne.s32.totalorder %s142, %s156
      %p158 = scmp.eq.s32.totalorder %s22, 0
      %p159 = por %p157, %p158
      %s160 = ssub.s32 %s16, %s23
      %p161 = scmp.eq.s32.totalorder %s160, 0
      %s163 = sadd.s32 %s162, 1
      %s164 = scalar_select %p161, %s162, %s163
      %p167 = pneg %p161
      %p168 = scmp.eq.s32.totalorder %s16, 1
      %p169 = por %p167, %p168
      %p170 = scmp.ne.s32.totalorder %s162, %s165
      %p171 = scmp.eq.s32.totalorder %s16, 0
      %p172 = por %p170, %p171
      %p173 = scmp.ne.s32.totalorder %s162, %s165
      %p174 = scmp.eq.s32.totalorder %s21, 1
      %p175 = por %p173, %p174
      %p176 = scmp.ne.s32.totalorder %s165, %s166
      %p177 = scmp.eq.s32.totalorder %s21, 0
      %p178 = por %p176, %p177
      %p179 = scmp.ne.s32.totalorder %s165, %s166
      %p180 = scmp.eq.s32.totalorder %s22, 1
      %p181 = por %p179, %p180
      %p183 = scmp.ne.s32.totalorder %s166, %s182
      %p184 = scmp.eq.s32.totalorder %s22, 0
      %p185 = por %p183, %p184
      %p186 = scmp.le.s32.totalorder 1, %s16
      %p187 = scmp.lt.s32.totalorder %s16, 3
      %p188 = pnand %p186, %p187
      %p189 = pneg %p188
      // Predicated region
      $region9: #{tpu_custom_call.1} parent=5 // pred_check
        _
      $region10: #{tpu_custom_call.1} parent=5 // pred_check_branch
        %191 = sbr.rel (%p188) target = $region12
      $region11: #{tpu_custom_call.1} parent=5 // pred_region
        %s192 = ssub.s32 %s16, 1
        // Predicated region
        $region13: #{tpu_custom_call.1} parent=11 // pred_check
          %p193 = pneg %p89
        $region14: #{tpu_custom_call.1} parent=11 // pred_check_branch
          %195 = sbr.rel (%p193) target = $region16
        $region15: #{tpu_custom_call.1} parent=11 // pred_region
          _
        $region16: #{tpu_custom_call.1} parent=11 // pred_fallthru
          _
        // Predicated region
        $region17: #{tpu_custom_call.1} parent=11 // pred_check
          %p196 = pneg %p110
        $region18: #{tpu_custom_call.1} parent=11 // pred_check_branch
          %198 = sbr.rel (%p196) target = $region20
        $region19: #{tpu_custom_call.1} parent=11 // pred_region
          _
        $region20: #{tpu_custom_call.1} parent=11 // pred_fallthru
          _
        // Predicated region
        $region21: #{tpu_custom_call.1} parent=11 // pred_check
          %p199 = pneg %p131
        $region22: #{tpu_custom_call.1} parent=11 // pred_check_branch
          %201 = sbr.rel (%p199) target = $region24
        $region23: #{tpu_custom_call.1} parent=11 // pred_region
          _
        $region24: #{tpu_custom_call.1} parent=11 // pred_fallthru
          _
        // Predicated region
        $region25: #{tpu_custom_call.1} parent=11 // pred_check
          %p202 = pneg %p152
        $region26: #{tpu_custom_call.1} parent=11 // pred_check_branch
          %204 = sbr.rel (%p202) target = $region28
        $region27: #{tpu_custom_call.1} parent=11 // pred_region
          %s206 = ssub.s32 512, 512
          %207 = vsyncadd [#allocation4], %s206
          %s208 = sshll.u32 [#allocation3], 4
          %s209 = int_to_ptr.vmem [resolvable:$true] %s208
          %214 = dma.hbm_to_vmem [thread:$0]  %s5, 512, %s209, [#allocation4], 128, 128, 8
        $region28: #{tpu_custom_call.1} parent=11 // pred_fallthru
          _
      $region12: #{tpu_custom_call.1} parent=5 // pred_fallthru
        _
      %p215 = scmp.lt.s32.totalorder %s16, 2
      // Predicated region
      $region29: #{tpu_custom_call.1} parent=5 // pred_check
        %p216 = pneg %p215
      $region30: #{tpu_custom_call.1} parent=5 // pred_check_branch
        %218 = sbr.rel (%p216) target = $region32
      $region31: #{tpu_custom_call.1} parent=5 // pred_region
        // Predicated region
        $region33: #{tpu_custom_call.1} parent=31 // pred_check
          %p219 = pneg %p36
        $region34: #{tpu_custom_call.1} parent=31 // pred_check_branch
          %221 = sbr.rel (%p219) target = $region36
        $region35: #{tpu_custom_call.1} parent=31 // pred_region
          %s222 = smul.u32 4, %s16
          %p223 = scmp.lt.s32.totalorder %s222, 7
          %s224 = scalar_select %p223, %s222, 7
          %s225 = smul.addr %s224, 8
          %s226 = scalar_lea.vmem %s0, %s225
          %s227 = smul.u32 4, %s16
        $region36: #{tpu_custom_call.1} parent=31 // pred_fallthru
          _
        // Predicated region
        $region37: #{tpu_custom_call.1} parent=31 // pred_check
          %p228 = pneg %p62
        $region38: #{tpu_custom_call.1} parent=31 // pred_check_branch
          %230 = sbr.rel (%p228) target = $region40
        $region39: #{tpu_custom_call.1} parent=31 // pred_region
          %s231 = smul.u32 2, %s16
          %p232 = scmp.lt.s32.totalorder %s231, 3
          %s233 = scalar_select %p232, %s231, 3
          %s234 = smul.addr %s233, 8
          %s235 = scalar_lea.vmem %s1, %s234
          %s236 = smul.u32 2, %s16
        $region40: #{tpu_custom_call.1} parent=31 // pred_fallthru
          _
      $region32: #{tpu_custom_call.1} parent=5 // pred_fallthru
        _
      %p237 = scmp.le.s32.totalorder 1, %s16
      %p238 = scmp.lt.s32.totalorder %s16, 3
      %p239 = pnand %p237, %p238
      %p240 = pneg %p239
      // Predicated region
      $region41: #{tpu_custom_call.1} parent=5 // pred_check
        _
      $region42: #{tpu_custom_call.1} parent=5 // pred_check_branch
        %242 = sbr.rel (%p239) target = $region44
      $region43: #{tpu_custom_call.1} parent=5 // pred_region
        %s243 = ssub.s32 %s16, 1
        // Predicated region
        $region45: #{tpu_custom_call.1} parent=43 // pred_check
          %p244 = pneg %p152
        $region46: #{tpu_custom_call.1} parent=43 // pred_check_branch
          %246 = sbr.rel (%p244) target = $region48
        $region47: #{tpu_custom_call.1} parent=43 // pred_region
          %247 = dma.done [#allocation4], 512
        $region48: #{tpu_custom_call.1} parent=43 // pred_fallthru
          _
        %s248 = smul.u32 4, %s21
        %p249 = scmp.lt.s32.totalorder %s248, 7
        %s250 = scalar_select %p249, %s248, 7
        %s251 = smul.addr %s250, 8
        %s252 = scalar_lea.vmem %s0, %s251
        %p253 = pneg %p42
        %p254 = pneg %p39
        %s255 = smul.u32 2, %s21
        %p256 = scmp.lt.s32.totalorder %s255, 3
        %s257 = scalar_select %p256, %s255, 3
        %s258 = smul.addr %s257, 8
        %s259 = scalar_lea.vmem %s1, %s258
        %p260 = pneg %p68
        %p261 = pneg %p65
        %p262 = pneg %p89
        %p263 = pneg %p86
        %p264 = pneg %p110
        %p265 = pneg %p107
        %p266 = pneg %p131
        %p267 = pneg %p128
        %p268 = pneg %p152
        %p269 = pneg %p149
        %p270 = pneg %p178
        %p271 = pneg %p175
        %s272 = sand.u32 %s165, 1
        %s273 = scalar_lea.sflag [#allocation5], %s272
        %s274 = sand.u32 %s165, 1
        %s275 = smul.addr %s274, 16
        %s276 = scalar_lea.vmem [#allocation6], %s275
        %s277 = smul.u32 4, %s21
        %p278 = scmp.lt.s32.totalorder %s277, 7
        %s279 = scalar_select %p278, %s277, 7
        %s280 = smul.addr %s279, 8
        %s281 = scalar_lea.vmem %s0, %s280
        %s282 = smul.u32 4, %s21
        %s283 = smul.u32 2, %s21
        %p284 = scmp.lt.s32.totalorder %s283, 3
        %s285 = scalar_select %p284, %s283, 3
        %s286 = smul.addr %s285, 8
        %s287 = scalar_lea.vmem %s1, %s286
        %s288 = smul.u32 2, %s21
        %s289 = smul.u32 2, %s21
        %v290 = vld [vmem:[%s2] sm:$0xf]
        %v291 = vld [vmem:[%s281] sm:$0xff]
        %v292 = vld [vmem:[%s281 + $0x8] sm:$0xff]
        %v293 = vld [vmem:[%s281 + $0x10] sm:$0xff]
        %v294 = vld [vmem:[%s281 + $0x18] sm:$0xff]
        %vm295 = vcmask 261120
        %v296 = vsel %vm295, %v291, 0.0
        %297 = vadd.xlane.f32.xlu0 %v296
        %v298 = vpop.xlane.xlu0 %297
        %v299 = vsel %vm295, %v292, 0.0
        %300 = vadd.xlane.f32.xlu0 %v299
        %v301 = vpop.xlane.xlu0 %300
        %v302 = vsel %vm295, %v293, 0.0
        %303 = vadd.xlane.f32.xlu0 %v302
        %v304 = vpop.xlane.xlu0 %303
        %v305 = vsel %vm295, %v294, 0.0
        %306 = vadd.xlane.f32.xlu0 %v305
        %v307 = vpop.xlane.xlu0 %306
        %v308 = vrcp.pop 32.0
        %v309 = vmul.f32 %v298, %v308
        %v310 = vmul.f32 %v301, %v308
        %v311 = vmul.f32 %v304, %v308
        %v312 = vmul.f32 %v307, %v308
        %v313 = vsub.f32 %v291, %v309
        %v314 = vsub.f32 %v292, %v310
        %v315 = vsub.f32 %v293, %v311
        %v316 = vsub.f32 %v294, %v312
        %v317 = vmul.f32 %v313, %v313
        %v318 = vmul.f32 %v314, %v314
        %v319 = vmul.f32 %v315, %v315
        %v320 = vmul.f32 %v316, %v316
        %v321 = vsel %vm295, %v317, 0.0
        %322 = vadd.xlane.f32.xlu0 %v321
        %v323 = vpop.xlane.xlu0 %322
        %v324 = vsel %vm295, %v318, 0.0
        %325 = vadd.xlane.f32.xlu0 %v324
        %v326 = vpop.xlane.xlu0 %325
        %v327 = vsel %vm295, %v319, 0.0
        %328 = vadd.xlane.f32.xlu0 %v327
        %v329 = vpop.xlane.xlu0 %328
        %v330 = vsel %vm295, %v320, 0.0
        %331 = vadd.xlane.f32.xlu0 %v330
        %v332 = vpop.xlane.xlu0 %331
        %v333 = vmul.f32 %v323, %v308
        %v334 = vmul.f32 %v326, %v308
        %v335 = vmul.f32 %v329, %v308
        %v336 = vmul.f32 %v332, %v308
        %v337 = vadd.f32 %v333, 1e-05
        %v338 = vadd.f32 %v334, 1e-05
        %v339 = vadd.f32 %v335, 1e-05
        %v340 = vadd.f32 %v336, 1e-05
        %v341 = vrsqrt.pop %v337
        %v342 = vrsqrt.pop %v338
        %v343 = vrsqrt.pop %v339
        %v344 = vrsqrt.pop %v340
        %v345 = vmul.f32 %v313, %v341
        %v346 = vmul.f32 %v314, %v342
        %v347 = vmul.f32 %v315, %v343
        %v348 = vmul.f32 %v316, %v344
        %v349 = vlaneseq
        %v350 = vshrl.u32 %v349, 7
        %v351 = vsub.s32 0, %v350
        %v352 = vrot.slane %v290, %v351
        %v353 = vmul.f32 %v345, %v352
        %v354 = vmul.f32 %v346, %v352
        %v355 = vmul.f32 %v347, %v352
        %v356 = vmul.f32 %v348, %v352
        %v357 = vlaneseq
        %v358 = vshrl.u32 %v357, 7
        %v359 = vsub.s32 1, %v358
        %v360 = vrot.slane %v290, %v359
        %v361 = vadd.f32 %v353, %v360
        %v362 = vadd.f32 %v354, %v360
        %v363 = vadd.f32 %v355, %v360
        %v364 = vadd.f32 %v356, %v360
        %v365 = vld [vmem:[%s287] sm:$0xff]
        %v366 = vld [vmem:[%s287 + $0x8] sm:$0xff]
        %v367 = vsel %vm295, %v365, 0.0
        %368 = vadd.xlane.f32.xlu0 %v367
        %v369 = vpop.xlane.xlu0 %368
        %v370 = vsel %vm295, %v366, 0.0
        %371 = vadd.xlane.f32.xlu0 %v370
        %v372 = vpop.xlane.xlu0 %371
        %v373 = vmul.f32 %v369, %v308
        %v374 = vmul.f32 %v372, %v308
        %v375 = vsub.f32 %v365, %v373
        %v376 = vsub.f32 %v366, %v374
        %v377 = vmul.f32 %v375, %v375
        %v378 = vmul.f32 %v376, %v376
        %v379 = vsel %vm295, %v377, 0.0
        %380 = vadd.xlane.f32.xlu0 %v379
        %v381 = vpop.xlane.xlu0 %380
        %v382 = vsel %vm295, %v378, 0.0
        %383 = vadd.xlane.f32.xlu0 %v382
        %v384 = vpop.xlane.xlu0 %383
        %v385 = vmul.f32 %v381, %v308
        %v386 = vmul.f32 %v384, %v308
        %v387 = vadd.f32 %v385, 1e-05
        %v388 = vadd.f32 %v386, 1e-05
        %v389 = vrsqrt.pop %v387
        %v390 = vrsqrt.pop %v388
        %v391 = vmul.f32 %v375, %v389
        %v392 = vmul.f32 %v376, %v390
        %v393 = vlaneseq
        %v394 = vshrl.u32 %v393, 7
        %v395 = vsub.s32 2, %v394
        %v396 = vrot.slane %v290, %v395
        %v397 = vmul.f32 %v391, %v396
        %v398 = vmul.f32 %v392, %v396
        %v399 = vlaneseq
        %v400 = vshrl.u32 %v399, 7
        %v401 = vsub.s32 3, %v400
        %v402 = vrot.slane %v290, %v401
        %v403 = vadd.f32 %v397, %v402
        %v404 = vadd.f32 %v398, %v402
        %v405 = vld [vmem:[%s3] sm:$0xff]
        %v406 = vld [vmem:[%s3 + $0x8] sm:$0xff]
        %v407 = vld [vmem:[%s3 + $0x10] sm:$0xff]
        %v408 = vld [vmem:[%s3 + $0x18] sm:$0xff]
        %v410 = vsel %vm295, %v403, 0
        %v413 = vsel %vm295, %v404, 0
        %415 = vmatprep.subr.mxu0 0.0
        %416 = vmatpush1.msra.mxu0 %v405
        %417 = vmatprep.subr.mxu0 0.0
        %418 = vmatpush1.msra.mxu0 %v406
        %419 = vmatprep.subr.mxu0 0.0
        %420 = vmatpush1.msra.mxu0 %v407
        %421 = vmatprep.subr.mxu0 0.0
        %422 = vmatpush1.msra.mxu0 %v408
        %423 = vmatprep.subr.mxu0 0.0
        %424 = vmatpush1.msra.mxu0 0.0
        %425 = vmatprep.subr.mxu0 0.0
        %426 = vmatpush1.msra.mxu0 0.0
        %427 = vmatprep.subr.mxu0 0.0
        %428 = vmatpush1.msra.mxu0 0.0
        %429 = vmatprep.subr.mxu0 0.0
        %430 = vmatpush1.msra.mxu0 0.0
        %431 = vmatprep.subr.mxu0 0.0
        %432 = vmatpush1.msra.mxu0 0.0
        %433 = vmatprep.subr.mxu0 0.0
        %434 = vmatpush1.msra.mxu0 0.0
        %435 = vmatprep.subr.mxu0 0.0
        %436 = vmatpush1.msra.mxu0 0.0
        %437 = vmatprep.subr.mxu0 0.0
        %438 = vmatpush1.msra.mxu0 0.0
        %439 = vmatprep.subr.mxu0 0.0
        %440 = vmatpush1.msra.mxu0 0.0
        %441 = vmatprep.subr.mxu0 0.0
        %442 = vmatpush1.msra.mxu0 0.0
        %443 = vmatprep.subr.mxu0 0.0
        %444 = vmatpush1.msra.mxu0 0.0
        %445 = vmatprep.subr.mxu0 0.0
        %446 = vmatpush1.msra.mxu0 0.0
        %447 = vmatprep.subr.mxu0 0.0
        %448 = vmatpush1.msra.mxu0 0.0
        %449 = vmatprep.subr.mxu0 0.0
        %450 = vmatpush1.msra.mxu0 0.0
        %451 = vmatprep.subr.mxu0 0.0
        %452 = vmatpush1.msra.mxu0 0.0
        %453 = vmatprep.subr.mxu0 0.0
        %454 = vmatpush1.msra.mxu0 0.0
        %455 = vmatprep.subr.mxu0 0.0
        %456 = vmatpush1.msra.mxu0 0.0
        %457 = vmatprep.subr.mxu0 0.0
        %458 = vmatpush1.msra.mxu0 0.0
        %459 = vmatprep.subr.mxu0 0.0
        %460 = vmatpush1.msra.mxu0 0.0
        %461 = vmatprep.subr.mxu0 0.0
        %462 = vmatpush1.msra.mxu0 0.0
        %463 = vmatprep.subr.mxu0 0.0
        %464 = vmatpush1.msra.mxu0 0.0
        %465 = vmatprep.subr.mxu0 0.0
        %466 = vmatpush1.msra.mxu0 0.0
        %467 = vmatprep.subr.mxu0 0.0
        %468 = vmatpush1.msra.mxu0 0.0
        %469 = vmatprep.subr.mxu0 0.0
        %470 = vmatpush1.msra.mxu0 0.0
        %471 = vmatprep.subr.mxu0 0.0
        %472 = vmatpush1.msra.mxu0 0.0
        %473 = vmatprep.subr.mxu0 0.0
        %474 = vmatpush1.msra.mxu0 0.0
        %475 = vmatprep.subr.mxu0 0.0
        %476 = vmatpush1.msra.mxu0 0.0
        %477 = vmatprep.subr.mxu0 0.0
        %478 = vmatpush1.msra.mxu0 0.0
        %479 = vmatprep.mubr.f32.mxu0 0.0
        %480 = vmatmul.mubr.f32.gmra.mrb[0].mxu0 %v410
        %v481 = vpop.f32.mrb[0].mxu0
        %v482 = vadd.f32 0.0, %v481
        %v483 = vpop.f32.mrb[0].mxu0
        %484 = vmatprep.mubr.f32.mxu0 0.0
        %485 = vmatmul.mubr.f32.gmra.mrb[0].mxu0 %v413
        %v486 = vpop.f32.mrb[0].mxu0
        %v487 = vadd.f32 0.0, %v486
        %v488 = vpop.f32.mrb[0].mxu0
        %489 = vdwg.mxu0
        %v490 = vld [vmem:[%s4] sm:$0xff]
        %v491 = vld [vmem:[%s4 + $0x8] sm:$0xff]
        %v492 = vld [vmem:[%s4 + $0x10] sm:$0xff]
        %v493 = vld [vmem:[%s4 + $0x18] sm:$0xff]
        %v495 = vsel %vm295, %v361, 0
        %v498 = vsel %vm295, %v362, 0
        %v501 = vsel %vm295, %v363, 0
        %v504 = vsel %vm295, %v364, 0
        %506 = vmatprep.subr.mxu0 0.0
        %507 = vmatpush1.msra.mxu0 %v490
        %508 = vmatprep.subr.mxu0 0.0
        %509 = vmatpush1.msra.mxu0 %v491
        %510 = vmatprep.subr.mxu0 0.0
        %511 = vmatpush1.msra.mxu0 %v492
        %512 = vmatprep.subr.mxu0 0.0
        %513 = vmatpush1.msra.mxu0 %v493
        %514 = vmatprep.subr.mxu0 0.0
        %515 = vmatpush1.msra.mxu0 0.0
        %516 = vmatprep.subr.mxu0 0.0
        %517 = vmatpush1.msra.mxu0 0.0
        %518 = vmatprep.subr.mxu0 0.0
        %519 = vmatpush1.msra.mxu0 0.0
        %520 = vmatprep.subr.mxu0 0.0
        %521 = vmatpush1.msra.mxu0 0.0
        %522 = vmatprep.subr.mxu0 0.0
        %523 = vmatpush1.msra.mxu0 0.0
        %524 = vmatprep.subr.mxu0 0.0
        %525 = vmatpush1.msra.mxu0 0.0
        %526 = vmatprep.subr.mxu0 0.0
        %527 = vmatpush1.msra.mxu0 0.0
        %528 = vmatprep.subr.mxu0 0.0
        %529 = vmatpush1.msra.mxu0 0.0
        %530 = vmatprep.subr.mxu0 0.0
        %531 = vmatpush1.msra.mxu0 0.0
        %532 = vmatprep.subr.mxu0 0.0
        %533 = vmatpush1.msra.mxu0 0.0
        %534 = vmatprep.subr.mxu0 0.0
        %535 = vmatpush1.msra.mxu0 0.0
        %536 = vmatprep.subr.mxu0 0.0
        %537 = vmatpush1.msra.mxu0 0.0
        %538 = vmatprep.subr.mxu0 0.0
        %539 = vmatpush1.msra.mxu0 0.0
        %540 = vmatprep.subr.mxu0 0.0
        %541 = vmatpush1.msra.mxu0 0.0
        %542 = vmatprep.subr.mxu0 0.0
        %543 = vmatpush1.msra.mxu0 0.0
        %544 = vmatprep.subr.mxu0 0.0
        %545 = vmatpush1.msra.mxu0 0.0
        %546 = vmatprep.subr.mxu0 0.0
        %547 = vmatpush1.msra.mxu0 0.0
        %548 = vmatprep.subr.mxu0 0.0
        %549 = vmatpush1.msra.mxu0 0.0
        %550 = vmatprep.subr.mxu0 0.0
        %551 = vmatpush1.msra.mxu0 0.0
        %552 = vmatprep.subr.mxu0 0.0
        %553 = vmatpush1.msra.mxu0 0.0
        %554 = vmatprep.subr.mxu0 0.0
        %555 = vmatpush1.msra.mxu0 0.0
        %556 = vmatprep.subr.mxu0 0.0
        %557 = vmatpush1.msra.mxu0 0.0
        %558 = vmatprep.subr.mxu0 0.0
        %559 = vmatpush1.msra.mxu0 0.0
        %560 = vmatprep.subr.mxu0 0.0
        %561 = vmatpush1.msra.mxu0 0.0
        %562 = vmatprep.subr.mxu0 0.0
        %563 = vmatpush1.msra.mxu0 0.0
        %564 = vmatprep.subr.mxu0 0.0
        %565 = vmatpush1.msra.mxu0 0.0
        %566 = vmatprep.subr.mxu0 0.0
        %567 = vmatpush1.msra.mxu0 0.0
        %568 = vmatprep.subr.mxu0 0.0
        %569 = vmatpush1.msra.mxu0 0.0
        %570 = vmatprep.mubr.f32.mxu0 0.0
        %571 = vmatmul.mubr.f32.gmra.mrb[0].mxu0 %v495
        %v572 = vpop.f32.mrb[0].mxu0
        %v573 = vadd.f32 0.0, %v572
        %v574 = vpop.f32.mrb[0].mxu0
        %575 = vmatprep.mubr.f32.mxu0 0.0
        %576 = vmatmul.mubr.f32.gmra.mrb[0].mxu0 %v498
        %v577 = vpop.f32.mrb[0].mxu0
        %v578 = vadd.f32 0.0, %v577
        %v579 = vpop.f32.mrb[0].mxu0
        %580 = vmatprep.mubr.f32.mxu0 0.0
        %581 = vmatmul.mubr.f32.gmra.mrb[0].mxu0 %v501
        %v582 = vpop.f32.mrb[0].mxu0
        %v583 = vadd.f32 0.0, %v582
        %v584 = vpop.f32.mrb[0].mxu0
        %585 = vmatprep.mubr.f32.mxu0 0.0
        %586 = vmatmul.mubr.f32.gmra.mrb[0].mxu0 %v504
        %v587 = vpop.f32.mrb[0].mxu0
        %v588 = vadd.f32 0.0, %v587
        %v589 = vpop.f32.mrb[0].mxu0
        %590 = vdwg.mxu0
        %vm591 = vcmask 64512
        %v593 = vsel %vm591, %v482, 0
        %v596 = vsel %vm591, %v573, 0
        %v599 = vsel %vm591, %v578, 0
        %601 = vmatprep.subr.mxu0 0.0
        %602 = vmatpush1.xpose.msra.mxu0 %v596
        %603 = vmatprep.subr.mxu0 0.0
        %604 = vmatpush1.xpose.msra.mxu0 %v599
        %605 = vmatprep.subr.mxu0 0.0
        %606 = vmatpush1.xpose.msra.mxu0 0.0
        %607 = vmatprep.subr.mxu0 0.0
        %608 = vmatpush1.xpose.msra.mxu0 0.0
        %609 = vmatprep.subr.mxu0 0.0
        %610 = vmatpush1.xpose.msra.mxu0 0.0
        %611 = vmatprep.subr.mxu0 0.0
        %612 = vmatpush1.xpose.msra.mxu0 0.0
        %613 = vmatprep.subr.mxu0 0.0
        %614 = vmatpush1.xpose.msra.mxu0 0.0
        %615 = vmatprep.subr.mxu0 0.0
        %616 = vmatpush1.xpose.msra.mxu0 0.0
        %617 = vmatprep.subr.mxu0 0.0
        %618 = vmatpush1.xpose.msra.mxu0 0.0
        %619 = vmatprep.subr.mxu0 0.0
        %620 = vmatpush1.xpose.msra.mxu0 0.0
        %621 = vmatprep.subr.mxu0 0.0
        %622 = vmatpush1.xpose.msra.mxu0 0.0
        %623 = vmatprep.subr.mxu0 0.0
        %624 = vmatpush1.xpose.msra.mxu0 0.0
        %625 = vmatprep.subr.mxu0 0.0
        %626 = vmatpush1.xpose.msra.mxu0 0.0
        %627 = vmatprep.subr.mxu0 0.0
        %628 = vmatpush1.xpose.msra.mxu0 0.0
        %629 = vmatprep.subr.mxu0 0.0
        %630 = vmatpush1.xpose.msra.mxu0 0.0
        %631 = vmatprep.subr.mxu0 0.0
        %632 = vmatpush1.xpose.msra.mxu0 0.0
        %633 = vmatprep.subr.mxu0 0.0
        %634 = vmatpush1.xpose.msra.mxu0 0.0
        %635 = vmatprep.subr.mxu0 0.0
        %636 = vmatpush1.xpose.msra.mxu0 0.0
        %637 = vmatprep.subr.mxu0 0.0
        %638 = vmatpush1.xpose.msra.mxu0 0.0
        %639 = vmatprep.subr.mxu0 0.0
        %640 = vmatpush1.xpose.msra.mxu0 0.0
        %641 = vmatprep.subr.mxu0 0.0
        %642 = vmatpush1.xpose.msra.mxu0 0.0
        %643 = vmatprep.subr.mxu0 0.0
        %644 = vmatpush1.xpose.msra.mxu0 0.0
        %645 = vmatprep.subr.mxu0 0.0
        %646 = vmatpush1.xpose.msra.mxu0 0.0
        %647 = vmatprep.subr.mxu0 0.0
        %648 = vmatpush1.xpose.msra.mxu0 0.0
        %649 = vmatprep.subr.mxu0 0.0
        %650 = vmatpush1.xpose.msra.mxu0 0.0
        %651 = vmatprep.subr.mxu0 0.0
        %652 = vmatpush1.xpose.msra.mxu0 0.0
        %653 = vmatprep.subr.mxu0 0.0
        %654 = vmatpush1.xpose.msra.mxu0 0.0
        %655 = vmatprep.subr.mxu0 0.0
        %656 = vmatpush1.xpose.msra.mxu0 0.0
        %657 = vmatprep.subr.mxu0 0.0
        %658 = vmatpush1.xpose.msra.mxu0 0.0
        %659 = vmatprep.subr.mxu0 0.0
        %660 = vmatpush1.xpose.msra.mxu0 0.0
        %661 = vmatprep.subr.mxu0 0.0
        %662 = vmatpush1.xpose.msra.mxu0 0.0
        %663 = vmatprep.subr.mxu0 0.0
        %664 = vmatpush1.xpose.msra.mxu0 0.0
        %665 = vmatprep.mubr.f32.mxu0 0.0
        %666 = vmatmul.mubr.f32.gmra.mrb[0].mxu0 %v593
        %v667 = vpop.f32.mrb[0].mxu0
        %v668 = vadd.f32 0.0, %v667
        %v669 = vpop.f32.mrb[0].mxu0
        %670 = vdwg.mxu0
        %v672 = vsel %vm591, %v487, 0
        %v675 = vsel %vm591, %v583, 0
        %v678 = vsel %vm591, %v588, 0
        %680 = vmatprep.subr.mxu0 0.0
        %681 = vmatpush1.xpose.msra.mxu0 %v675
        %682 = vmatprep.subr.mxu0 0.0
        %683 = vmatpush1.xpose.msra.mxu0 %v678
        %684 = vmatprep.subr.mxu0 0.0
        %685 = vmatpush1.xpose.msra.mxu0 0.0
        %686 = vmatprep.subr.mxu0 0.0
        %687 = vmatpush1.xpose.msra.mxu0 0.0
        %688 = vmatprep.subr.mxu0 0.0
        %689 = vmatpush1.xpose.msra.mxu0 0.0
        %690 = vmatprep.subr.mxu0 0.0
        %691 = vmatpush1.xpose.msra.mxu0 0.0
        %692 = vmatprep.subr.mxu0 0.0
        %693 = vmatpush1.xpose.msra.mxu0 0.0
        %694 = vmatprep.subr.mxu0 0.0
        %695 = vmatpush1.xpose.msra.mxu0 0.0
        %696 = vmatprep.subr.mxu0 0.0
        %697 = vmatpush1.xpose.msra.mxu0 0.0
        %698 = vmatprep.subr.mxu0 0.0
        %699 = vmatpush1.xpose.msra.mxu0 0.0
        %700 = vmatprep.subr.mxu0 0.0
        %701 = vmatpush1.xpose.msra.mxu0 0.0
        %702 = vmatprep.subr.mxu0 0.0
        %703 = vmatpush1.xpose.msra.mxu0 0.0
        %704 = vmatprep.subr.mxu0 0.0
        %705 = vmatpush1.xpose.msra.mxu0 0.0
        %706 = vmatprep.subr.mxu0 0.0
        %707 = vmatpush1.xpose.msra.mxu0 0.0
        %708 = vmatprep.subr.mxu0 0.0
        %709 = vmatpush1.xpose.msra.mxu0 0.0
        %710 = vmatprep.subr.mxu0 0.0
        %711 = vmatpush1.xpose.msra.mxu0 0.0
        %712 = vmatprep.subr.mxu0 0.0
        %713 = vmatpush1.xpose.msra.mxu0 0.0
        %714 = vmatprep.subr.mxu0 0.0
        %715 = vmatpush1.xpose.msra.mxu0 0.0
        %716 = vmatprep.subr.mxu0 0.0
        %717 = vmatpush1.xpose.msra.mxu0 0.0
        %718 = vmatprep.subr.mxu0 0.0
        %719 = vmatpush1.xpose.msra.mxu0 0.0
        %720 = vmatprep.subr.mxu0 0.0
        %721 = vmatpush1.xpose.msra.mxu0 0.0
        %722 = vmatprep.subr.mxu0 0.0
        %723 = vmatpush1.xpose.msra.mxu0 0.0
        %724 = vmatprep.subr.mxu0 0.0
        %725 = vmatpush1.xpose.msra.mxu0 0.0
        %726 = vmatprep.subr.mxu0 0.0
        %727 = vmatpush1.xpose.msra.mxu0 0.0
        %728 = vmatprep.subr.mxu0 0.0
        %729 = vmatpush1.xpose.msra.mxu0 0.0
        %730 = vmatprep.subr.mxu0 0.0
        %731 = vmatpush1.xpose.msra.mxu0 0.0
        %732 = vmatprep.subr.mxu0 0.0
        %733 = vmatpush1.xpose.msra.mxu0 0.0
        %734 = vmatprep.subr.mxu0 0.0
        %735 = vmatpush1.xpose.msra.mxu0 0.0
        %736 = vmatprep.subr.mxu0 0.0
        %737 = vmatpush1.xpose.msra.mxu0 0.0
        %738 = vmatprep.subr.mxu0 0.0
        %739 = vmatpush1.xpose.msra.mxu0 0.0
        %740 = vmatprep.subr.mxu0 0.0
        %741 = vmatpush1.xpose.msra.mxu0 0.0
        %742 = vmatprep.subr.mxu0 0.0
        %743 = vmatpush1.xpose.msra.mxu0 0.0
        %744 = vmatprep.mubr.f32.mxu0 0.0
        %745 = vmatmul.mubr.f32.gmra.mrb[0].mxu0 %v672
        %v746 = vpop.f32.mrb[0].mxu0
        %v747 = vadd.f32 0.0, %v746
        %v748 = vpop.f32.mrb[0].mxu0
        %749 = vdwg.mxu0
        %750 = vrot.lane.b32.xlu0 %v482, 96
        %v751 = vpop.permute.xlu0 %750
        %v752 = vsel %vm591, %v751, 0
        %754 = vmatprep.subr.mxu0 0.0
        %755 = vmatpush1.xpose.msra.mxu0 %v752
        %756 = vmatprep.subr.mxu0 0.0
        %757 = vmatpush1.xpose.msra.mxu0 0.0
        %758 = vmatprep.subr.mxu0 0.0
        %759 = vmatpush1.xpose.msra.mxu0 0.0
        %760 = vmatprep.subr.mxu0 0.0
        %761 = vmatpush1.xpose.msra.mxu0 0.0
        %762 = vmatprep.subr.mxu0 0.0
        %763 = vmatpush1.xpose.msra.mxu0 0.0
        %764 = vmatprep.subr.mxu0 0.0
        %765 = vmatpush1.xpose.msra.mxu0 0.0
        %766 = vmatprep.subr.mxu0 0.0
        %767 = vmatpush1.xpose.msra.mxu0 0.0
        %768 = vmatprep.subr.mxu0 0.0
        %769 = vmatpush1.xpose.msra.mxu0 0.0
        %770 = vmatprep.subr.mxu0 0.0
        %771 = vmatpush1.xpose.msra.mxu0 0.0
        %772 = vmatprep.subr.mxu0 0.0
        %773 = vmatpush1.xpose.msra.mxu0 0.0
        %774 = vmatprep.subr.mxu0 0.0
        %775 = vmatpush1.xpose.msra.mxu0 0.0
        %776 = vmatprep.subr.mxu0 0.0
        %777 = vmatpush1.xpose.msra.mxu0 0.0
        %778 = vmatprep.subr.mxu0 0.0
        %779 = vmatpush1.xpose.msra.mxu0 0.0
        %780 = vmatprep.subr.mxu0 0.0
        %781 = vmatpush1.xpose.msra.mxu0 0.0
        %782 = vmatprep.subr.mxu0 0.0
        %783 = vmatpush1.xpose.msra.mxu0 0.0
        %784 = vmatprep.subr.mxu0 0.0
        %785 = vmatpush1.xpose.msra.mxu0 0.0
        %786 = vmatprep.subr.mxu0 0.0
        %787 = vmatpush1.xpose.msra.mxu0 0.0
        %788 = vmatprep.subr.mxu0 0.0
        %789 = vmatpush1.xpose.msra.mxu0 0.0
        %790 = vmatprep.subr.mxu0 0.0
        %791 = vmatpush1.xpose.msra.mxu0 0.0
        %792 = vmatprep.subr.mxu0 0.0
        %793 = vmatpush1.xpose.msra.mxu0 0.0
        %794 = vmatprep.subr.mxu0 0.0
        %795 = vmatpush1.xpose.msra.mxu0 0.0
        %796 = vmatprep.subr.mxu0 0.0
        %797 = vmatpush1.xpose.msra.mxu0 0.0
        %798 = vmatprep.subr.mxu0 0.0
        %799 = vmatpush1.xpose.msra.mxu0 0.0
        %800 = vmatprep.subr.mxu0 0.0
        %801 = vmatpush1.xpose.msra.mxu0 0.0
        %802 = vmatprep.subr.mxu0 0.0
        %803 = vmatpush1.xpose.msra.mxu0 0.0
        %804 = vmatprep.subr.mxu0 0.0
        %805 = vmatpush1.xpose.msra.mxu0 0.0
        %806 = vmatprep.subr.mxu0 0.0
        %807 = vmatpush1.xpose.msra.mxu0 0.0
        %808 = vmatprep.subr.mxu0 0.0
        %809 = vmatpush1.xpose.msra.mxu0 0.0
        %810 = vmatprep.subr.mxu0 0.0
        %811 = vmatpush1.xpose.msra.mxu0 0.0
        %812 = vmatprep.subr.mxu0 0.0
        %813 = vmatpush1.xpose.msra.mxu0 0.0
        %814 = vmatprep.subr.mxu0 0.0
        %815 = vmatpush1.xpose.msra.mxu0 0.0
        %816 = vmatprep.subr.mxu0 0.0
        %817 = vmatpush1.xpose.msra.mxu0 0.0
        %818 = vmatprep.mubr.f32.mxu0 0.0
        %819 = vmatmul.mubr.f32.gmra.mrb[0].mxu0 %v593
        %v820 = vpop.f32.mrb[0].mxu0
        %v821 = vadd.f32 0.0, %v820
        %v822 = vpop.f32.mrb[0].mxu0
        %823 = vdwg.mxu0
        %824 = vrot.lane.b32.xlu0 %v487, 96
        %v825 = vpop.permute.xlu0 %824
        %v826 = vsel %vm591, %v825, 0
        %828 = vmatprep.subr.mxu0 0.0
        %829 = vmatpush1.xpose.msra.mxu0 %v826
        %830 = vmatprep.subr.mxu0 0.0
        %831 = vmatpush1.xpose.msra.mxu0 0.0
        %832 = vmatprep.subr.mxu0 0.0
        %833 = vmatpush1.xpose.msra.mxu0 0.0
        %834 = vmatprep.subr.mxu0 0.0
        %835 = vmatpush1.xpose.msra.mxu0 0.0
        %836 = vmatprep.subr.mxu0 0.0
        %837 = vmatpush1.xpose.msra.mxu0 0.0
        %838 = vmatprep.subr.mxu0 0.0
        %839 = vmatpush1.xpose.msra.mxu0 0.0
        %840 = vmatprep.subr.mxu0 0.0
        %841 = vmatpush1.xpose.msra.mxu0 0.0
        %842 = vmatprep.subr.mxu0 0.0
        %843 = vmatpush1.xpose.msra.mxu0 0.0
        %844 = vmatprep.subr.mxu0 0.0
        %845 = vmatpush1.xpose.msra.mxu0 0.0
        %846 = vmatprep.subr.mxu0 0.0
        %847 = vmatpush1.xpose.msra.mxu0 0.0
        %848 = vmatprep.subr.mxu0 0.0
        %849 = vmatpush1.xpose.msra.mxu0 0.0
        %850 = vmatprep.subr.mxu0 0.0
        %851 = vmatpush1.xpose.msra.mxu0 0.0
        %852 = vmatprep.subr.mxu0 0.0
        %853 = vmatpush1.xpose.msra.mxu0 0.0
        %854 = vmatprep.subr.mxu0 0.0
        %855 = vmatpush1.xpose.msra.mxu0 0.0
        %856 = vmatprep.subr.mxu0 0.0
        %857 = vmatpush1.xpose.msra.mxu0 0.0
        %858 = vmatprep.subr.mxu0 0.0
        %859 = vmatpush1.xpose.msra.mxu0 0.0
        %860 = vmatprep.subr.mxu0 0.0
        %861 = vmatpush1.xpose.msra.mxu0 0.0
        %862 = vmatprep.subr.mxu0 0.0
        %863 = vmatpush1.xpose.msra.mxu0 0.0
        %864 = vmatprep.subr.mxu0 0.0
        %865 = vmatpush1.xpose.msra.mxu0 0.0
        %866 = vmatprep.subr.mxu0 0.0
        %867 = vmatpush1.xpose.msra.mxu0 0.0
        %868 = vmatprep.subr.mxu0 0.0
        %869 = vmatpush1.xpose.msra.mxu0 0.0
        %870 = vmatprep.subr.mxu0 0.0
        %871 = vmatpush1.xpose.msra.mxu0 0.0
        %872 = vmatprep.subr.mxu0 0.0
        %873 = vmatpush1.xpose.msra.mxu0 0.0
        %874 = vmatprep.subr.mxu0 0.0
        %875 = vmatpush1.xpose.msra.mxu0 0.0
        %876 = vmatprep.subr.mxu0 0.0
        %877 = vmatpush1.xpose.msra.mxu0 0.0
        %878 = vmatprep.subr.mxu0 0.0
        %879 = vmatpush1.xpose.msra.mxu0 0.0
        %880 = vmatprep.subr.mxu0 0.0
        %881 = vmatpush1.xpose.msra.mxu0 0.0
        %882 = vmatprep.subr.mxu0 0.0
        %883 = vmatpush1.xpose.msra.mxu0 0.0
        %884 = vmatprep.subr.mxu0 0.0
        %885 = vmatpush1.xpose.msra.mxu0 0.0
        %886 = vmatprep.subr.mxu0 0.0
        %887 = vmatpush1.xpose.msra.mxu0 0.0
        %888 = vmatprep.subr.mxu0 0.0
        %889 = vmatpush1.xpose.msra.mxu0 0.0
        %890 = vmatprep.subr.mxu0 0.0
        %891 = vmatpush1.xpose.msra.mxu0 0.0
        %892 = vmatprep.mubr.f32.mxu0 0.0
        %893 = vmatmul.mubr.f32.gmra.mrb[0].mxu0 %v672
        %v894 = vpop.f32.mrb[0].mxu0
        %v895 = vadd.f32 0.0, %v894
        %v896 = vpop.f32.mrb[0].mxu0
        %897 = vdwg.mxu0
        %vm898 = vcmask 130048
        %v899 = vsel %vm898, %v668, -inf
        %900 = vmax.xlane.f32.xlu0 %v899
        %v901 = vpop.xlane.xlu0 %900
        %v902 = vsel %vm898, %v747, -inf
        %903 = vmax.xlane.f32.xlu0 %v902
        %v904 = vpop.xlane.xlu0 %903
        %v905 = vsel %vm591, %v821, -inf
        %906 = vmax.xlane.f32.xlu0 %v905
        %v907 = vpop.xlane.xlu0 %906
        %v908 = vsel %vm591, %v895, -inf
        %909 = vmax.xlane.f32.xlu0 %v908
        %v910 = vpop.xlane.xlu0 %909
        %v911 = vmax.f32 %v901, %v907
        %v912 = vmax.f32 %v904, %v910
        %v913 = vsub.f32 %v668, %v911
        %v914 = vsub.f32 %v747, %v912
        %v915 = vmul.f32 %v913, 1.442695
        %v916 = vpow.pop %v915
        %v917 = vmul.f32 %v914, 1.442695
        %v918 = vpow.pop %v917
        %v919 = vsub.f32 %v821, %v911
        %v920 = vsub.f32 %v895, %v912
        %v921 = vmul.f32 %v919, 1.442695
        %v922 = vpow.pop %v921
        %v923 = vmul.f32 %v920, 1.442695
        %v924 = vpow.pop %v923
        %v925 = vsel %vm898, %v916, 0.0
        %926 = vadd.xlane.f32.xlu0 %v925
        %v927 = vpop.xlane.xlu0 %926
        %v928 = vsel %vm898, %v918, 0.0
        %929 = vadd.xlane.f32.xlu0 %v928
        %v930 = vpop.xlane.xlu0 %929
        %v931 = vsel %vm591, %v922, 0.0
        %932 = vadd.xlane.f32.xlu0 %v931
        %v933 = vpop.xlane.xlu0 %932
        %v934 = vsel %vm591, %v924, 0.0
        %935 = vadd.xlane.f32.xlu0 %v934
        %v936 = vpop.xlane.xlu0 %935
        %v937 = vadd.f32 %v927, %v933
        %v938 = vadd.f32 %v930, %v936
        %939 = vrot.lane.b32.xlu0 %v482, 64
        %v940 = vpop.permute.xlu0 %939
        %v943 = vsel %vm591, %v922, 0
        %945 = vmatprep.subr.mxu0 0.0
        %946 = vmatpush1.msra.mxu0 %v940
        %947 = vmatprep.subr.mxu0 0.0
        %948 = vmatpush1.msra.mxu0 0.0
        %949 = vmatprep.subr.mxu0 0.0
        %950 = vmatpush1.msra.mxu0 0.0
        %951 = vmatprep.subr.mxu0 0.0
        %952 = vmatpush1.msra.mxu0 0.0
        %953 = vmatprep.subr.mxu0 0.0
        %954 = vmatpush1.msra.mxu0 0.0
        %955 = vmatprep.subr.mxu0 0.0
        %956 = vmatpush1.msra.mxu0 0.0
        %957 = vmatprep.subr.mxu0 0.0
        %958 = vmatpush1.msra.mxu0 0.0
        %959 = vmatprep.subr.mxu0 0.0
        %960 = vmatpush1.msra.mxu0 0.0
        %961 = vmatprep.subr.mxu0 0.0
        %962 = vmatpush1.msra.mxu0 0.0
        %963 = vmatprep.subr.mxu0 0.0
        %964 = vmatpush1.msra.mxu0 0.0
        %965 = vmatprep.subr.mxu0 0.0
        %966 = vmatpush1.msra.mxu0 0.0
        %967 = vmatprep.subr.mxu0 0.0
        %968 = vmatpush1.msra.mxu0 0.0
        %969 = vmatprep.subr.mxu0 0.0
        %970 = vmatpush1.msra.mxu0 0.0
        %971 = vmatprep.subr.mxu0 0.0
        %972 = vmatpush1.msra.mxu0 0.0
        %973 = vmatprep.subr.mxu0 0.0
        %974 = vmatpush1.msra.mxu0 0.0
        %975 = vmatprep.subr.mxu0 0.0
        %976 = vmatpush1.msra.mxu0 0.0
        %977 = vmatprep.subr.mxu0 0.0
        %978 = vmatpush1.msra.mxu0 0.0
        %979 = vmatprep.subr.mxu0 0.0
        %980 = vmatpush1.msra.mxu0 0.0
        %981 = vmatprep.subr.mxu0 0.0
        %982 = vmatpush1.msra.mxu0 0.0
        %983 = vmatprep.subr.mxu0 0.0
        %984 = vmatpush1.msra.mxu0 0.0
        %985 = vmatprep.subr.mxu0 0.0
        %986 = vmatpush1.msra.mxu0 0.0
        %987 = vmatprep.subr.mxu0 0.0
        %988 = vmatpush1.msra.mxu0 0.0
        %989 = vmatprep.subr.mxu0 0.0
        %990 = vmatpush1.msra.mxu0 0.0
        %991 = vmatprep.subr.mxu0 0.0
        %992 = vmatpush1.msra.mxu0 0.0
        %993 = vmatprep.subr.mxu0 0.0
        %994 = vmatpush1.msra.mxu0 0.0
        %995 = vmatprep.subr.mxu0 0.0
        %996 = vmatpush1.msra.mxu0 0.0
        %997 = vmatprep.subr.mxu0 0.0
        %998 = vmatpush1.msra.mxu0 0.0
        %999 = vmatprep.subr.mxu0 0.0
        %1000 = vmatpush1.msra.mxu0 0.0
        %1001 = vmatprep.subr.mxu0 0.0
        %1002 = vmatpush1.msra.mxu0 0.0
        %1003 = vmatprep.subr.mxu0 0.0
        %1004 = vmatpush1.msra.mxu0 0.0
        %1005 = vmatprep.subr.mxu0 0.0
        %1006 = vmatpush1.msra.mxu0 0.0
        %1007 = vmatprep.subr.mxu0 0.0
        %1008 = vmatpush1.msra.mxu0 0.0
        %1009 = vmatprep.mubr.f32.mxu0 0.0
        %1010 = vmatmul.mubr.f32.gmra.mrb[0].mxu0 %v943
        %v1011 = vpop.f32.mrb[0].mxu0
        %v1012 = vadd.f32 0.0, %v1011
        %v1013 = vpop.f32.mrb[0].mxu0
        %1014 = vdwg.mxu0
        %1015 = vrot.lane.b32.xlu0 %v487, 64
        %v1016 = vpop.permute.xlu0 %1015
        %v1019 = vsel %vm591, %v924, 0
        %1021 = vmatprep.subr.mxu0 0.0
        %1022 = vmatpush1.msra.mxu0 %v1016
        %1023 = vmatprep.subr.mxu0 0.0
        %1024 = vmatpush1.msra.mxu0 0.0
        %1025 = vmatprep.subr.mxu0 0.0
        %1026 = vmatpush1.msra.mxu0 0.0
        %1027 = vmatprep.subr.mxu0 0.0
        %1028 = vmatpush1.msra.mxu0 0.0
        %1029 = vmatprep.subr.mxu0 0.0
        %1030 = vmatpush1.msra.mxu0 0.0
        %1031 = vmatprep.subr.mxu0 0.0
        %1032 = vmatpush1.msra.mxu0 0.0
        %1033 = vmatprep.subr.mxu0 0.0
        %1034 = vmatpush1.msra.mxu0 0.0
        %1035 = vmatprep.subr.mxu0 0.0
        %1036 = vmatpush1.msra.mxu0 0.0
        %1037 = vmatprep.subr.mxu0 0.0
        %1038 = vmatpush1.msra.mxu0 0.0
        %1039 = vmatprep.subr.mxu0 0.0
        %1040 = vmatpush1.msra.mxu0 0.0
        %1041 = vmatprep.subr.mxu0 0.0
        %1042 = vmatpush1.msra.mxu0 0.0
        %1043 = vmatprep.subr.mxu0 0.0
        %1044 = vmatpush1.msra.mxu0 0.0
        %1045 = vmatprep.subr.mxu0 0.0
        %1046 = vmatpush1.msra.mxu0 0.0
        %1047 = vmatprep.subr.mxu0 0.0
        %1048 = vmatpush1.msra.mxu0 0.0
        %1049 = vmatprep.subr.mxu0 0.0
        %1050 = vmatpush1.msra.mxu0 0.0
        %1051 = vmatprep.subr.mxu0 0.0
        %1052 = vmatpush1.msra.mxu0 0.0
        %1053 = vmatprep.subr.mxu0 0.0
        %1054 = vmatpush1.msra.mxu0 0.0
        %1055 = vmatprep.subr.mxu0 0.0
        %1056 = vmatpush1.msra.mxu0 0.0
        %1057 = vmatprep.subr.mxu0 0.0
        %1058 = vmatpush1.msra.mxu0 0.0
        %1059 = vmatprep.subr.mxu0 0.0
        %1060 = vmatpush1.msra.mxu0 0.0
        %1061 = vmatprep.subr.mxu0 0.0
        %1062 = vmatpush1.msra.mxu0 0.0
        %1063 = vmatprep.subr.mxu0 0.0
        %1064 = vmatpush1.msra.mxu0 0.0
        %1065 = vmatprep.subr.mxu0 0.0
        %1066 = vmatpush1.msra.mxu0 0.0
        %1067 = vmatprep.subr.mxu0 0.0
        %1068 = vmatpush1.msra.mxu0 0.0
        %1069 = vmatprep.subr.mxu0 0.0
        %1070 = vmatpush1.msra.mxu0 0.0
        %1071 = vmatprep.subr.mxu0 0.0
        %1072 = vmatpush1.msra.mxu0 0.0
        %1073 = vmatprep.subr.mxu0 0.0
        %1074 = vmatpush1.msra.mxu0 0.0
        %1075 = vmatprep.subr.mxu0 0.0
        %1076 = vmatpush1.msra.mxu0 0.0
        %1077 = vmatprep.subr.mxu0 0.0
        %1078 = vmatpush1.msra.mxu0 0.0
        %1079 = vmatprep.subr.mxu0 0.0
        %1080 = vmatpush1.msra.mxu0 0.0
        %1081 = vmatprep.subr.mxu0 0.0
        %1082 = vmatpush1.msra.mxu0 0.0
        %1083 = vmatprep.subr.mxu0 0.0
        %1084 = vmatpush1.msra.mxu0 0.0
        %1085 = vmatprep.mubr.f32.mxu0 0.0
        %1086 = vmatmul.mubr.f32.gmra.mrb[0].mxu0 %v1019
        %v1087 = vpop.f32.mrb[0].mxu0
        %v1088 = vadd.f32 0.0, %v1087
        %v1089 = vpop.f32.mrb[0].mxu0
        %1090 = vdwg.mxu0
        %1091 = vrot.lane.b32.xlu0 %v573, 96
        %v1092 = vpop.permute.xlu0 %1091
        %1093 = vrot.lane.b32.xlu0 %v578, 96
        %v1094 = vpop.permute.xlu0 %1093
        %v1098 = vsel %vm898, %v916, 0
        %1100 = vmatprep.subr.mxu0 0.0
        %1101 = vmatpush1.msra.mxu0 %v1092
        %1102 = vmatprep.subr.mxu0 0.0
        %1103 = vmatpush1.msra.mxu0 %v1094
        %1104 = vmatprep.subr.mxu0 0.0
        %1105 = vmatpush1.msra.mxu0 0.0
        %1106 = vmatprep.subr.mxu0 0.0
        %1107 = vmatpush1.msra.mxu0 0.0
        %1108 = vmatprep.subr.mxu0 0.0
        %1109 = vmatpush1.msra.mxu0 0.0
        %1110 = vmatprep.subr.mxu0 0.0
        %1111 = vmatpush1.msra.mxu0 0.0
        %1112 = vmatprep.subr.mxu0 0.0
        %1113 = vmatpush1.msra.mxu0 0.0
        %1114 = vmatprep.subr.mxu0 0.0
        %1115 = vmatpush1.msra.mxu0 0.0
        %1116 = vmatprep.subr.mxu0 0.0
        %1117 = vmatpush1.msra.mxu0 0.0
        %1118 = vmatprep.subr.mxu0 0.0
        %1119 = vmatpush1.msra.mxu0 0.0
        %1120 = vmatprep.subr.mxu0 0.0
        %1121 = vmatpush1.msra.mxu0 0.0
        %1122 = vmatprep.subr.mxu0 0.0
        %1123 = vmatpush1.msra.mxu0 0.0
        %1124 = vmatprep.subr.mxu0 0.0
        %1125 = vmatpush1.msra.mxu0 0.0
        %1126 = vmatprep.subr.mxu0 0.0
        %1127 = vmatpush1.msra.mxu0 0.0
        %1128 = vmatprep.subr.mxu0 0.0
        %1129 = vmatpush1.msra.mxu0 0.0
        %1130 = vmatprep.subr.mxu0 0.0
        %1131 = vmatpush1.msra.mxu0 0.0
        %1132 = vmatprep.subr.mxu0 0.0
        %1133 = vmatpush1.msra.mxu0 0.0
        %1134 = vmatprep.subr.mxu0 0.0
        %1135 = vmatpush1.msra.mxu0 0.0
        %1136 = vmatprep.subr.mxu0 0.0
        %1137 = vmatpush1.msra.mxu0 0.0
        %1138 = vmatprep.subr.mxu0 0.0
        %1139 = vmatpush1.msra.mxu0 0.0
        %1140 = vmatprep.subr.mxu0 0.0
        %1141 = vmatpush1.msra.mxu0 0.0
        %1142 = vmatprep.subr.mxu0 0.0
        %1143 = vmatpush1.msra.mxu0 0.0
        %1144 = vmatprep.subr.mxu0 0.0
        %1145 = vmatpush1.msra.mxu0 0.0
        %1146 = vmatprep.subr.mxu0 0.0
        %1147 = vmatpush1.msra.mxu0 0.0
        %1148 = vmatprep.subr.mxu0 0.0
        %1149 = vmatpush1.msra.mxu0 0.0
        %1150 = vmatprep.subr.mxu0 0.0
        %1151 = vmatpush1.msra.mxu0 0.0
        %1152 = vmatprep.subr.mxu0 0.0
        %1153 = vmatpush1.msra.mxu0 0.0
        %1154 = vmatprep.subr.mxu0 0.0
        %1155 = vmatpush1.msra.mxu0 0.0
        %1156 = vmatprep.subr.mxu0 0.0
        %1157 = vmatpush1.msra.mxu0 0.0
        %1158 = vmatprep.subr.mxu0 0.0
        %1159 = vmatpush1.msra.mxu0 0.0
        %1160 = vmatprep.subr.mxu0 0.0
        %1161 = vmatpush1.msra.mxu0 0.0
        %1162 = vmatprep.subr.mxu0 0.0
        %1163 = vmatpush1.msra.mxu0 0.0
        %1164 = vmatprep.mubr.f32.mxu0 0.0
        %1165 = vmatmul.mubr.f32.gmra.mrb[0].mxu0 %v1098
        %v1166 = vpop.f32.mrb[0].mxu0
        %v1167 = vadd.f32 %v1012, %v1166
        %v1168 = vpop.f32.mrb[0].mxu0
        %1169 = vdwg.mxu0
        %1170 = vrot.lane.b32.xlu0 %v583, 96
        %v1171 = vpop.permute.xlu0 %1170
        %1172 = vrot.lane.b32.xlu0 %v588, 96
        %v1173 = vpop.permute.xlu0 %1172
        %v1177 = vsel %vm898, %v918, 0
        %1179 = vmatprep.subr.mxu0 0.0
        %1180 = vmatpush1.msra.mxu0 %v1171
        %1181 = vmatprep.subr.mxu0 0.0
        %1182 = vmatpush1.msra.mxu0 %v1173
        %1183 = vmatprep.subr.mxu0 0.0
        %1184 = vmatpush1.msra.mxu0 0.0
        %1185 = vmatprep.subr.mxu0 0.0
        %1186 = vmatpush1.msra.mxu0 0.0
        %1187 = vmatprep.subr.mxu0 0.0
        %1188 = vmatpush1.msra.mxu0 0.0
        %1189 = vmatprep.subr.mxu0 0.0
        %1190 = vmatpush1.msra.mxu0 0.0
        %1191 = vmatprep.subr.mxu0 0.0
        %1192 = vmatpush1.msra.mxu0 0.0
        %1193 = vmatprep.subr.mxu0 0.0
        %1194 = vmatpush1.msra.mxu0 0.0
        %1195 = vmatprep.subr.mxu0 0.0
        %1196 = vmatpush1.msra.mxu0 0.0
        %1197 = vmatprep.subr.mxu0 0.0
        %1198 = vmatpush1.msra.mxu0 0.0
        %1199 = vmatprep.subr.mxu0 0.0
        %1200 = vmatpush1.msra.mxu0 0.0
        %1201 = vmatprep.subr.mxu0 0.0
        %1202 = vmatpush1.msra.mxu0 0.0
        %1203 = vmatprep.subr.mxu0 0.0
        %1204 = vmatpush1.msra.mxu0 0.0
        %1205 = vmatprep.subr.mxu0 0.0
        %1206 = vmatpush1.msra.mxu0 0.0
        %1207 = vmatprep.subr.mxu0 0.0
        %1208 = vmatpush1.msra.mxu0 0.0
        %1209 = vmatprep.subr.mxu0 0.0
        %1210 = vmatpush1.msra.mxu0 0.0
        %1211 = vmatprep.subr.mxu0 0.0
        %1212 = vmatpush1.msra.mxu0 0.0
        %1213 = vmatprep.subr.mxu0 0.0
        %1214 = vmatpush1.msra.mxu0 0.0
        %1215 = vmatprep.subr.mxu0 0.0
        %1216 = vmatpush1.msra.mxu0 0.0
        %1217 = vmatprep.subr.mxu0 0.0
        %1218 = vmatpush1.msra.mxu0 0.0
        %1219 = vmatprep.subr.mxu0 0.0
        %1220 = vmatpush1.msra.mxu0 0.0
        %1221 = vmatprep.subr.mxu0 0.0
        %1222 = vmatpush1.msra.mxu0 0.0
        %1223 = vmatprep.subr.mxu0 0.0
        %1224 = vmatpush1.msra.mxu0 0.0
        %1225 = vmatprep.subr.mxu0 0.0
        %1226 = vmatpush1.msra.mxu0 0.0
        %1227 = vmatprep.subr.mxu0 0.0
        %1228 = vmatpush1.msra.mxu0 0.0
        %1229 = vmatprep.subr.mxu0 0.0
        %1230 = vmatpush1.msra.mxu0 0.0
        %1231 = vmatprep.subr.mxu0 0.0
        %1232 = vmatpush1.msra.mxu0 0.0
        %1233 = vmatprep.subr.mxu0 0.0
        %1234 = vmatpush1.msra.mxu0 0.0
        %1235 = vmatprep.subr.mxu0 0.0
        %1236 = vmatpush1.msra.mxu0 0.0
        %1237 = vmatprep.subr.mxu0 0.0
        %1238 = vmatpush1.msra.mxu0 0.0
        %1239 = vmatprep.subr.mxu0 0.0
        %1240 = vmatpush1.msra.mxu0 0.0
        %1241 = vmatprep.subr.mxu0 0.0
        %1242 = vmatpush1.msra.mxu0 0.0
        %1243 = vmatprep.mubr.f32.mxu0 0.0
        %1244 = vmatmul.mubr.f32.gmra.mrb[0].mxu0 %v1177
        %v1245 = vpop.f32.mrb[0].mxu0
        %v1246 = vadd.f32 %v1088, %v1245
        %v1247 = vpop.f32.mrb[0].mxu0
        %1248 = vdwg.mxu0
        %v1249 = vrcp.pop %v937
        %v1250 = vmul.f32 %v1167, %v1249
        %v1251 = vrcp.pop %v938
        %v1252 = vmul.f32 %v1246, %v1251
        %1253 = vst.msk [vmem:[#allocation2] sm:$0xff] %vm591, %v1250
        %1254 = vst.msk [vmem:[#allocation2 + $0x8] sm:$0xff] %vm591, %v1252
        %1255 = vrot.lane.b32.xlu0 %v482, 120
        %v1256 = vpop.permute.xlu0 %1255
        %1257 = vrot.lane.b32.xlu0 %v573, 120
        %v1258 = vpop.permute.xlu0 %1257
        %1259 = vrot.lane.b32.xlu0 %v578, 120
        %v1260 = vpop.permute.xlu0 %1259
        %v1261 = vsel %vm591, %v1256, 0
        %v1263 = vsel %vm591, %v1258, 0
        %v1265 = vsel %vm591, %v1260, 0
        %1267 = vmatprep.subr.mxu0 0.0
        %1268 = vmatpush1.xpose.msra.mxu0 %v1263
        %1269 = vmatprep.subr.mxu0 0.0
        %1270 = vmatpush1.xpose.msra.mxu0 %v1265
        %1271 = vmatprep.subr.mxu0 0.0
        %1272 = vmatpush1.xpose.msra.mxu0 0.0
        %1273 = vmatprep.subr.mxu0 0.0
        %1274 = vmatpush1.xpose.msra.mxu0 0.0
        %1275 = vmatprep.subr.mxu0 0.0
        %1276 = vmatpush1.xpose.msra.mxu0 0.0
        %1277 = vmatprep.subr.mxu0 0.0
        %1278 = vmatpush1.xpose.msra.mxu0 0.0
        %1279 = vmatprep.subr.mxu0 0.0
        %1280 = vmatpush1.xpose.msra.mxu0 0.0
        %1281 = vmatprep.subr.mxu0 0.0
        %1282 = vmatpush1.xpose.msra.mxu0 0.0
        %1283 = vmatprep.subr.mxu0 0.0
        %1284 = vmatpush1.xpose.msra.mxu0 0.0
        %1285 = vmatprep.subr.mxu0 0.0
        %1286 = vmatpush1.xpose.msra.mxu0 0.0
        %1287 = vmatprep.subr.mxu0 0.0
        %1288 = vmatpush1.xpose.msra.mxu0 0.0
        %1289 = vmatprep.subr.mxu0 0.0
        %1290 = vmatpush1.xpose.msra.mxu0 0.0
        %1291 = vmatprep.subr.mxu0 0.0
        %1292 = vmatpush1.xpose.msra.mxu0 0.0
        %1293 = vmatprep.subr.mxu0 0.0
        %1294 = vmatpush1.xpose.msra.mxu0 0.0
        %1295 = vmatprep.subr.mxu0 0.0
        %1296 = vmatpush1.xpose.msra.mxu0 0.0
        %1297 = vmatprep.subr.mxu0 0.0
        %1298 = vmatpush1.xpose.msra.mxu0 0.0
        %1299 = vmatprep.subr.mxu0 0.0
        %1300 = vmatpush1.xpose.msra.mxu0 0.0
        %1301 = vmatprep.subr.mxu0 0.0
        %1302 = vmatpush1.xpose.msra.mxu0 0.0
        %1303 = vmatprep.subr.mxu0 0.0
        %1304 = vmatpush1.xpose.msra.mxu0 0.0
        %1305 = vmatprep.subr.mxu0 0.0
        %1306 = vmatpush1.xpose.msra.mxu0 0.0
        %1307 = vmatprep.subr.mxu0 0.0
        %1308 = vmatpush1.xpose.msra.mxu0 0.0
        %1309 = vmatprep.subr.mxu0 0.0
        %1310 = vmatpush1.xpose.msra.mxu0 0.0
        %1311 = vmatprep.subr.mxu0 0.0
        %1312 = vmatpush1.xpose.msra.mxu0 0.0
        %1313 = vmatprep.subr.mxu0 0.0
        %1314 = vmatpush1.xpose.msra.mxu0 0.0
        %1315 = vmatprep.subr.mxu0 0.0
        %1316 = vmatpush1.xpose.msra.mxu0 0.0
        %1317 = vmatprep.subr.mxu0 0.0
        %1318 = vmatpush1.xpose.msra.mxu0 0.0
        %1319 = vmatprep.subr.mxu0 0.0
        %1320 = vmatpush1.xpose.msra.mxu0 0.0
        %1321 = vmatprep.subr.mxu0 0.0
        %1322 = vmatpush1.xpose.msra.mxu0 0.0
        %1323 = vmatprep.subr.mxu0 0.0
        %1324 = vmatpush1.xpose.msra.mxu0 0.0
        %1325 = vmatprep.subr.mxu0 0.0
        %1326 = vmatpush1.xpose.msra.mxu0 0.0
        %1327 = vmatprep.subr.mxu0 0.0
        %1328 = vmatpush1.xpose.msra.mxu0 0.0
        %1329 = vmatprep.subr.mxu0 0.0
        %1330 = vmatpush1.xpose.msra.mxu0 0.0
        %1331 = vmatprep.mubr.f32.mxu0 0.0
        %1332 = vmatmul.mubr.f32.gmra.mrb[0].mxu0 %v1261
        %v1333 = vpop.f32.mrb[0].mxu0
        %v1334 = vadd.f32 0.0, %v1333
        %v1335 = vpop.f32.mrb[0].mxu0
        %1336 = vdwg.mxu0
        %1337 = vrot.lane.b32.xlu0 %v487, 120
        %v1338 = vpop.permute.xlu0 %1337
        %1339 = vrot.lane.b32.xlu0 %v583, 120
        %v1340 = vpop.permute.xlu0 %1339
        %1341 = vrot.lane.b32.xlu0 %v588, 120
        %v1342 = vpop.permute.xlu0 %1341
        %v1343 = vsel %vm591, %v1338, 0
        %v1345 = vsel %vm591, %v1340, 0
        %v1347 = vsel %vm591, %v1342, 0
        %1349 = vmatprep.subr.mxu0 0.0
        %1350 = vmatpush1.xpose.msra.mxu0 %v1345
        %1351 = vmatprep.subr.mxu0 0.0
        %1352 = vmatpush1.xpose.msra.mxu0 %v1347
        %1353 = vmatprep.subr.mxu0 0.0
        %1354 = vmatpush1.xpose.msra.mxu0 0.0
        %1355 = vmatprep.subr.mxu0 0.0
        %1356 = vmatpush1.xpose.msra.mxu0 0.0
        %1357 = vmatprep.subr.mxu0 0.0
        %1358 = vmatpush1.xpose.msra.mxu0 0.0
        %1359 = vmatprep.subr.mxu0 0.0
        %1360 = vmatpush1.xpose.msra.mxu0 0.0
        %1361 = vmatprep.subr.mxu0 0.0
        %1362 = vmatpush1.xpose.msra.mxu0 0.0
        %1363 = vmatprep.subr.mxu0 0.0
        %1364 = vmatpush1.xpose.msra.mxu0 0.0
        %1365 = vmatprep.subr.mxu0 0.0
        %1366 = vmatpush1.xpose.msra.mxu0 0.0
        %1367 = vmatprep.subr.mxu0 0.0
        %1368 = vmatpush1.xpose.msra.mxu0 0.0
        %1369 = vmatprep.subr.mxu0 0.0
        %1370 = vmatpush1.xpose.msra.mxu0 0.0
        %1371 = vmatprep.subr.mxu0 0.0
        %1372 = vmatpush1.xpose.msra.mxu0 0.0
        %1373 = vmatprep.subr.mxu0 0.0
        %1374 = vmatpush1.xpose.msra.mxu0 0.0
        %1375 = vmatprep.subr.mxu0 0.0
        %1376 = vmatpush1.xpose.msra.mxu0 0.0
        %1377 = vmatprep.subr.mxu0 0.0
        %1378 = vmatpush1.xpose.msra.mxu0 0.0
        %1379 = vmatprep.subr.mxu0 0.0
        %1380 = vmatpush1.xpose.msra.mxu0 0.0
        %1381 = vmatprep.subr.mxu0 0.0
        %1382 = vmatpush1.xpose.msra.mxu0 0.0
        %1383 = vmatprep.subr.mxu0 0.0
        %1384 = vmatpush1.xpose.msra.mxu0 0.0
        %1385 = vmatprep.subr.mxu0 0.0
        %1386 = vmatpush1.xpose.msra.mxu0 0.0
        %1387 = vmatprep.subr.mxu0 0.0
        %1388 = vmatpush1.xpose.msra.mxu0 0.0
        %1389 = vmatprep.subr.mxu0 0.0
        %1390 = vmatpush1.xpose.msra.mxu0 0.0
        %1391 = vmatprep.subr.mxu0 0.0
        %1392 = vmatpush1.xpose.msra.mxu0 0.0
        %1393 = vmatprep.subr.mxu0 0.0
        %1394 = vmatpush1.xpose.msra.mxu0 0.0
        %1395 = vmatprep.subr.mxu0 0.0
        %1396 = vmatpush1.xpose.msra.mxu0 0.0
        %1397 = vmatprep.subr.mxu0 0.0
        %1398 = vmatpush1.xpose.msra.mxu0 0.0
        %1399 = vmatprep.subr.mxu0 0.0
        %1400 = vmatpush1.xpose.msra.mxu0 0.0
        %1401 = vmatprep.subr.mxu0 0.0
        %1402 = vmatpush1.xpose.msra.mxu0 0.0
        %1403 = vmatprep.subr.mxu0 0.0
        %1404 = vmatpush1.xpose.msra.mxu0 0.0
        %1405 = vmatprep.subr.mxu0 0.0
        %1406 = vmatpush1.xpose.msra.mxu0 0.0
        %1407 = vmatprep.subr.mxu0 0.0
        %1408 = vmatpush1.xpose.msra.mxu0 0.0
        %1409 = vmatprep.subr.mxu0 0.0
        %1410 = vmatpush1.xpose.msra.mxu0 0.0
        %1411 = vmatprep.subr.mxu0 0.0
        %1412 = vmatpush1.xpose.msra.mxu0 0.0
        %1413 = vmatprep.mubr.f32.mxu0 0.0
        %1414 = vmatmul.mubr.f32.gmra.mrb[0].mxu0 %v1343
        %v1415 = vpop.f32.mrb[0].mxu0
        %v1416 = vadd.f32 0.0, %v1415
        %v1417 = vpop.f32.mrb[0].mxu0
        %1418 = vdwg.mxu0
        %1419 = vrot.lane.b32.xlu0 %v482, 88
        %v1420 = vpop.permute.xlu0 %1419
        %v1421 = vsel %vm591, %v1420, 0
        %1423 = vmatprep.subr.mxu0 0.0
        %1424 = vmatpush1.xpose.msra.mxu0 %v1421
        %1425 = vmatprep.subr.mxu0 0.0
        %1426 = vmatpush1.xpose.msra.mxu0 0.0
        %1427 = vmatprep.subr.mxu0 0.0
        %1428 = vmatpush1.xpose.msra.mxu0 0.0
        %1429 = vmatprep.subr.mxu0 0.0
        %1430 = vmatpush1.xpose.msra.mxu0 0.0
        %1431 = vmatprep.subr.mxu0 0.0
        %1432 = vmatpush1.xpose.msra.mxu0 0.0
        %1433 = vmatprep.subr.mxu0 0.0
        %1434 = vmatpush1.xpose.msra.mxu0 0.0
        %1435 = vmatprep.subr.mxu0 0.0
        %1436 = vmatpush1.xpose.msra.mxu0 0.0
        %1437 = vmatprep.subr.mxu0 0.0
        %1438 = vmatpush1.xpose.msra.mxu0 0.0
        %1439 = vmatprep.subr.mxu0 0.0
        %1440 = vmatpush1.xpose.msra.mxu0 0.0
        %1441 = vmatprep.subr.mxu0 0.0
        %1442 = vmatpush1.xpose.msra.mxu0 0.0
        %1443 = vmatprep.subr.mxu0 0.0
        %1444 = vmatpush1.xpose.msra.mxu0 0.0
        %1445 = vmatprep.subr.mxu0 0.0
        %1446 = vmatpush1.xpose.msra.mxu0 0.0
        %1447 = vmatprep.subr.mxu0 0.0
        %1448 = vmatpush1.xpose.msra.mxu0 0.0
        %1449 = vmatprep.subr.mxu0 0.0
        %1450 = vmatpush1.xpose.msra.mxu0 0.0
        %1451 = vmatprep.subr.mxu0 0.0
        %1452 = vmatpush1.xpose.msra.mxu0 0.0
        %1453 = vmatprep.subr.mxu0 0.0
        %1454 = vmatpush1.xpose.msra.mxu0 0.0
        %1455 = vmatprep.subr.mxu0 0.0
        %1456 = vmatpush1.xpose.msra.mxu0 0.0
        %1457 = vmatprep.subr.mxu0 0.0
        %1458 = vmatpush1.xpose.msra.mxu0 0.0
        %1459 = vmatprep.subr.mxu0 0.0
        %1460 = vmatpush1.xpose.msra.mxu0 0.0
        %1461 = vmatprep.subr.mxu0 0.0
        %1462 = vmatpush1.xpose.msra.mxu0 0.0
        %1463 = vmatprep.subr.mxu0 0.0
        %1464 = vmatpush1.xpose.msra.mxu0 0.0
        %1465 = vmatprep.subr.mxu0 0.0
        %1466 = vmatpush1.xpose.msra.mxu0 0.0
        %1467 = vmatprep.subr.mxu0 0.0
        %1468 = vmatpush1.xpose.msra.mxu0 0.0
        %1469 = vmatprep.subr.mxu0 0.0
        %1470 = vmatpush1.xpose.msra.mxu0 0.0
        %1471 = vmatprep.subr.mxu0 0.0
        %1472 = vmatpush1.xpose.msra.mxu0 0.0
        %1473 = vmatprep.subr.mxu0 0.0
        %1474 = vmatpush1.xpose.msra.mxu0 0.0
        %1475 = vmatprep.subr.mxu0 0.0
        %1476 = vmatpush1.xpose.msra.mxu0 0.0
        %1477 = vmatprep.subr.mxu0 0.0
        %1478 = vmatpush1.xpose.msra.mxu0 0.0
        %1479 = vmatprep.subr.mxu0 0.0
        %1480 = vmatpush1.xpose.msra.mxu0 0.0
        %1481 = vmatprep.subr.mxu0 0.0
        %1482 = vmatpush1.xpose.msra.mxu0 0.0
        %1483 = vmatprep.subr.mxu0 0.0
        %1484 = vmatpush1.xpose.msra.mxu0 0.0
        %1485 = vmatprep.subr.mxu0 0.0
        %1486 = vmatpush1.xpose.msra.mxu0 0.0
        %1487 = vmatprep.mubr.f32.mxu0 0.0
        %1488 = vmatmul.mubr.f32.gmra.mrb[0].mxu0 %v1261
        %v1489 = vpop.f32.mrb[0].mxu0
        %v1490 = vadd.f32 0.0, %v1489
        %v1491 = vpop.f32.mrb[0].mxu0
        %1492 = vdwg.mxu0
        %1493 = vrot.lane.b32.xlu0 %v487, 88
        %v1494 = vpop.permute.xlu0 %1493
        %v1495 = vsel %vm591, %v1494, 0
        %1497 = vmatprep.subr.mxu0 0.0
        %1498 = vmatpush1.xpose.msra.mxu0 %v1495
        %1499 = vmatprep.subr.mxu0 0.0
        %1500 = vmatpush1.xpose.msra.mxu0 0.0
        %1501 = vmatprep.subr.mxu0 0.0
        %1502 = vmatpush1.xpose.msra.mxu0 0.0
        %1503 = vmatprep.subr.mxu0 0.0
        %1504 = vmatpush1.xpose.msra.mxu0 0.0
        %1505 = vmatprep.subr.mxu0 0.0
        %1506 = vmatpush1.xpose.msra.mxu0 0.0
        %1507 = vmatprep.subr.mxu0 0.0
        %1508 = vmatpush1.xpose.msra.mxu0 0.0
        %1509 = vmatprep.subr.mxu0 0.0
        %1510 = vmatpush1.xpose.msra.mxu0 0.0
        %1511 = vmatprep.subr.mxu0 0.0
        %1512 = vmatpush1.xpose.msra.mxu0 0.0
        %1513 = vmatprep.subr.mxu0 0.0
        %1514 = vmatpush1.xpose.msra.mxu0 0.0
        %1515 = vmatprep.subr.mxu0 0.0
        %1516 = vmatpush1.xpose.msra.mxu0 0.0
        %1517 = vmatprep.subr.mxu0 0.0
        %1518 = vmatpush1.xpose.msra.mxu0 0.0
        %1519 = vmatprep.subr.mxu0 0.0
        %1520 = vmatpush1.xpose.msra.mxu0 0.0
        %1521 = vmatprep.subr.mxu0 0.0
        %1522 = vmatpush1.xpose.msra.mxu0 0.0
        %1523 = vmatprep.subr.mxu0 0.0
        %1524 = vmatpush1.xpose.msra.mxu0 0.0
        %1525 = vmatprep.subr.mxu0 0.0
        %1526 = vmatpush1.xpose.msra.mxu0 0.0
        %1527 = vmatprep.subr.mxu0 0.0
        %1528 = vmatpush1.xpose.msra.mxu0 0.0
        %1529 = vmatprep.subr.mxu0 0.0
        %1530 = vmatpush1.xpose.msra.mxu0 0.0
        %1531 = vmatprep.subr.mxu0 0.0
        %1532 = vmatpush1.xpose.msra.mxu0 0.0
        %1533 = vmatprep.subr.mxu0 0.0
        %1534 = vmatpush1.xpose.msra.mxu0 0.0
        %1535 = vmatprep.subr.mxu0 0.0
        %1536 = vmatpush1.xpose.msra.mxu0 0.0
        %1537 = vmatprep.subr.mxu0 0.0
        %1538 = vmatpush1.xpose.msra.mxu0 0.0
        %1539 = vmatprep.subr.mxu0 0.0
        %1540 = vmatpush1.xpose.msra.mxu0 0.0
        %1541 = vmatprep.subr.mxu0 0.0
        %1542 = vmatpush1.xpose.msra.mxu0 0.0
        %1543 = vmatprep.subr.mxu0 0.0
        %1544 = vmatpush1.xpose.msra.mxu0 0.0
        %1545 = vmatprep.subr.mxu0 0.0
        %1546 = vmatpush1.xpose.msra.mxu0 0.0
        %1547 = vmatprep.subr.mxu0 0.0
        %1548 = vmatpush1.xpose.msra.mxu0 0.0
        %1549 = vmatprep.subr.mxu0 0.0
        %1550 = vmatpush1.xpose.msra.mxu0 0.0
        %1551 = vmatprep.subr.mxu0 0.0
        %1552 = vmatpush1.xpose.msra.mxu0 0.0
        %1553 = vmatprep.subr.mxu0 0.0
        %1554 = vmatpush1.xpose.msra.mxu0 0.0
        %1555 = vmatprep.subr.mxu0 0.0
        %1556 = vmatpush1.xpose.msra.mxu0 0.0
        %1557 = vmatprep.subr.mxu0 0.0
        %1558 = vmatpush1.xpose.msra.mxu0 0.0
        %1559 = vmatprep.subr.mxu0 0.0
        %1560 = vmatpush1.xpose.msra.mxu0 0.0
        %1561 = vmatprep.mubr.f32.mxu0 0.0
        %1562 = vmatmul.mubr.f32.gmra.mrb[0].mxu0 %v1343
        %v1563 = vpop.f32.mrb[0].mxu0
        %v1564 = vadd.f32 0.0, %v1563
        %v1565 = vpop.f32.mrb[0].mxu0
        %1566 = vdwg.mxu0
        %v1567 = vsel %vm898, %v1334, -inf
        %1568 = vmax.xlane.f32.xlu0 %v1567
        %v1569 = vpop.xlane.xlu0 %1568
        %v1570 = vsel %vm898, %v1416, -inf
        %1571 = vmax.xlane.f32.xlu0 %v1570
        %v1572 = vpop.xlane.xlu0 %1571
        %v1573 = vsel %vm591, %v1490, -inf
        %1574 = vmax.xlane.f32.xlu0 %v1573
        %v1575 = vpop.xlane.xlu0 %1574
        %v1576 = vsel %vm591, %v1564, -inf
        %1577 = vmax.xlane.f32.xlu0 %v1576
        %v1578 = vpop.xlane.xlu0 %1577
        %v1579 = vmax.f32 %v1569, %v1575
        %v1580 = vmax.f32 %v1572, %v1578
        %v1581 = vsub.f32 %v1334, %v1579
        %v1582 = vsub.f32 %v1416, %v1580
        %v1583 = vmul.f32 %v1581, 1.442695
        %v1584 = vpow.pop %v1583
        %v1585 = vmul.f32 %v1582, 1.442695
        %v1586 = vpow.pop %v1585
        %v1587 = vsub.f32 %v1490, %v1579
        %v1588 = vsub.f32 %v1564, %v1580
        %v1589 = vmul.f32 %v1587, 1.442695
        %v1590 = vpow.pop %v1589
        %v1591 = vmul.f32 %v1588, 1.442695
        %v1592 = vpow.pop %v1591
        %v1593 = vsel %vm898, %v1584, 0.0
        %1594 = vadd.xlane.f32.xlu0 %v1593
        %v1595 = vpop.xlane.xlu0 %1594
        %v1596 = vsel %vm898, %v1586, 0.0
        %1597 = vadd.xlane.f32.xlu0 %v1596
        %v1598 = vpop.xlane.xlu0 %1597
        %v1599 = vsel %vm591, %v1590, 0.0
        %1600 = vadd.xlane.f32.xlu0 %v1599
        %v1601 = vpop.xlane.xlu0 %1600
        %v1602 = vsel %vm591, %v1592, 0.0
        %1603 = vadd.xlane.f32.xlu0 %v1602
        %v1604 = vpop.xlane.xlu0 %1603
        %v1605 = vadd.f32 %v1595, %v1601
        %v1606 = vadd.f32 %v1598, %v1604
        %1607 = vrot.lane.b32.xlu0 %v482, 56
        %v1608 = vpop.permute.xlu0 %1607
        %v1611 = vsel %vm591, %v1590, 0
        %1613 = vmatprep.subr.mxu0 0.0
        %1614 = vmatpush1.msra.mxu0 %v1608
        %1615 = vmatprep.subr.mxu0 0.0
        %1616 = vmatpush1.msra.mxu0 0.0
        %1617 = vmatprep.subr.mxu0 0.0
        %1618 = vmatpush1.msra.mxu0 0.0
        %1619 = vmatprep.subr.mxu0 0.0
        %1620 = vmatpush1.msra.mxu0 0.0
        %1621 = vmatprep.subr.mxu0 0.0
        %1622 = vmatpush1.msra.mxu0 0.0
        %1623 = vmatprep.subr.mxu0 0.0
        %1624 = vmatpush1.msra.mxu0 0.0
        %1625 = vmatprep.subr.mxu0 0.0
        %1626 = vmatpush1.msra.mxu0 0.0
        %1627 = vmatprep.subr.mxu0 0.0
        %1628 = vmatpush1.msra.mxu0 0.0
        %1629 = vmatprep.subr.mxu0 0.0
        %1630 = vmatpush1.msra.mxu0 0.0
        %1631 = vmatprep.subr.mxu0 0.0
        %1632 = vmatpush1.msra.mxu0 0.0
        %1633 = vmatprep.subr.mxu0 0.0
        %1634 = vmatpush1.msra.mxu0 0.0
        %1635 = vmatprep.subr.mxu0 0.0
        %1636 = vmatpush1.msra.mxu0 0.0
        %1637 = vmatprep.subr.mxu0 0.0
        %1638 = vmatpush1.msra.mxu0 0.0
        %1639 = vmatprep.subr.mxu0 0.0
        %1640 = vmatpush1.msra.mxu0 0.0
        %1641 = vmatprep.subr.mxu0 0.0
        %1642 = vmatpush1.msra.mxu0 0.0
        %1643 = vmatprep.subr.mxu0 0.0
        %1644 = vmatpush1.msra.mxu0 0.0
        %1645 = vmatprep.subr.mxu0 0.0
        %1646 = vmatpush1.msra.mxu0 0.0
        %1647 = vmatprep.subr.mxu0 0.0
        %1648 = vmatpush1.msra.mxu0 0.0
        %1649 = vmatprep.subr.mxu0 0.0
        %1650 = vmatpush1.msra.mxu0 0.0
        %1651 = vmatprep.subr.mxu0 0.0
        %1652 = vmatpush1.msra.mxu0 0.0
        %1653 = vmatprep.subr.mxu0 0.0
        %1654 = vmatpush1.msra.mxu0 0.0
        %1655 = vmatprep.subr.mxu0 0.0
        %1656 = vmatpush1.msra.mxu0 0.0
        %1657 = vmatprep.subr.mxu0 0.0
        %1658 = vmatpush1.msra.mxu0 0.0
        %1659 = vmatprep.subr.mxu0 0.0
        %1660 = vmatpush1.msra.mxu0 0.0
        %1661 = vmatprep.subr.mxu0 0.0
        %1662 = vmatpush1.msra.mxu0 0.0
        %1663 = vmatprep.subr.mxu0 0.0
        %1664 = vmatpush1.msra.mxu0 0.0
        %1665 = vmatprep.subr.mxu0 0.0
        %1666 = vmatpush1.msra.mxu0 0.0
        %1667 = vmatprep.subr.mxu0 0.0
        %1668 = vmatpush1.msra.mxu0 0.0
        %1669 = vmatprep.subr.mxu0 0.0
        %1670 = vmatpush1.msra.mxu0 0.0
        %1671 = vmatprep.subr.mxu0 0.0
        %1672 = vmatpush1.msra.mxu0 0.0
        %1673 = vmatprep.subr.mxu0 0.0
        %1674 = vmatpush1.msra.mxu0 0.0
        %1675 = vmatprep.subr.mxu0 0.0
        %1676 = vmatpush1.msra.mxu0 0.0
        %1677 = vmatprep.mubr.f32.mxu0 0.0
        %1678 = vmatmul.mubr.f32.gmra.mrb[0].mxu0 %v1611
        %v1679 = vpop.f32.mrb[0].mxu0
        %v1680 = vadd.f32 0.0, %v1679
        %v1681 = vpop.f32.mrb[0].mxu0
        %1682 = vdwg.mxu0
        %1683 = vrot.lane.b32.xlu0 %v487, 56
        %v1684 = vpop.permute.xlu0 %1683
        %v1687 = vsel %vm591, %v1592, 0
        %1689 = vmatprep.subr.mxu0 0.0
        %1690 = vmatpush1.msra.mxu0 %v1684
        %1691 = vmatprep.subr.mxu0 0.0
        %1692 = vmatpush1.msra.mxu0 0.0
        %1693 = vmatprep.subr.mxu0 0.0
        %1694 = vmatpush1.msra.mxu0 0.0
        %1695 = vmatprep.subr.mxu0 0.0
        %1696 = vmatpush1.msra.mxu0 0.0
        %1697 = vmatprep.subr.mxu0 0.0
        %1698 = vmatpush1.msra.mxu0 0.0
        %1699 = vmatprep.subr.mxu0 0.0
        %1700 = vmatpush1.msra.mxu0 0.0
        %1701 = vmatprep.subr.mxu0 0.0
        %1702 = vmatpush1.msra.mxu0 0.0
        %1703 = vmatprep.subr.mxu0 0.0
        %1704 = vmatpush1.msra.mxu0 0.0
        %1705 = vmatprep.subr.mxu0 0.0
        %1706 = vmatpush1.msra.mxu0 0.0
        %1707 = vmatprep.subr.mxu0 0.0
        %1708 = vmatpush1.msra.mxu0 0.0
        %1709 = vmatprep.subr.mxu0 0.0
        %1710 = vmatpush1.msra.mxu0 0.0
        %1711 = vmatprep.subr.mxu0 0.0
        %1712 = vmatpush1.msra.mxu0 0.0
        %1713 = vmatprep.subr.mxu0 0.0
        %1714 = vmatpush1.msra.mxu0 0.0
        %1715 = vmatprep.subr.mxu0 0.0
        %1716 = vmatpush1.msra.mxu0 0.0
        %1717 = vmatprep.subr.mxu0 0.0
        %1718 = vmatpush1.msra.mxu0 0.0
        %1719 = vmatprep.subr.mxu0 0.0
        %1720 = vmatpush1.msra.mxu0 0.0
        %1721 = vmatprep.subr.mxu0 0.0
        %1722 = vmatpush1.msra.mxu0 0.0
        %1723 = vmatprep.subr.mxu0 0.0
        %1724 = vmatpush1.msra.mxu0 0.0
        %1725 = vmatprep.subr.mxu0 0.0
        %1726 = vmatpush1.msra.mxu0 0.0
        %1727 = vmatprep.subr.mxu0 0.0
        %1728 = vmatpush1.msra.mxu0 0.0
        %1729 = vmatprep.subr.mxu0 0.0
        %1730 = vmatpush1.msra.mxu0 0.0
        %1731 = vmatprep.subr.mxu0 0.0
        %1732 = vmatpush1.msra.mxu0 0.0
        %1733 = vmatprep.subr.mxu0 0.0
        %1734 = vmatpush1.msra.mxu0 0.0
        %1735 = vmatprep.subr.mxu0 0.0
        %1736 = vmatpush1.msra.mxu0 0.0
        %1737 = vmatprep.subr.mxu0 0.0
        %1738 = vmatpush1.msra.mxu0 0.0
        %1739 = vmatprep.subr.mxu0 0.0
        %1740 = vmatpush1.msra.mxu0 0.0
        %1741 = vmatprep.subr.mxu0 0.0
        %1742 = vmatpush1.msra.mxu0 0.0
        %1743 = vmatprep.subr.mxu0 0.0
        %1744 = vmatpush1.msra.mxu0 0.0
        %1745 = vmatprep.subr.mxu0 0.0
        %1746 = vmatpush1.msra.mxu0 0.0
        %1747 = vmatprep.subr.mxu0 0.0
        %1748 = vmatpush1.msra.mxu0 0.0
        %1749 = vmatprep.subr.mxu0 0.0
        %1750 = vmatpush1.msra.mxu0 0.0
        %1751 = vmatprep.subr.mxu0 0.0
        %1752 = vmatpush1.msra.mxu0 0.0
        %1753 = vmatprep.mubr.f32.mxu0 0.0
        %1754 = vmatmul.mubr.f32.gmra.mrb[0].mxu0 %v1687
        %v1755 = vpop.f32.mrb[0].mxu0
        %v1756 = vadd.f32 0.0, %v1755
        %v1757 = vpop.f32.mrb[0].mxu0
        %1758 = vdwg.mxu0
        %1759 = vrot.lane.b32.xlu0 %v573, 88
        %v1760 = vpop.permute.xlu0 %1759
        %1761 = vrot.lane.b32.xlu0 %v578, 88
        %v1762 = vpop.permute.xlu0 %1761
        %v1766 = vsel %vm898, %v1584, 0
        %1768 = vmatprep.subr.mxu0 0.0
        %1769 = vmatpush1.msra.mxu0 %v1760
        %1770 = vmatprep.subr.mxu0 0.0
        %1771 = vmatpush1.msra.mxu0 %v1762
        %1772 = vmatprep.subr.mxu0 0.0
        %1773 = vmatpush1.msra.mxu0 0.0
        %1774 = vmatprep.subr.mxu0 0.0
        %1775 = vmatpush1.msra.mxu0 0.0
        %1776 = vmatprep.subr.mxu0 0.0
        %1777 = vmatpush1.msra.mxu0 0.0
        %1778 = vmatprep.subr.mxu0 0.0
        %1779 = vmatpush1.msra.mxu0 0.0
        %1780 = vmatprep.subr.mxu0 0.0
        %1781 = vmatpush1.msra.mxu0 0.0
        %1782 = vmatprep.subr.mxu0 0.0
        %1783 = vmatpush1.msra.mxu0 0.0
        %1784 = vmatprep.subr.mxu0 0.0
        %1785 = vmatpush1.msra.mxu0 0.0
        %1786 = vmatprep.subr.mxu0 0.0
        %1787 = vmatpush1.msra.mxu0 0.0
        %1788 = vmatprep.subr.mxu0 0.0
        %1789 = vmatpush1.msra.mxu0 0.0
        %1790 = vmatprep.subr.mxu0 0.0
        %1791 = vmatpush1.msra.mxu0 0.0
        %1792 = vmatprep.subr.mxu0 0.0
        %1793 = vmatpush1.msra.mxu0 0.0
        %1794 = vmatprep.subr.mxu0 0.0
        %1795 = vmatpush1.msra.mxu0 0.0
        %1796 = vmatprep.subr.mxu0 0.0
        %1797 = vmatpush1.msra.mxu0 0.0
        %1798 = vmatprep.subr.mxu0 0.0
        %1799 = vmatpush1.msra.mxu0 0.0
        %1800 = vmatprep.subr.mxu0 0.0
        %1801 = vmatpush1.msra.mxu0 0.0
        %1802 = vmatprep.subr.mxu0 0.0
        %1803 = vmatpush1.msra.mxu0 0.0
        %1804 = vmatprep.subr.mxu0 0.0
        %1805 = vmatpush1.msra.mxu0 0.0
        %1806 = vmatprep.subr.mxu0 0.0
        %1807 = vmatpush1.msra.mxu0 0.0
        %1808 = vmatprep.subr.mxu0 0.0
        %1809 = vmatpush1.msra.mxu0 0.0
        %1810 = vmatprep.subr.mxu0 0.0
        %1811 = vmatpush1.msra.mxu0 0.0
        %1812 = vmatprep.subr.mxu0 0.0
        %1813 = vmatpush1.msra.mxu0 0.0
        %1814 = vmatprep.subr.mxu0 0.0
        %1815 = vmatpush1.msra.mxu0 0.0
        %1816 = vmatprep.subr.mxu0 0.0
        %1817 = vmatpush1.msra.mxu0 0.0
        %1818 = vmatprep.subr.mxu0 0.0
        %1819 = vmatpush1.msra.mxu0 0.0
        %1820 = vmatprep.subr.mxu0 0.0
        %1821 = vmatpush1.msra.mxu0 0.0
        %1822 = vmatprep.subr.mxu0 0.0
        %1823 = vmatpush1.msra.mxu0 0.0
        %1824 = vmatprep.subr.mxu0 0.0
        %1825 = vmatpush1.msra.mxu0 0.0
        %1826 = vmatprep.subr.mxu0 0.0
        %1827 = vmatpush1.msra.mxu0 0.0
        %1828 = vmatprep.subr.mxu0 0.0
        %1829 = vmatpush1.msra.mxu0 0.0
        %1830 = vmatprep.subr.mxu0 0.0
        %1831 = vmatpush1.msra.mxu0 0.0
        %1832 = vmatprep.mubr.f32.mxu0 0.0
        %1833 = vmatmul.mubr.f32.gmra.mrb[0].mxu0 %v1766
        %v1834 = vpop.f32.mrb[0].mxu0
        %v1835 = vadd.f32 %v1680, %v1834
        %v1836 = vpop.f32.mrb[0].mxu0
        %1837 = vdwg.mxu0
        %1838 = vrot.lane.b32.xlu0 %v583, 88
        %v1839 = vpop.permute.xlu0 %1838
        %1840 = vrot.lane.b32.xlu0 %v588, 88
        %v1841 = vpop.permute.xlu0 %1840
        %v1845 = vsel %vm898, %v1586, 0
        %1847 = vmatprep.subr.mxu0 0.0
        %1848 = vmatpush1.msra.mxu0 %v1839
        %1849 = vmatprep.subr.mxu0 0.0
        %1850 = vmatpush1.msra.mxu0 %v1841
        %1851 = vmatprep.subr.mxu0 0.0
        %1852 = vmatpush1.msra.mxu0 0.0
        %1853 = vmatprep.subr.mxu0 0.0
        %1854 = vmatpush1.msra.mxu0 0.0
        %1855 = vmatprep.subr.mxu0 0.0
        %1856 = vmatpush1.msra.mxu0 0.0
        %1857 = vmatprep.subr.mxu0 0.0
        %1858 = vmatpush1.msra.mxu0 0.0
        %1859 = vmatprep.subr.mxu0 0.0
        %1860 = vmatpush1.msra.mxu0 0.0
        %1861 = vmatprep.subr.mxu0 0.0
        %1862 = vmatpush1.msra.mxu0 0.0
        %1863 = vmatprep.subr.mxu0 0.0
        %1864 = vmatpush1.msra.mxu0 0.0
        %1865 = vmatprep.subr.mxu0 0.0
        %1866 = vmatpush1.msra.mxu0 0.0
        %1867 = vmatprep.subr.mxu0 0.0
        %1868 = vmatpush1.msra.mxu0 0.0
        %1869 = vmatprep.subr.mxu0 0.0
        %1870 = vmatpush1.msra.mxu0 0.0
        %1871 = vmatprep.subr.mxu0 0.0
        %1872 = vmatpush1.msra.mxu0 0.0
        %1873 = vmatprep.subr.mxu0 0.0
        %1874 = vmatpush1.msra.mxu0 0.0
        %1875 = vmatprep.subr.mxu0 0.0
        %1876 = vmatpush1.msra.mxu0 0.0
        %1877 = vmatprep.subr.mxu0 0.0
        %1878 = vmatpush1.msra.mxu0 0.0
        %1879 = vmatprep.subr.mxu0 0.0
        %1880 = vmatpush1.msra.mxu0 0.0
        %1881 = vmatprep.subr.mxu0 0.0
        %1882 = vmatpush1.msra.mxu0 0.0
        %1883 = vmatprep.subr.mxu0 0.0
        %1884 = vmatpush1.msra.mxu0 0.0
        %1885 = vmatprep.subr.mxu0 0.0
        %1886 = vmatpush1.msra.mxu0 0.0
        %1887 = vmatprep.subr.mxu0 0.0
        %1888 = vmatpush1.msra.mxu0 0.0
        %1889 = vmatprep.subr.mxu0 0.0
        %1890 = vmatpush1.msra.mxu0 0.0
        %1891 = vmatprep.subr.mxu0 0.0
        %1892 = vmatpush1.msra.mxu0 0.0
        %1893 = vmatprep.subr.mxu0 0.0
        %1894 = vmatpush1.msra.mxu0 0.0
        %1895 = vmatprep.subr.mxu0 0.0
        %1896 = vmatpush1.msra.mxu0 0.0
        %1897 = vmatprep.subr.mxu0 0.0
        %1898 = vmatpush1.msra.mxu0 0.0
        %1899 = vmatprep.subr.mxu0 0.0
        %1900 = vmatpush1.msra.mxu0 0.0
        %1901 = vmatprep.subr.mxu0 0.0
        %1902 = vmatpush1.msra.mxu0 0.0
        %1903 = vmatprep.subr.mxu0 0.0
        %1904 = vmatpush1.msra.mxu0 0.0
        %1905 = vmatprep.subr.mxu0 0.0
        %1906 = vmatpush1.msra.mxu0 0.0
        %1907 = vmatprep.subr.mxu0 0.0
        %1908 = vmatpush1.msra.mxu0 0.0
        %1909 = vmatprep.subr.mxu0 0.0
        %1910 = vmatpush1.msra.mxu0 0.0
        %1911 = vmatprep.mubr.f32.mxu0 0.0
        %1912 = vmatmul.mubr.f32.gmra.mrb[0].mxu0 %v1845
        %v1913 = vpop.f32.mrb[0].mxu0
        %v1914 = vadd.f32 %v1756, %v1913
        %v1915 = vpop.f32.mrb[0].mxu0
        %1916 = vdwg.mxu0
        %v1917 = vrcp.pop %v1605
        %v1918 = vmul.f32 %v1835, %v1917
        %v1919 = vrcp.pop %v1606
        %v1920 = vmul.f32 %v1914, %v1919
        %1923 = vrot.lane.b32.xlu0 %v1918, 8
        %v1924 = vpop.permute.xlu0 %1923
        %1925 = vrot.lane.b32.xlu0 %v1920, 8
        %v1926 = vpop.permute.xlu0 %1925
        %vm1929 = vcmask 130112
        %1930 = vst.msk [vmem:[#allocation2] sm:$0xff] %vm1929, %v1924
        %1931 = vst.msk [vmem:[#allocation2 + $0x8] sm:$0xff] %vm1929, %v1926
        %1932 = vrot.lane.b32.xlu0 %v482, 112
        %v1933 = vpop.permute.xlu0 %1932
        %1934 = vrot.lane.b32.xlu0 %v573, 112
        %v1935 = vpop.permute.xlu0 %1934
        %1936 = vrot.lane.b32.xlu0 %v578, 112
        %v1937 = vpop.permute.xlu0 %1936
        %v1938 = vsel %vm591, %v1933, 0
        %v1940 = vsel %vm591, %v1935, 0
        %v1942 = vsel %vm591, %v1937, 0
        %1944 = vmatprep.subr.mxu0 0.0
        %1945 = vmatpush1.xpose.msra.mxu0 %v1940
        %1946 = vmatprep.subr.mxu0 0.0
        %1947 = vmatpush1.xpose.msra.mxu0 %v1942
        %1948 = vmatprep.subr.mxu0 0.0
        %1949 = vmatpush1.xpose.msra.mxu0 0.0
        %1950 = vmatprep.subr.mxu0 0.0
        %1951 = vmatpush1.xpose.msra.mxu0 0.0
        %1952 = vmatprep.subr.mxu0 0.0
        %1953 = vmatpush1.xpose.msra.mxu0 0.0
        %1954 = vmatprep.subr.mxu0 0.0
        %1955 = vmatpush1.xpose.msra.mxu0 0.0
        %1956 = vmatprep.subr.mxu0 0.0
        %1957 = vmatpush1.xpose.msra.mxu0 0.0
        %1958 = vmatprep.subr.mxu0 0.0
        %1959 = vmatpush1.xpose.msra.mxu0 0.0
        %1960 = vmatprep.subr.mxu0 0.0
        %1961 = vmatpush1.xpose.msra.mxu0 0.0
        %1962 = vmatprep.subr.mxu0 0.0
        %1963 = vmatpush1.xpose.msra.mxu0 0.0
        %1964 = vmatprep.subr.mxu0 0.0
        %1965 = vmatpush1.xpose.msra.mxu0 0.0
        %1966 = vmatprep.subr.mxu0 0.0
        %1967 = vmatpush1.xpose.msra.mxu0 0.0
        %1968 = vmatprep.subr.mxu0 0.0
        %1969 = vmatpush1.xpose.msra.mxu0 0.0
        %1970 = vmatprep.subr.mxu0 0.0
        %1971 = vmatpush1.xpose.msra.mxu0 0.0
        %1972 = vmatprep.subr.mxu0 0.0
        %1973 = vmatpush1.xpose.msra.mxu0 0.0
        %1974 = vmatprep.subr.mxu0 0.0
        %1975 = vmatpush1.xpose.msra.mxu0 0.0
        %1976 = vmatprep.subr.mxu0 0.0
        %1977 = vmatpush1.xpose.msra.mxu0 0.0
        %1978 = vmatprep.subr.mxu0 0.0
        %1979 = vmatpush1.xpose.msra.mxu0 0.0
        %1980 = vmatprep.subr.mxu0 0.0
        %1981 = vmatpush1.xpose.msra.mxu0 0.0
        %1982 = vmatprep.subr.mxu0 0.0
        %1983 = vmatpush1.xpose.msra.mxu0 0.0
        %1984 = vmatprep.subr.mxu0 0.0
        %1985 = vmatpush1.xpose.msra.mxu0 0.0
        %1986 = vmatprep.subr.mxu0 0.0
        %1987 = vmatpush1.xpose.msra.mxu0 0.0
        %1988 = vmatprep.subr.mxu0 0.0
        %1989 = vmatpush1.xpose.msra.mxu0 0.0
        %1990 = vmatprep.subr.mxu0 0.0
        %1991 = vmatpush1.xpose.msra.mxu0 0.0
        %1992 = vmatprep.subr.mxu0 0.0
        %1993 = vmatpush1.xpose.msra.mxu0 0.0
        %1994 = vmatprep.subr.mxu0 0.0
        %1995 = vmatpush1.xpose.msra.mxu0 0.0
        %1996 = vmatprep.subr.mxu0 0.0
        %1997 = vmatpush1.xpose.msra.mxu0 0.0
        %1998 = vmatprep.subr.mxu0 0.0
        %1999 = vmatpush1.xpose.msra.mxu0 0.0
        %2000 = vmatprep.subr.mxu0 0.0
        %2001 = vmatpush1.xpose.msra.mxu0 0.0
        %2002 = vmatprep.subr.mxu0 0.0
        %2003 = vmatpush1.xpose.msra.mxu0 0.0
        %2004 = vmatprep.subr.mxu0 0.0
        %2005 = vmatpush1.xpose.msra.mxu0 0.0
        %2006 = vmatprep.subr.mxu0 0.0
        %2007 = vmatpush1.xpose.msra.mxu0 0.0
        %2008 = vmatprep.mubr.f32.mxu0 0.0
        %2009 = vmatmul.mubr.f32.gmra.mrb[0].mxu0 %v1938
        %v2010 = vpop.f32.mrb[0].mxu0
        %v2011 = vadd.f32 0.0, %v2010
        %v2012 = vpop.f32.mrb[0].mxu0
        %2013 = vdwg.mxu0
        %2014 = vrot.lane.b32.xlu0 %v487, 112
        %v2015 = vpop.permute.xlu0 %2014
        %2016 = vrot.lane.b32.xlu0 %v583, 112
        %v2017 = vpop.permute.xlu0 %2016
        %2018 = vrot.lane.b32.xlu0 %v588, 112
        %v2019 = vpop.permute.xlu0 %2018
        %v2020 = vsel %vm591, %v2015, 0
        %v2022 = vsel %vm591, %v2017, 0
        %v2024 = vsel %vm591, %v2019, 0
        %2026 = vmatprep.subr.mxu0 0.0
        %2027 = vmatpush1.xpose.msra.mxu0 %v2022
        %2028 = vmatprep.subr.mxu0 0.0
        %2029 = vmatpush1.xpose.msra.mxu0 %v2024
        %2030 = vmatprep.subr.mxu0 0.0
        %2031 = vmatpush1.xpose.msra.mxu0 0.0
        %2032 = vmatprep.subr.mxu0 0.0
        %2033 = vmatpush1.xpose.msra.mxu0 0.0
        %2034 = vmatprep.subr.mxu0 0.0
        %2035 = vmatpush1.xpose.msra.mxu0 0.0
        %2036 = vmatprep.subr.mxu0 0.0
        %2037 = vmatpush1.xpose.msra.mxu0 0.0
        %2038 = vmatprep.subr.mxu0 0.0
        %2039 = vmatpush1.xpose.msra.mxu0 0.0
        %2040 = vmatprep.subr.mxu0 0.0
        %2041 = vmatpush1.xpose.msra.mxu0 0.0
        %2042 = vmatprep.subr.mxu0 0.0
        %2043 = vmatpush1.xpose.msra.mxu0 0.0
        %2044 = vmatprep.subr.mxu0 0.0
        %2045 = vmatpush1.xpose.msra.mxu0 0.0
        %2046 = vmatprep.subr.mxu0 0.0
        %2047 = vmatpush1.xpose.msra.mxu0 0.0
        %2048 = vmatprep.subr.mxu0 0.0
        %2049 = vmatpush1.xpose.msra.mxu0 0.0
        %2050 = vmatprep.subr.mxu0 0.0
        %2051 = vmatpush1.xpose.msra.mxu0 0.0
        %2052 = vmatprep.subr.mxu0 0.0
        %2053 = vmatpush1.xpose.msra.mxu0 0.0
        %2054 = vmatprep.subr.mxu0 0.0
        %2055 = vmatpush1.xpose.msra.mxu0 0.0
        %2056 = vmatprep.subr.mxu0 0.0
        %2057 = vmatpush1.xpose.msra.mxu0 0.0
        %2058 = vmatprep.subr.mxu0 0.0
        %2059 = vmatpush1.xpose.msra.mxu0 0.0
        %2060 = vmatprep.subr.mxu0 0.0
        %2061 = vmatpush1.xpose.msra.mxu0 0.0
        %2062 = vmatprep.subr.mxu0 0.0
        %2063 = vmatpush1.xpose.msra.mxu0 0.0
        %2064 = vmatprep.subr.mxu0 0.0
        %2065 = vmatpush1.xpose.msra.mxu0 0.0
        %2066 = vmatprep.subr.mxu0 0.0
        %2067 = vmatpush1.xpose.msra.mxu0 0.0
        %2068 = vmatprep.subr.mxu0 0.0
        %2069 = vmatpush1.xpose.msra.mxu0 0.0
        %2070 = vmatprep.subr.mxu0 0.0
        %2071 = vmatpush1.xpose.msra.mxu0 0.0
        %2072 = vmatprep.subr.mxu0 0.0
        %2073 = vmatpush1.xpose.msra.mxu0 0.0
        %2074 = vmatprep.subr.mxu0 0.0
        %2075 = vmatpush1.xpose.msra.mxu0 0.0
        %2076 = vmatprep.subr.mxu0 0.0
        %2077 = vmatpush1.xpose.msra.mxu0 0.0
        %2078 = vmatprep.subr.mxu0 0.0
        %2079 = vmatpush1.xpose.msra.mxu0 0.0
        %2080 = vmatprep.subr.mxu0 0.0
        %2081 = vmatpush1.xpose.msra.mxu0 0.0
        %2082 = vmatprep.subr.mxu0 0.0
        %2083 = vmatpush1.xpose.msra.mxu0 0.0
        %2084 = vmatprep.subr.mxu0 0.0
        %2085 = vmatpush1.xpose.msra.mxu0 0.0
        %2086 = vmatprep.subr.mxu0 0.0
        %2087 = vmatpush1.xpose.msra.mxu0 0.0
        %2088 = vmatprep.subr.mxu0 0.0
        %2089 = vmatpush1.xpose.msra.mxu0 0.0
        %2090 = vmatprep.mubr.f32.mxu0 0.0
        %2091 = vmatmul.mubr.f32.gmra.mrb[0].mxu0 %v2020
        %v2092 = vpop.f32.mrb[0].mxu0
        %v2093 = vadd.f32 0.0, %v2092
        %v2094 = vpop.f32.mrb[0].mxu0
        %2095 = vdwg.mxu0
        %2096 = vrot.lane.b32.xlu0 %v482, 80
        %v2097 = vpop.permute.xlu0 %2096
        %v2098 = vsel %vm591, %v2097, 0
        %2100 = vmatprep.subr.mxu0 0.0
        %2101 = vmatpush1.xpose.msra.mxu0 %v2098
        %2102 = vmatprep.subr.mxu0 0.0
        %2103 = vmatpush1.xpose.msra.mxu0 0.0
        %2104 = vmatprep.subr.mxu0 0.0
        %2105 = vmatpush1.xpose.msra.mxu0 0.0
        %2106 = vmatprep.subr.mxu0 0.0
        %2107 = vmatpush1.xpose.msra.mxu0 0.0
        %2108 = vmatprep.subr.mxu0 0.0
        %2109 = vmatpush1.xpose.msra.mxu0 0.0
        %2110 = vmatprep.subr.mxu0 0.0
        %2111 = vmatpush1.xpose.msra.mxu0 0.0
        %2112 = vmatprep.subr.mxu0 0.0
        %2113 = vmatpush1.xpose.msra.mxu0 0.0
        %2114 = vmatprep.subr.mxu0 0.0
        %2115 = vmatpush1.xpose.msra.mxu0 0.0
        %2116 = vmatprep.subr.mxu0 0.0
        %2117 = vmatpush1.xpose.msra.mxu0 0.0
        %2118 = vmatprep.subr.mxu0 0.0
        %2119 = vmatpush1.xpose.msra.mxu0 0.0
        %2120 = vmatprep.subr.mxu0 0.0
        %2121 = vmatpush1.xpose.msra.mxu0 0.0
        %2122 = vmatprep.subr.mxu0 0.0
        %2123 = vmatpush1.xpose.msra.mxu0 0.0
        %2124 = vmatprep.subr.mxu0 0.0
        %2125 = vmatpush1.xpose.msra.mxu0 0.0
        %2126 = vmatprep.subr.mxu0 0.0
        %2127 = vmatpush1.xpose.msra.mxu0 0.0
        %2128 = vmatprep.subr.mxu0 0.0
        %2129 = vmatpush1.xpose.msra.mxu0 0.0
        %2130 = vmatprep.subr.mxu0 0.0
        %2131 = vmatpush1.xpose.msra.mxu0 0.0
        %2132 = vmatprep.subr.mxu0 0.0
        %2133 = vmatpush1.xpose.msra.mxu0 0.0
        %2134 = vmatprep.subr.mxu0 0.0
        %2135 = vmatpush1.xpose.msra.mxu0 0.0
        %2136 = vmatprep.subr.mxu0 0.0
        %2137 = vmatpush1.xpose.msra.mxu0 0.0
        %2138 = vmatprep.subr.mxu0 0.0
        %2139 = vmatpush1.xpose.msra.mxu0 0.0
        %2140 = vmatprep.subr.mxu0 0.0
        %2141 = vmatpush1.xpose.msra.mxu0 0.0
        %2142 = vmatprep.subr.mxu0 0.0
        %2143 = vmatpush1.xpose.msra.mxu0 0.0
        %2144 = vmatprep.subr.mxu0 0.0
        %2145 = vmatpush1.xpose.msra.mxu0 0.0
        %2146 = vmatprep.subr.mxu0 0.0
        %2147 = vmatpush1.xpose.msra.mxu0 0.0
        %2148 = vmatprep.subr.mxu0 0.0
        %2149 = vmatpush1.xpose.msra.mxu0 0.0
        %2150 = vmatprep.subr.mxu0 0.0
        %2151 = vmatpush1.xpose.msra.mxu0 0.0
        %2152 = vmatprep.subr.mxu0 0.0
        %2153 = vmatpush1.xpose.msra.mxu0 0.0
        %2154 = vmatprep.subr.mxu0 0.0
        %2155 = vmatpush1.xpose.msra.mxu0 0.0
        %2156 = vmatprep.subr.mxu0 0.0
        %2157 = vmatpush1.xpose.msra.mxu0 0.0
        %2158 = vmatprep.subr.mxu0 0.0
        %2159 = vmatpush1.xpose.msra.mxu0 0.0
        %2160 = vmatprep.subr.mxu0 0.0
        %2161 = vmatpush1.xpose.msra.mxu0 0.0
        %2162 = vmatprep.subr.mxu0 0.0
        %2163 = vmatpush1.xpose.msra.mxu0 0.0
        %2164 = vmatprep.mubr.f32.mxu0 0.0
        %2165 = vmatmul.mubr.f32.gmra.mrb[0].mxu0 %v1938
        %v2166 = vpop.f32.mrb[0].mxu0
        %v2167 = vadd.f32 0.0, %v2166
        %v2168 = vpop.f32.mrb[0].mxu0
        %2169 = vdwg.mxu0
        %2170 = vrot.lane.b32.xlu0 %v487, 80
        %v2171 = vpop.permute.xlu0 %2170
        %v2172 = vsel %vm591, %v2171, 0
        %2174 = vmatprep.subr.mxu0 0.0
        %2175 = vmatpush1.xpose.msra.mxu0 %v2172
        %2176 = vmatprep.subr.mxu0 0.0
        %2177 = vmatpush1.xpose.msra.mxu0 0.0
        %2178 = vmatprep.subr.mxu0 0.0
        %2179 = vmatpush1.xpose.msra.mxu0 0.0
        %2180 = vmatprep.subr.mxu0 0.0
        %2181 = vmatpush1.xpose.msra.mxu0 0.0
        %2182 = vmatprep.subr.mxu0 0.0
        %2183 = vmatpush1.xpose.msra.mxu0 0.0
        %2184 = vmatprep.subr.mxu0 0.0
        %2185 = vmatpush1.xpose.msra.mxu0 0.0
        %2186 = vmatprep.subr.mxu0 0.0
        %2187 = vmatpush1.xpose.msra.mxu0 0.0
        %2188 = vmatprep.subr.mxu0 0.0
        %2189 = vmatpush1.xpose.msra.mxu0 0.0
        %2190 = vmatprep.subr.mxu0 0.0
        %2191 = vmatpush1.xpose.msra.mxu0 0.0
        %2192 = vmatprep.subr.mxu0 0.0
        %2193 = vmatpush1.xpose.msra.mxu0 0.0
        %2194 = vmatprep.subr.mxu0 0.0
        %2195 = vmatpush1.xpose.msra.mxu0 0.0
        %2196 = vmatprep.subr.mxu0 0.0
        %2197 = vmatpush1.xpose.msra.mxu0 0.0
        %2198 = vmatprep.subr.mxu0 0.0
        %2199 = vmatpush1.xpose.msra.mxu0 0.0
        %2200 = vmatprep.subr.mxu0 0.0
        %2201 = vmatpush1.xpose.msra.mxu0 0.0
        %2202 = vmatprep.subr.mxu0 0.0
        %2203 = vmatpush1.xpose.msra.mxu0 0.0
        %2204 = vmatprep.subr.mxu0 0.0
        %2205 = vmatpush1.xpose.msra.mxu0 0.0
        %2206 = vmatprep.subr.mxu0 0.0
        %2207 = vmatpush1.xpose.msra.mxu0 0.0
        %2208 = vmatprep.subr.mxu0 0.0
        %2209 = vmatpush1.xpose.msra.mxu0 0.0
        %2210 = vmatprep.subr.mxu0 0.0
        %2211 = vmatpush1.xpose.msra.mxu0 0.0
        %2212 = vmatprep.subr.mxu0 0.0
        %2213 = vmatpush1.xpose.msra.mxu0 0.0
        %2214 = vmatprep.subr.mxu0 0.0
        %2215 = vmatpush1.xpose.msra.mxu0 0.0
        %2216 = vmatprep.subr.mxu0 0.0
        %2217 = vmatpush1.xpose.msra.mxu0 0.0
        %2218 = vmatprep.subr.mxu0 0.0
        %2219 = vmatpush1.xpose.msra.mxu0 0.0
        %2220 = vmatprep.subr.mxu0 0.0
        %2221 = vmatpush1.xpose.msra.mxu0 0.0
        %2222 = vmatprep.subr.mxu0 0.0
        %2223 = vmatpush1.xpose.msra.mxu0 0.0
        %2224 = vmatprep.subr.mxu0 0.0
        %2225 = vmatpush1.xpose.msra.mxu0 0.0
        %2226 = vmatprep.subr.mxu0 0.0
        %2227 = vmatpush1.xpose.msra.mxu0 0.0
        %2228 = vmatprep.subr.mxu0 0.0
        %2229 = vmatpush1.xpose.msra.mxu0 0.0
        %2230 = vmatprep.subr.mxu0 0.0
        %2231 = vmatpush1.xpose.msra.mxu0 0.0
        %2232 = vmatprep.subr.mxu0 0.0
        %2233 = vmatpush1.xpose.msra.mxu0 0.0
        %2234 = vmatprep.subr.mxu0 0.0
        %2235 = vmatpush1.xpose.msra.mxu0 0.0
        %2236 = vmatprep.subr.mxu0 0.0
        %2237 = vmatpush1.xpose.msra.mxu0 0.0
        %2238 = vmatprep.mubr.f32.mxu0 0.0
        %2239 = vmatmul.mubr.f32.gmra.mrb[0].mxu0 %v2020
        %v2240 = vpop.f32.mrb[0].mxu0
        %v2241 = vadd.f32 0.0, %v2240
        %v2242 = vpop.f32.mrb[0].mxu0
        %2243 = vdwg.mxu0
        %v2244 = vsel %vm898, %v2011, -inf
        %2245 = vmax.xlane.f32.xlu0 %v2244
        %v2246 = vpop.xlane.xlu0 %2245
        %v2247 = vsel %vm898, %v2093, -inf
        %2248 = vmax.xlane.f32.xlu0 %v2247
        %v2249 = vpop.xlane.xlu0 %2248
        %v2250 = vsel %vm591, %v2167, -inf
        %2251 = vmax.xlane.f32.xlu0 %v2250
        %v2252 = vpop.xlane.xlu0 %2251
        %v2253 = vsel %vm591, %v2241, -inf
        %2254 = vmax.xlane.f32.xlu0 %v2253
        %v2255 = vpop.xlane.xlu0 %2254
        %v2256 = vmax.f32 %v2246, %v2252
        %v2257 = vmax.f32 %v2249, %v2255
        %v2258 = vsub.f32 %v2011, %v2256
        %v2259 = vsub.f32 %v2093, %v2257
        %v2260 = vmul.f32 %v2258, 1.442695
        %v2261 = vpow.pop %v2260
        %v2262 = vmul.f32 %v2259, 1.442695
        %v2263 = vpow.pop %v2262
        %v2264 = vsub.f32 %v2167, %v2256
        %v2265 = vsub.f32 %v2241, %v2257
        %v2266 = vmul.f32 %v2264, 1.442695
        %v2267 = vpow.pop %v2266
        %v2268 = vmul.f32 %v2265, 1.442695
        %v2269 = vpow.pop %v2268
        %v2270 = vsel %vm898, %v2261, 0.0
        %2271 = vadd.xlane.f32.xlu0 %v2270
        %v2272 = vpop.xlane.xlu0 %2271
        %v2273 = vsel %vm898, %v2263, 0.0
        %2274 = vadd.xlane.f32.xlu0 %v2273
        %v2275 = vpop.xlane.xlu0 %2274
        %v2276 = vsel %vm591, %v2267, 0.0
        %2277 = vadd.xlane.f32.xlu0 %v2276
        %v2278 = vpop.xlane.xlu0 %2277
        %v2279 = vsel %vm591, %v2269, 0.0
        %2280 = vadd.xlane.f32.xlu0 %v2279
        %v2281 = vpop.xlane.xlu0 %2280
        %v2282 = vadd.f32 %v2272, %v2278
        %v2283 = vadd.f32 %v2275, %v2281
        %2284 = vrot.lane.b32.xlu0 %v482, 48
        %v2285 = vpop.permute.xlu0 %2284
        %v2288 = vsel %vm591, %v2267, 0
        %2290 = vmatprep.subr.mxu0 0.0
        %2291 = vmatpush1.msra.mxu0 %v2285
        %2292 = vmatprep.subr.mxu0 0.0
        %2293 = vmatpush1.msra.mxu0 0.0
        %2294 = vmatprep.subr.mxu0 0.0
        %2295 = vmatpush1.msra.mxu0 0.0
        %2296 = vmatprep.subr.mxu0 0.0
        %2297 = vmatpush1.msra.mxu0 0.0
        %2298 = vmatprep.subr.mxu0 0.0
        %2299 = vmatpush1.msra.mxu0 0.0
        %2300 = vmatprep.subr.mxu0 0.0
        %2301 = vmatpush1.msra.mxu0 0.0
        %2302 = vmatprep.subr.mxu0 0.0
        %2303 = vmatpush1.msra.mxu0 0.0
        %2304 = vmatprep.subr.mxu0 0.0
        %2305 = vmatpush1.msra.mxu0 0.0
        %2306 = vmatprep.subr.mxu0 0.0
        %2307 = vmatpush1.msra.mxu0 0.0
        %2308 = vmatprep.subr.mxu0 0.0
        %2309 = vmatpush1.msra.mxu0 0.0
        %2310 = vmatprep.subr.mxu0 0.0
        %2311 = vmatpush1.msra.mxu0 0.0
        %2312 = vmatprep.subr.mxu0 0.0
        %2313 = vmatpush1.msra.mxu0 0.0
        %2314 = vmatprep.subr.mxu0 0.0
        %2315 = vmatpush1.msra.mxu0 0.0
        %2316 = vmatprep.subr.mxu0 0.0
        %2317 = vmatpush1.msra.mxu0 0.0
        %2318 = vmatprep.subr.mxu0 0.0
        %2319 = vmatpush1.msra.mxu0 0.0
        %2320 = vmatprep.subr.mxu0 0.0
        %2321 = vmatpush1.msra.mxu0 0.0
        %2322 = vmatprep.subr.mxu0 0.0
        %2323 = vmatpush1.msra.mxu0 0.0
        %2324 = vmatprep.subr.mxu0 0.0
        %2325 = vmatpush1.msra.mxu0 0.0
        %2326 = vmatprep.subr.mxu0 0.0
        %2327 = vmatpush1.msra.mxu0 0.0
        %2328 = vmatprep.subr.mxu0 0.0
        %2329 = vmatpush1.msra.mxu0 0.0
        %2330 = vmatprep.subr.mxu0 0.0
        %2331 = vmatpush1.msra.mxu0 0.0
        %2332 = vmatprep.subr.mxu0 0.0
        %2333 = vmatpush1.msra.mxu0 0.0
        %2334 = vmatprep.subr.mxu0 0.0
        %2335 = vmatpush1.msra.mxu0 0.0
        %2336 = vmatprep.subr.mxu0 0.0
        %2337 = vmatpush1.msra.mxu0 0.0
        %2338 = vmatprep.subr.mxu0 0.0
        %2339 = vmatpush1.msra.mxu0 0.0
        %2340 = vmatprep.subr.mxu0 0.0
        %2341 = vmatpush1.msra.mxu0 0.0
        %2342 = vmatprep.subr.mxu0 0.0
        %2343 = vmatpush1.msra.mxu0 0.0
        %2344 = vmatprep.subr.mxu0 0.0
        %2345 = vmatpush1.msra.mxu0 0.0
        %2346 = vmatprep.subr.mxu0 0.0
        %2347 = vmatpush1.msra.mxu0 0.0
        %2348 = vmatprep.subr.mxu0 0.0
        %2349 = vmatpush1.msra.mxu0 0.0
        %2350 = vmatprep.subr.mxu0 0.0
        %2351 = vmatpush1.msra.mxu0 0.0
        %2352 = vmatprep.subr.mxu0 0.0
        %2353 = vmatpush1.msra.mxu0 0.0
        %2354 = vmatprep.mubr.f32.mxu0 0.0
        %2355 = vmatmul.mubr.f32.gmra.mrb[0].mxu0 %v2288
        %v2356 = vpop.f32.mrb[0].mxu0
        %v2357 = vadd.f32 0.0, %v2356
        %v2358 = vpop.f32.mrb[0].mxu0
        %2359 = vdwg.mxu0
        %2360 = vrot.lane.b32.xlu0 %v487, 48
        %v2361 = vpop.permute.xlu0 %2360
        %v2364 = vsel %vm591, %v2269, 0
        %2366 = vmatprep.subr.mxu0 0.0
        %2367 = vmatpush1.msra.mxu0 %v2361
        %2368 = vmatprep.subr.mxu0 0.0
        %2369 = vmatpush1.msra.mxu0 0.0
        %2370 = vmatprep.subr.mxu0 0.0
        %2371 = vmatpush1.msra.mxu0 0.0
        %2372 = vmatprep.subr.mxu0 0.0
        %2373 = vmatpush1.msra.mxu0 0.0
        %2374 = vmatprep.subr.mxu0 0.0
        %2375 = vmatpush1.msra.mxu0 0.0
        %2376 = vmatprep.subr.mxu0 0.0
        %2377 = vmatpush1.msra.mxu0 0.0
        %2378 = vmatprep.subr.mxu0 0.0
        %2379 = vmatpush1.msra.mxu0 0.0
        %2380 = vmatprep.subr.mxu0 0.0
        %2381 = vmatpush1.msra.mxu0 0.0
        %2382 = vmatprep.subr.mxu0 0.0
        %2383 = vmatpush1.msra.mxu0 0.0
        %2384 = vmatprep.subr.mxu0 0.0
        %2385 = vmatpush1.msra.mxu0 0.0
        %2386 = vmatprep.subr.mxu0 0.0
        %2387 = vmatpush1.msra.mxu0 0.0
        %2388 = vmatprep.subr.mxu0 0.0
        %2389 = vmatpush1.msra.mxu0 0.0
        %2390 = vmatprep.subr.mxu0 0.0
        %2391 = vmatpush1.msra.mxu0 0.0
        %2392 = vmatprep.subr.mxu0 0.0
        %2393 = vmatpush1.msra.mxu0 0.0
        %2394 = vmatprep.subr.mxu0 0.0
        %2395 = vmatpush1.msra.mxu0 0.0
        %2396 = vmatprep.subr.mxu0 0.0
        %2397 = vmatpush1.msra.mxu0 0.0
        %2398 = vmatprep.subr.mxu0 0.0
        %2399 = vmatpush1.msra.mxu0 0.0
        %2400 = vmatprep.subr.mxu0 0.0
        %2401 = vmatpush1.msra.mxu0 0.0
        %2402 = vmatprep.subr.mxu0 0.0
        %2403 = vmatpush1.msra.mxu0 0.0
        %2404 = vmatprep.subr.mxu0 0.0
        %2405 = vmatpush1.msra.mxu0 0.0
        %2406 = vmatprep.subr.mxu0 0.0
        %2407 = vmatpush1.msra.mxu0 0.0
        %2408 = vmatprep.subr.mxu0 0.0
        %2409 = vmatpush1.msra.mxu0 0.0
        %2410 = vmatprep.subr.mxu0 0.0
        %2411 = vmatpush1.msra.mxu0 0.0
        %2412 = vmatprep.subr.mxu0 0.0
        %2413 = vmatpush1.msra.mxu0 0.0
        %2414 = vmatprep.subr.mxu0 0.0
        %2415 = vmatpush1.msra.mxu0 0.0
        %2416 = vmatprep.subr.mxu0 0.0
        %2417 = vmatpush1.msra.mxu0 0.0
        %2418 = vmatprep.subr.mxu0 0.0
        %2419 = vmatpush1.msra.mxu0 0.0
        %2420 = vmatprep.subr.mxu0 0.0
        %2421 = vmatpush1.msra.mxu0 0.0
        %2422 = vmatprep.subr.mxu0 0.0
        %2423 = vmatpush1.msra.mxu0 0.0
        %2424 = vmatprep.subr.mxu0 0.0
        %2425 = vmatpush1.msra.mxu0 0.0
        %2426 = vmatprep.subr.mxu0 0.0
        %2427 = vmatpush1.msra.mxu0 0.0
        %2428 = vmatprep.subr.mxu0 0.0
        %2429 = vmatpush1.msra.mxu0 0.0
        %2430 = vmatprep.mubr.f32.mxu0 0.0
        %2431 = vmatmul.mubr.f32.gmra.mrb[0].mxu0 %v2364
        %v2432 = vpop.f32.mrb[0].mxu0
        %v2433 = vadd.f32 0.0, %v2432
        %v2434 = vpop.f32.mrb[0].mxu0
        %2435 = vdwg.mxu0
        %2436 = vrot.lane.b32.xlu0 %v573, 80
        %v2437 = vpop.permute.xlu0 %2436
        %2438 = vrot.lane.b32.xlu0 %v578, 80
        %v2439 = vpop.permute.xlu0 %2438
        %v2443 = vsel %vm898, %v2261, 0
        %2445 = vmatprep.subr.mxu0 0.0
        %2446 = vmatpush1.msra.mxu0 %v2437
        %2447 = vmatprep.subr.mxu0 0.0
        %2448 = vmatpush1.msra.mxu0 %v2439
        %2449 = vmatprep.subr.mxu0 0.0
        %2450 = vmatpush1.msra.mxu0 0.0
        %2451 = vmatprep.subr.mxu0 0.0
        %2452 = vmatpush1.msra.mxu0 0.0
        %2453 = vmatprep.subr.mxu0 0.0
        %2454 = vmatpush1.msra.mxu0 0.0
        %2455 = vmatprep.subr.mxu0 0.0
        %2456 = vmatpush1.msra.mxu0 0.0
        %2457 = vmatprep.subr.mxu0 0.0
        %2458 = vmatpush1.msra.mxu0 0.0
        %2459 = vmatprep.subr.mxu0 0.0
        %2460 = vmatpush1.msra.mxu0 0.0
        %2461 = vmatprep.subr.mxu0 0.0
        %2462 = vmatpush1.msra.mxu0 0.0
        %2463 = vmatprep.subr.mxu0 0.0
        %2464 = vmatpush1.msra.mxu0 0.0
        %2465 = vmatprep.subr.mxu0 0.0
        %2466 = vmatpush1.msra.mxu0 0.0
        %2467 = vmatprep.subr.mxu0 0.0
        %2468 = vmatpush1.msra.mxu0 0.0
        %2469 = vmatprep.subr.mxu0 0.0
        %2470 = vmatpush1.msra.mxu0 0.0
        %2471 = vmatprep.subr.mxu0 0.0
        %2472 = vmatpush1.msra.mxu0 0.0
        %2473 = vmatprep.subr.mxu0 0.0
        %2474 = vmatpush1.msra.mxu0 0.0
        %2475 = vmatprep.subr.mxu0 0.0
        %2476 = vmatpush1.msra.mxu0 0.0
        %2477 = vmatprep.subr.mxu0 0.0
        %2478 = vmatpush1.msra.mxu0 0.0
        %2479 = vmatprep.subr.mxu0 0.0
        %2480 = vmatpush1.msra.mxu0 0.0
        %2481 = vmatprep.subr.mxu0 0.0
        %2482 = vmatpush1.msra.mxu0 0.0
        %2483 = vmatprep.subr.mxu0 0.0
        %2484 = vmatpush1.msra.mxu0 0.0
        %2485 = vmatprep.subr.mxu0 0.0
        %2486 = vmatpush1.msra.mxu0 0.0
        %2487 = vmatprep.subr.mxu0 0.0
        %2488 = vmatpush1.msra.mxu0 0.0
        %2489 = vmatprep.subr.mxu0 0.0
        %2490 = vmatpush1.msra.mxu0 0.0
        %2491 = vmatprep.subr.mxu0 0.0
        %2492 = vmatpush1.msra.mxu0 0.0
        %2493 = vmatprep.subr.mxu0 0.0
        %2494 = vmatpush1.msra.mxu0 0.0
        %2495 = vmatprep.subr.mxu0 0.0
        %2496 = vmatpush1.msra.mxu0 0.0
        %2497 = vmatprep.subr.mxu0 0.0
        %2498 = vmatpush1.msra.mxu0 0.0
        %2499 = vmatprep.subr.mxu0 0.0
        %2500 = vmatpush1.msra.mxu0 0.0
        %2501 = vmatprep.subr.mxu0 0.0
        %2502 = vmatpush1.msra.mxu0 0.0
        %2503 = vmatprep.subr.mxu0 0.0
        %2504 = vmatpush1.msra.mxu0 0.0
        %2505 = vmatprep.subr.mxu0 0.0
        %2506 = vmatpush1.msra.mxu0 0.0
        %2507 = vmatprep.subr.mxu0 0.0
        %2508 = vmatpush1.msra.mxu0 0.0
        %2509 = vmatprep.mubr.f32.mxu0 0.0
        %2510 = vmatmul.mubr.f32.gmra.mrb[0].mxu0 %v2443
        %v2511 = vpop.f32.mrb[0].mxu0
        %v2512 = vadd.f32 %v2357, %v2511
        %v2513 = vpop.f32.mrb[0].mxu0
        %2514 = vdwg.mxu0
        %2515 = vrot.lane.b32.xlu0 %v583, 80
        %v2516 = vpop.permute.xlu0 %2515
        %2517 = vrot.lane.b32.xlu0 %v588, 80
        %v2518 = vpop.permute.xlu0 %2517
        %v2522 = vsel %vm898, %v2263, 0
        %2524 = vmatprep.subr.mxu0 0.0
        %2525 = vmatpush1.msra.mxu0 %v2516
        %2526 = vmatprep.subr.mxu0 0.0
        %2527 = vmatpush1.msra.mxu0 %v2518
        %2528 = vmatprep.subr.mxu0 0.0
        %2529 = vmatpush1.msra.mxu0 0.0
        %2530 = vmatprep.subr.mxu0 0.0
        %2531 = vmatpush1.msra.mxu0 0.0
        %2532 = vmatprep.subr.mxu0 0.0
        %2533 = vmatpush1.msra.mxu0 0.0
        %2534 = vmatprep.subr.mxu0 0.0
        %2535 = vmatpush1.msra.mxu0 0.0
        %2536 = vmatprep.subr.mxu0 0.0
        %2537 = vmatpush1.msra.mxu0 0.0
        %2538 = vmatprep.subr.mxu0 0.0
        %2539 = vmatpush1.msra.mxu0 0.0
        %2540 = vmatprep.subr.mxu0 0.0
        %2541 = vmatpush1.msra.mxu0 0.0
        %2542 = vmatprep.subr.mxu0 0.0
        %2543 = vmatpush1.msra.mxu0 0.0
        %2544 = vmatprep.subr.mxu0 0.0
        %2545 = vmatpush1.msra.mxu0 0.0
        %2546 = vmatprep.subr.mxu0 0.0
        %2547 = vmatpush1.msra.mxu0 0.0
        %2548 = vmatprep.subr.mxu0 0.0
        %2549 = vmatpush1.msra.mxu0 0.0
        %2550 = vmatprep.subr.mxu0 0.0
        %2551 = vmatpush1.msra.mxu0 0.0
        %2552 = vmatprep.subr.mxu0 0.0
        %2553 = vmatpush1.msra.mxu0 0.0
        %2554 = vmatprep.subr.mxu0 0.0
        %2555 = vmatpush1.msra.mxu0 0.0
        %2556 = vmatprep.subr.mxu0 0.0
        %2557 = vmatpush1.msra.mxu0 0.0
        %2558 = vmatprep.subr.mxu0 0.0
        %2559 = vmatpush1.msra.mxu0 0.0
        %2560 = vmatprep.subr.mxu0 0.0
        %2561 = vmatpush1.msra.mxu0 0.0
        %2562 = vmatprep.subr.mxu0 0.0
        %2563 = vmatpush1.msra.mxu0 0.0
        %2564 = vmatprep.subr.mxu0 0.0
        %2565 = vmatpush1.msra.mxu0 0.0
        %2566 = vmatprep.subr.mxu0 0.0
        %2567 = vmatpush1.msra.mxu0 0.0
        %2568 = vmatprep.subr.mxu0 0.0
        %2569 = vmatpush1.msra.mxu0 0.0
        %2570 = vmatprep.subr.mxu0 0.0
        %2571 = vmatpush1.msra.mxu0 0.0
        %2572 = vmatprep.subr.mxu0 0.0
        %2573 = vmatpush1.msra.mxu0 0.0
        %2574 = vmatprep.subr.mxu0 0.0
        %2575 = vmatpush1.msra.mxu0 0.0
        %2576 = vmatprep.subr.mxu0 0.0
        %2577 = vmatpush1.msra.mxu0 0.0
        %2578 = vmatprep.subr.mxu0 0.0
        %2579 = vmatpush1.msra.mxu0 0.0
        %2580 = vmatprep.subr.mxu0 0.0
        %2581 = vmatpush1.msra.mxu0 0.0
        %2582 = vmatprep.subr.mxu0 0.0
        %2583 = vmatpush1.msra.mxu0 0.0
        %2584 = vmatprep.subr.mxu0 0.0
        %2585 = vmatpush1.msra.mxu0 0.0
        %2586 = vmatprep.subr.mxu0 0.0
        %2587 = vmatpush1.msra.mxu0 0.0
        %2588 = vmatprep.mubr.f32.mxu0 0.0
        %2589 = vmatmul.mubr.f32.gmra.mrb[0].mxu0 %v2522
        %v2590 = vpop.f32.mrb[0].mxu0
        %v2591 = vadd.f32 %v2433, %v2590
        %v2592 = vpop.f32.mrb[0].mxu0
        %2593 = vdwg.mxu0
        %v2594 = vrcp.pop %v2282
        %v2595 = vmul.f32 %v2512, %v2594
        %v2596 = vrcp.pop %v2283
        %v2597 = vmul.f32 %v2591, %v2596
        %2600 = vrot.lane.b32.xlu0 %v2595, 16
        %v2601 = vpop.permute.xlu0 %2600
        %2602 = vrot.lane.b32.xlu0 %v2597, 16
        %v2603 = vpop.permute.xlu0 %2602
        %vm2606 = vcmask 195712
        %2607 = vst.msk [vmem:[#allocation2] sm:$0xff] %vm2606, %v2601
        %2608 = vst.msk [vmem:[#allocation2 + $0x8] sm:$0xff] %vm2606, %v2603
        %2609 = vrot.lane.b32.xlu0 %v482, 104
        %v2610 = vpop.permute.xlu0 %2609
        %2611 = vrot.lane.b32.xlu0 %v573, 104
        %v2612 = vpop.permute.xlu0 %2611
        %2613 = vrot.lane.b32.xlu0 %v578, 104
        %v2614 = vpop.permute.xlu0 %2613
        %v2615 = vsel %vm591, %v2610, 0
        %v2617 = vsel %vm591, %v2612, 0
        %v2619 = vsel %vm591, %v2614, 0
        %2621 = vmatprep.subr.mxu0 0.0
        %2622 = vmatpush1.xpose.msra.mxu0 %v2617
        %2623 = vmatprep.subr.mxu0 0.0
        %2624 = vmatpush1.xpose.msra.mxu0 %v2619
        %2625 = vmatprep.subr.mxu0 0.0
        %2626 = vmatpush1.xpose.msra.mxu0 0.0
        %2627 = vmatprep.subr.mxu0 0.0
        %2628 = vmatpush1.xpose.msra.mxu0 0.0
        %2629 = vmatprep.subr.mxu0 0.0
        %2630 = vmatpush1.xpose.msra.mxu0 0.0
        %2631 = vmatprep.subr.mxu0 0.0
        %2632 = vmatpush1.xpose.msra.mxu0 0.0
        %2633 = vmatprep.subr.mxu0 0.0
        %2634 = vmatpush1.xpose.msra.mxu0 0.0
        %2635 = vmatprep.subr.mxu0 0.0
        %2636 = vmatpush1.xpose.msra.mxu0 0.0
        %2637 = vmatprep.subr.mxu0 0.0
        %2638 = vmatpush1.xpose.msra.mxu0 0.0
        %2639 = vmatprep.subr.mxu0 0.0
        %2640 = vmatpush1.xpose.msra.mxu0 0.0
        %2641 = vmatprep.subr.mxu0 0.0
        %2642 = vmatpush1.xpose.msra.mxu0 0.0
        %2643 = vmatprep.subr.mxu0 0.0
        %2644 = vmatpush1.xpose.msra.mxu0 0.0
        %2645 = vmatprep.subr.mxu0 0.0
        %2646 = vmatpush1.xpose.msra.mxu0 0.0
        %2647 = vmatprep.subr.mxu0 0.0
        %2648 = vmatpush1.xpose.msra.mxu0 0.0
        %2649 = vmatprep.subr.mxu0 0.0
        %2650 = vmatpush1.xpose.msra.mxu0 0.0
        %2651 = vmatprep.subr.mxu0 0.0
        %2652 = vmatpush1.xpose.msra.mxu0 0.0
        %2653 = vmatprep.subr.mxu0 0.0
        %2654 = vmatpush1.xpose.msra.mxu0 0.0
        %2655 = vmatprep.subr.mxu0 0.0
        %2656 = vmatpush1.xpose.msra.mxu0 0.0
        %2657 = vmatprep.subr.mxu0 0.0
        %2658 = vmatpush1.xpose.msra.mxu0 0.0
        %2659 = vmatprep.subr.mxu0 0.0
        %2660 = vmatpush1.xpose.msra.mxu0 0.0
        %2661 = vmatprep.subr.mxu0 0.0
        %2662 = vmatpush1.xpose.msra.mxu0 0.0
        %2663 = vmatprep.subr.mxu0 0.0
        %2664 = vmatpush1.xpose.msra.mxu0 0.0
        %2665 = vmatprep.subr.mxu0 0.0
        %2666 = vmatpush1.xpose.msra.mxu0 0.0
        %2667 = vmatprep.subr.mxu0 0.0
        %2668 = vmatpush1.xpose.msra.mxu0 0.0
        %2669 = vmatprep.subr.mxu0 0.0
        %2670 = vmatpush1.xpose.msra.mxu0 0.0
        %2671 = vmatprep.subr.mxu0 0.0
        %2672 = vmatpush1.xpose.msra.mxu0 0.0
        %2673 = vmatprep.subr.mxu0 0.0
        %2674 = vmatpush1.xpose.msra.mxu0 0.0
        %2675 = vmatprep.subr.mxu0 0.0
        %2676 = vmatpush1.xpose.msra.mxu0 0.0
        %2677 = vmatprep.subr.mxu0 0.0
        %2678 = vmatpush1.xpose.msra.mxu0 0.0
        %2679 = vmatprep.subr.mxu0 0.0
        %2680 = vmatpush1.xpose.msra.mxu0 0.0
        %2681 = vmatprep.subr.mxu0 0.0
        %2682 = vmatpush1.xpose.msra.mxu0 0.0
        %2683 = vmatprep.subr.mxu0 0.0
        %2684 = vmatpush1.xpose.msra.mxu0 0.0
        %2685 = vmatprep.mubr.f32.mxu0 0.0
        %2686 = vmatmul.mubr.f32.gmra.mrb[0].mxu0 %v2615
        %v2687 = vpop.f32.mrb[0].mxu0
        %v2688 = vadd.f32 0.0, %v2687
        %v2689 = vpop.f32.mrb[0].mxu0
        %2690 = vdwg.mxu0
        %2691 = vrot.lane.b32.xlu0 %v487, 104
        %v2692 = vpop.permute.xlu0 %2691
        %2693 = vrot.lane.b32.xlu0 %v583, 104
        %v2694 = vpop.permute.xlu0 %2693
        %2695 = vrot.lane.b32.xlu0 %v588, 104
        %v2696 = vpop.permute.xlu0 %2695
        %v2697 = vsel %vm591, %v2692, 0
        %v2699 = vsel %vm591, %v2694, 0
        %v2701 = vsel %vm591, %v2696, 0
        %2703 = vmatprep.subr.mxu0 0.0
        %2704 = vmatpush1.xpose.msra.mxu0 %v2699
        %2705 = vmatprep.subr.mxu0 0.0
        %2706 = vmatpush1.xpose.msra.mxu0 %v2701
        %2707 = vmatprep.subr.mxu0 0.0
        %2708 = vmatpush1.xpose.msra.mxu0 0.0
        %2709 = vmatprep.subr.mxu0 0.0
        %2710 = vmatpush1.xpose.msra.mxu0 0.0
        %2711 = vmatprep.subr.mxu0 0.0
        %2712 = vmatpush1.xpose.msra.mxu0 0.0
        %2713 = vmatprep.subr.mxu0 0.0
        %2714 = vmatpush1.xpose.msra.mxu0 0.0
        %2715 = vmatprep.subr.mxu0 0.0
        %2716 = vmatpush1.xpose.msra.mxu0 0.0
        %2717 = vmatprep.subr.mxu0 0.0
        %2718 = vmatpush1.xpose.msra.mxu0 0.0
        %2719 = vmatprep.subr.mxu0 0.0
        %2720 = vmatpush1.xpose.msra.mxu0 0.0
        %2721 = vmatprep.subr.mxu0 0.0
        %2722 = vmatpush1.xpose.msra.mxu0 0.0
        %2723 = vmatprep.subr.mxu0 0.0
        %2724 = vmatpush1.xpose.msra.mxu0 0.0
        %2725 = vmatprep.subr.mxu0 0.0
        %2726 = vmatpush1.xpose.msra.mxu0 0.0
        %2727 = vmatprep.subr.mxu0 0.0
        %2728 = vmatpush1.xpose.msra.mxu0 0.0
        %2729 = vmatprep.subr.mxu0 0.0
        %2730 = vmatpush1.xpose.msra.mxu0 0.0
        %2731 = vmatprep.subr.mxu0 0.0
        %2732 = vmatpush1.xpose.msra.mxu0 0.0
        %2733 = vmatprep.subr.mxu0 0.0
        %2734 = vmatpush1.xpose.msra.mxu0 0.0
        %2735 = vmatprep.subr.mxu0 0.0
        %2736 = vmatpush1.xpose.msra.mxu0 0.0
        %2737 = vmatprep.subr.mxu0 0.0
        %2738 = vmatpush1.xpose.msra.mxu0 0.0
        %2739 = vmatprep.subr.mxu0 0.0
        %2740 = vmatpush1.xpose.msra.mxu0 0.0
        %2741 = vmatprep.subr.mxu0 0.0
        %2742 = vmatpush1.xpose.msra.mxu0 0.0
        %2743 = vmatprep.subr.mxu0 0.0
        %2744 = vmatpush1.xpose.msra.mxu0 0.0
        %2745 = vmatprep.subr.mxu0 0.0
        %2746 = vmatpush1.xpose.msra.mxu0 0.0
        %2747 = vmatprep.subr.mxu0 0.0
        %2748 = vmatpush1.xpose.msra.mxu0 0.0
        %2749 = vmatprep.subr.mxu0 0.0
        %2750 = vmatpush1.xpose.msra.mxu0 0.0
        %2751 = vmatprep.subr.mxu0 0.0
        %2752 = vmatpush1.xpose.msra.mxu0 0.0
        %2753 = vmatprep.subr.mxu0 0.0
        %2754 = vmatpush1.xpose.msra.mxu0 0.0
        %2755 = vmatprep.subr.mxu0 0.0
        %2756 = vmatpush1.xpose.msra.mxu0 0.0
        %2757 = vmatprep.subr.mxu0 0.0
        %2758 = vmatpush1.xpose.msra.mxu0 0.0
        %2759 = vmatprep.subr.mxu0 0.0
        %2760 = vmatpush1.xpose.msra.mxu0 0.0
        %2761 = vmatprep.subr.mxu0 0.0
        %2762 = vmatpush1.xpose.msra.mxu0 0.0
        %2763 = vmatprep.subr.mxu0 0.0
        %2764 = vmatpush1.xpose.msra.mxu0 0.0
        %2765 = vmatprep.subr.mxu0 0.0
        %2766 = vmatpush1.xpose.msra.mxu0 0.0
        %2767 = vmatprep.mubr.f32.mxu0 0.0
        %2768 = vmatmul.mubr.f32.gmra.mrb[0].mxu0 %v2697
        %v2769 = vpop.f32.mrb[0].mxu0
        %v2770 = vadd.f32 0.0, %v2769
        %v2771 = vpop.f32.mrb[0].mxu0
        %2772 = vdwg.mxu0
        %2773 = vrot.lane.b32.xlu0 %v482, 72
        %v2774 = vpop.permute.xlu0 %2773
        %v2775 = vsel %vm591, %v2774, 0
        %2777 = vmatprep.subr.mxu0 0.0
        %2778 = vmatpush1.xpose.msra.mxu0 %v2775
        %2779 = vmatprep.subr.mxu0 0.0
        %2780 = vmatpush1.xpose.msra.mxu0 0.0
        %2781 = vmatprep.subr.mxu0 0.0
        %2782 = vmatpush1.xpose.msra.mxu0 0.0
        %2783 = vmatprep.subr.mxu0 0.0
        %2784 = vmatpush1.xpose.msra.mxu0 0.0
        %2785 = vmatprep.subr.mxu0 0.0
        %2786 = vmatpush1.xpose.msra.mxu0 0.0
        %2787 = vmatprep.subr.mxu0 0.0
        %2788 = vmatpush1.xpose.msra.mxu0 0.0
        %2789 = vmatprep.subr.mxu0 0.0
        %2790 = vmatpush1.xpose.msra.mxu0 0.0
        %2791 = vmatprep.subr.mxu0 0.0
        %2792 = vmatpush1.xpose.msra.mxu0 0.0
        %2793 = vmatprep.subr.mxu0 0.0
        %2794 = vmatpush1.xpose.msra.mxu0 0.0
        %2795 = vmatprep.subr.mxu0 0.0
        %2796 = vmatpush1.xpose.msra.mxu0 0.0
        %2797 = vmatprep.subr.mxu0 0.0
        %2798 = vmatpush1.xpose.msra.mxu0 0.0
        %2799 = vmatprep.subr.mxu0 0.0
        %2800 = vmatpush1.xpose.msra.mxu0 0.0
        %2801 = vmatprep.subr.mxu0 0.0
        %2802 = vmatpush1.xpose.msra.mxu0 0.0
        %2803 = vmatprep.subr.mxu0 0.0
        %2804 = vmatpush1.xpose.msra.mxu0 0.0
        %2805 = vmatprep.subr.mxu0 0.0
        %2806 = vmatpush1.xpose.msra.mxu0 0.0
        %2807 = vmatprep.subr.mxu0 0.0
        %2808 = vmatpush1.xpose.msra.mxu0 0.0
        %2809 = vmatprep.subr.mxu0 0.0
        %2810 = vmatpush1.xpose.msra.mxu0 0.0
        %2811 = vmatprep.subr.mxu0 0.0
        %2812 = vmatpush1.xpose.msra.mxu0 0.0
        %2813 = vmatprep.subr.mxu0 0.0
        %2814 = vmatpush1.xpose.msra.mxu0 0.0
        %2815 = vmatprep.subr.mxu0 0.0
        %2816 = vmatpush1.xpose.msra.mxu0 0.0
        %2817 = vmatprep.subr.mxu0 0.0
        %2818 = vmatpush1.xpose.msra.mxu0 0.0
        %2819 = vmatprep.subr.mxu0 0.0
        %2820 = vmatpush1.xpose.msra.mxu0 0.0
        %2821 = vmatprep.subr.mxu0 0.0
        %2822 = vmatpush1.xpose.msra.mxu0 0.0
        %2823 = vmatprep.subr.mxu0 0.0
        %2824 = vmatpush1.xpose.msra.mxu0 0.0
        %2825 = vmatprep.subr.mxu0 0.0
        %2826 = vmatpush1.xpose.msra.mxu0 0.0
        %2827 = vmatprep.subr.mxu0 0.0
        %2828 = vmatpush1.xpose.msra.mxu0 0.0
        %2829 = vmatprep.subr.mxu0 0.0
        %2830 = vmatpush1.xpose.msra.mxu0 0.0
        %2831 = vmatprep.subr.mxu0 0.0
        %2832 = vmatpush1.xpose.msra.mxu0 0.0
        %2833 = vmatprep.subr.mxu0 0.0
        %2834 = vmatpush1.xpose.msra.mxu0 0.0
        %2835 = vmatprep.subr.mxu0 0.0
        %2836 = vmatpush1.xpose.msra.mxu0 0.0
        %2837 = vmatprep.subr.mxu0 0.0
        %2838 = vmatpush1.xpose.msra.mxu0 0.0
        %2839 = vmatprep.subr.mxu0 0.0
        %2840 = vmatpush1.xpose.msra.mxu0 0.0
        %2841 = vmatprep.mubr.f32.mxu0 0.0
        %2842 = vmatmul.mubr.f32.gmra.mrb[0].mxu0 %v2615
        %v2843 = vpop.f32.mrb[0].mxu0
        %v2844 = vadd.f32 0.0, %v2843
        %v2845 = vpop.f32.mrb[0].mxu0
        %2846 = vdwg.mxu0
        %2847 = vrot.lane.b32.xlu0 %v487, 72
        %v2848 = vpop.permute.xlu0 %2847
        %v2849 = vsel %vm591, %v2848, 0
        %2851 = vmatprep.subr.mxu0 0.0
        %2852 = vmatpush1.xpose.msra.mxu0 %v2849
        %2853 = vmatprep.subr.mxu0 0.0
        %2854 = vmatpush1.xpose.msra.mxu0 0.0
        %2855 = vmatprep.subr.mxu0 0.0
        %2856 = vmatpush1.xpose.msra.mxu0 0.0
        %2857 = vmatprep.subr.mxu0 0.0
        %2858 = vmatpush1.xpose.msra.mxu0 0.0
        %2859 = vmatprep.subr.mxu0 0.0
        %2860 = vmatpush1.xpose.msra.mxu0 0.0
        %2861 = vmatprep.subr.mxu0 0.0
        %2862 = vmatpush1.xpose.msra.mxu0 0.0
        %2863 = vmatprep.subr.mxu0 0.0
        %2864 = vmatpush1.xpose.msra.mxu0 0.0
        %2865 = vmatprep.subr.mxu0 0.0
        %2866 = vmatpush1.xpose.msra.mxu0 0.0
        %2867 = vmatprep.subr.mxu0 0.0
        %2868 = vmatpush1.xpose.msra.mxu0 0.0
        %2869 = vmatprep.subr.mxu0 0.0
        %2870 = vmatpush1.xpose.msra.mxu0 0.0
        %2871 = vmatprep.subr.mxu0 0.0
        %2872 = vmatpush1.xpose.msra.mxu0 0.0
        %2873 = vmatprep.subr.mxu0 0.0
        %2874 = vmatpush1.xpose.msra.mxu0 0.0
        %2875 = vmatprep.subr.mxu0 0.0
        %2876 = vmatpush1.xpose.msra.mxu0 0.0
        %2877 = vmatprep.subr.mxu0 0.0
        %2878 = vmatpush1.xpose.msra.mxu0 0.0
        %2879 = vmatprep.subr.mxu0 0.0
        %2880 = vmatpush1.xpose.msra.mxu0 0.0
        %2881 = vmatprep.subr.mxu0 0.0
        %2882 = vmatpush1.xpose.msra.mxu0 0.0
        %2883 = vmatprep.subr.mxu0 0.0
        %2884 = vmatpush1.xpose.msra.mxu0 0.0
        %2885 = vmatprep.subr.mxu0 0.0
        %2886 = vmatpush1.xpose.msra.mxu0 0.0
        %2887 = vmatprep.subr.mxu0 0.0
        %2888 = vmatpush1.xpose.msra.mxu0 0.0
        %2889 = vmatprep.subr.mxu0 0.0
        %2890 = vmatpush1.xpose.msra.mxu0 0.0
        %2891 = vmatprep.subr.mxu0 0.0
        %2892 = vmatpush1.xpose.msra.mxu0 0.0
        %2893 = vmatprep.subr.mxu0 0.0
        %2894 = vmatpush1.xpose.msra.mxu0 0.0
        %2895 = vmatprep.subr.mxu0 0.0
        %2896 = vmatpush1.xpose.msra.mxu0 0.0
        %2897 = vmatprep.subr.mxu0 0.0
        %2898 = vmatpush1.xpose.msra.mxu0 0.0
        %2899 = vmatprep.subr.mxu0 0.0
        %2900 = vmatpush1.xpose.msra.mxu0 0.0
        %2901 = vmatprep.subr.mxu0 0.0
        %2902 = vmatpush1.xpose.msra.mxu0 0.0
        %2903 = vmatprep.subr.mxu0 0.0
        %2904 = vmatpush1.xpose.msra.mxu0 0.0
        %2905 = vmatprep.subr.mxu0 0.0
        %2906 = vmatpush1.xpose.msra.mxu0 0.0
        %2907 = vmatprep.subr.mxu0 0.0
        %2908 = vmatpush1.xpose.msra.mxu0 0.0
        %2909 = vmatprep.subr.mxu0 0.0
        %2910 = vmatpush1.xpose.msra.mxu0 0.0
        %2911 = vmatprep.subr.mxu0 0.0
        %2912 = vmatpush1.xpose.msra.mxu0 0.0
        %2913 = vmatprep.subr.mxu0 0.0
        %2914 = vmatpush1.xpose.msra.mxu0 0.0
        %2915 = vmatprep.mubr.f32.mxu0 0.0
        %2916 = vmatmul.mubr.f32.gmra.mrb[0].mxu0 %v2697
        %v2917 = vpop.f32.mrb[0].mxu0
        %v2918 = vadd.f32 0.0, %v2917
        %v2919 = vpop.f32.mrb[0].mxu0
        %2920 = vdwg.mxu0
        %v2921 = vsel %vm898, %v2688, -inf
        %2922 = vmax.xlane.f32.xlu0 %v2921
        %v2923 = vpop.xlane.xlu0 %2922
        %v2924 = vsel %vm898, %v2770, -inf
        %2925 = vmax.xlane.f32.xlu0 %v2924
        %v2926 = vpop.xlane.xlu0 %2925
        %v2927 = vsel %vm591, %v2844, -inf
        %2928 = vmax.xlane.f32.xlu0 %v2927
        %v2929 = vpop.xlane.xlu0 %2928
        %v2930 = vsel %vm591, %v2918, -inf
        %2931 = vmax.xlane.f32.xlu0 %v2930
        %v2932 = vpop.xlane.xlu0 %2931
        %v2933 = vmax.f32 %v2923, %v2929
        %v2934 = vmax.f32 %v2926, %v2932
        %v2935 = vsub.f32 %v2688, %v2933
        %v2936 = vsub.f32 %v2770, %v2934
        %v2937 = vmul.f32 %v2935, 1.442695
        %v2938 = vpow.pop %v2937
        %v2939 = vmul.f32 %v2936, 1.442695
        %v2940 = vpow.pop %v2939
        %v2941 = vsub.f32 %v2844, %v2933
        %v2942 = vsub.f32 %v2918, %v2934
        %v2943 = vmul.f32 %v2941, 1.442695
        %v2944 = vpow.pop %v2943
        %v2945 = vmul.f32 %v2942, 1.442695
        %v2946 = vpow.pop %v2945
        %v2947 = vsel %vm898, %v2938, 0.0
        %2948 = vadd.xlane.f32.xlu0 %v2947
        %v2949 = vpop.xlane.xlu0 %2948
        %v2950 = vsel %vm898, %v2940, 0.0
        %2951 = vadd.xlane.f32.xlu0 %v2950
        %v2952 = vpop.xlane.xlu0 %2951
        %v2953 = vsel %vm591, %v2944, 0.0
        %2954 = vadd.xlane.f32.xlu0 %v2953
        %v2955 = vpop.xlane.xlu0 %2954
        %v2956 = vsel %vm591, %v2946, 0.0
        %2957 = vadd.xlane.f32.xlu0 %v2956
        %v2958 = vpop.xlane.xlu0 %2957
        %v2959 = vadd.f32 %v2949, %v2955
        %v2960 = vadd.f32 %v2952, %v2958
        %2961 = vrot.lane.b32.xlu0 %v482, 40
        %v2962 = vpop.permute.xlu0 %2961
        %v2965 = vsel %vm591, %v2944, 0
        %2967 = vmatprep.subr.mxu0 0.0
        %2968 = vmatpush1.msra.mxu0 %v2962
        %2969 = vmatprep.subr.mxu0 0.0
        %2970 = vmatpush1.msra.mxu0 0.0
        %2971 = vmatprep.subr.mxu0 0.0
        %2972 = vmatpush1.msra.mxu0 0.0
        %2973 = vmatprep.subr.mxu0 0.0
        %2974 = vmatpush1.msra.mxu0 0.0
        %2975 = vmatprep.subr.mxu0 0.0
        %2976 = vmatpush1.msra.mxu0 0.0
        %2977 = vmatprep.subr.mxu0 0.0
        %2978 = vmatpush1.msra.mxu0 0.0
        %2979 = vmatprep.subr.mxu0 0.0
        %2980 = vmatpush1.msra.mxu0 0.0
        %2981 = vmatprep.subr.mxu0 0.0
        %2982 = vmatpush1.msra.mxu0 0.0
        %2983 = vmatprep.subr.mxu0 0.0
        %2984 = vmatpush1.msra.mxu0 0.0
        %2985 = vmatprep.subr.mxu0 0.0
        %2986 = vmatpush1.msra.mxu0 0.0
        %2987 = vmatprep.subr.mxu0 0.0
        %2988 = vmatpush1.msra.mxu0 0.0
        %2989 = vmatprep.subr.mxu0 0.0
        %2990 = vmatpush1.msra.mxu0 0.0
        %2991 = vmatprep.subr.mxu0 0.0
        %2992 = vmatpush1.msra.mxu0 0.0
        %2993 = vmatprep.subr.mxu0 0.0
        %2994 = vmatpush1.msra.mxu0 0.0
        %2995 = vmatprep.subr.mxu0 0.0
        %2996 = vmatpush1.msra.mxu0 0.0
        %2997 = vmatprep.subr.mxu0 0.0
        %2998 = vmatpush1.msra.mxu0 0.0
        %2999 = vmatprep.subr.mxu0 0.0
        %3000 = vmatpush1.msra.mxu0 0.0
        %3001 = vmatprep.subr.mxu0 0.0
        %3002 = vmatpush1.msra.mxu0 0.0
        %3003 = vmatprep.subr.mxu0 0.0
        %3004 = vmatpush1.msra.mxu0 0.0
        %3005 = vmatprep.subr.mxu0 0.0
        %3006 = vmatpush1.msra.mxu0 0.0
        %3007 = vmatprep.subr.mxu0 0.0
        %3008 = vmatpush1.msra.mxu0 0.0
        %3009 = vmatprep.subr.mxu0 0.0
        %3010 = vmatpush1.msra.mxu0 0.0
        %3011 = vmatprep.subr.mxu0 0.0
        %3012 = vmatpush1.msra.mxu0 0.0
        %3013 = vmatprep.subr.mxu0 0.0
        %3014 = vmatpush1.msra.mxu0 0.0
        %3015 = vmatprep.subr.mxu0 0.0
        %3016 = vmatpush1.msra.mxu0 0.0
        %3017 = vmatprep.subr.mxu0 0.0
        %3018 = vmatpush1.msra.mxu0 0.0
        %3019 = vmatprep.subr.mxu0 0.0
        %3020 = vmatpush1.msra.mxu0 0.0
        %3021 = vmatprep.subr.mxu0 0.0
        %3022 = vmatpush1.msra.mxu0 0.0
        %3023 = vmatprep.subr.mxu0 0.0
        %3024 = vmatpush1.msra.mxu0 0.0
        %3025 = vmatprep.subr.mxu0 0.0
        %3026 = vmatpush1.msra.mxu0 0.0
        %3027 = vmatprep.subr.mxu0 0.0
        %3028 = vmatpush1.msra.mxu0 0.0
        %3029 = vmatprep.subr.mxu0 0.0
        %3030 = vmatpush1.msra.mxu0 0.0
        %3031 = vmatprep.mubr.f32.mxu0 0.0
        %3032 = vmatmul.mubr.f32.gmra.mrb[0].mxu0 %v2965
        %v3033 = vpop.f32.mrb[0].mxu0
        %v3034 = vadd.f32 0.0, %v3033
        %v3035 = vpop.f32.mrb[0].mxu0
        %3036 = vdwg.mxu0
        %3037 = vrot.lane.b32.xlu0 %v487, 40
        %v3038 = vpop.permute.xlu0 %3037
        %v3041 = vsel %vm591, %v2946, 0
        %3043 = vmatprep.subr.mxu0 0.0
        %3044 = vmatpush1.msra.mxu0 %v3038
        %3045 = vmatprep.subr.mxu0 0.0
        %3046 = vmatpush1.msra.mxu0 0.0
        %3047 = vmatprep.subr.mxu0 0.0
        %3048 = vmatpush1.msra.mxu0 0.0
        %3049 = vmatprep.subr.mxu0 0.0
        %3050 = vmatpush1.msra.mxu0 0.0
        %3051 = vmatprep.subr.mxu0 0.0
        %3052 = vmatpush1.msra.mxu0 0.0
        %3053 = vmatprep.subr.mxu0 0.0
        %3054 = vmatpush1.msra.mxu0 0.0
        %3055 = vmatprep.subr.mxu0 0.0
        %3056 = vmatpush1.msra.mxu0 0.0
        %3057 = vmatprep.subr.mxu0 0.0
        %3058 = vmatpush1.msra.mxu0 0.0
        %3059 = vmatprep.subr.mxu0 0.0
        %3060 = vmatpush1.msra.mxu0 0.0
        %3061 = vmatprep.subr.mxu0 0.0
        %3062 = vmatpush1.msra.mxu0 0.0
        %3063 = vmatprep.subr.mxu0 0.0
        %3064 = vmatpush1.msra.mxu0 0.0
        %3065 = vmatprep.subr.mxu0 0.0
        %3066 = vmatpush1.msra.mxu0 0.0
        %3067 = vmatprep.subr.mxu0 0.0
        %3068 = vmatpush1.msra.mxu0 0.0
        %3069 = vmatprep.subr.mxu0 0.0
        %3070 = vmatpush1.msra.mxu0 0.0
        %3071 = vmatprep.subr.mxu0 0.0
        %3072 = vmatpush1.msra.mxu0 0.0
        %3073 = vmatprep.subr.mxu0 0.0
        %3074 = vmatpush1.msra.mxu0 0.0
        %3075 = vmatprep.subr.mxu0 0.0
        %3076 = vmatpush1.msra.mxu0 0.0
        %3077 = vmatprep.subr.mxu0 0.0
        %3078 = vmatpush1.msra.mxu0 0.0
        %3079 = vmatprep.subr.mxu0 0.0
        %3080 = vmatpush1.msra.mxu0 0.0
        %3081 = vmatprep.subr.mxu0 0.0
        %3082 = vmatpush1.msra.mxu0 0.0
        %3083 = vmatprep.subr.mxu0 0.0
        %3084 = vmatpush1.msra.mxu0 0.0
        %3085 = vmatprep.subr.mxu0 0.0
        %3086 = vmatpush1.msra.mxu0 0.0
        %3087 = vmatprep.subr.mxu0 0.0
        %3088 = vmatpush1.msra.mxu0 0.0
        %3089 = vmatprep.subr.mxu0 0.0
        %3090 = vmatpush1.msra.mxu0 0.0
        %3091 = vmatprep.subr.mxu0 0.0
        %3092 = vmatpush1.msra.mxu0 0.0
        %3093 = vmatprep.subr.mxu0 0.0
        %3094 = vmatpush1.msra.mxu0 0.0
        %3095 = vmatprep.subr.mxu0 0.0
        %3096 = vmatpush1.msra.mxu0 0.0
        %3097 = vmatprep.subr.mxu0 0.0
        %3098 = vmatpush1.msra.mxu0 0.0
        %3099 = vmatprep.subr.mxu0 0.0
        %3100 = vmatpush1.msra.mxu0 0.0
        %3101 = vmatprep.subr.mxu0 0.0
        %3102 = vmatpush1.msra.mxu0 0.0
        %3103 = vmatprep.subr.mxu0 0.0
        %3104 = vmatpush1.msra.mxu0 0.0
        %3105 = vmatprep.subr.mxu0 0.0
        %3106 = vmatpush1.msra.mxu0 0.0
        %3107 = vmatprep.mubr.f32.mxu0 0.0
        %3108 = vmatmul.mubr.f32.gmra.mrb[0].mxu0 %v3041
        %v3109 = vpop.f32.mrb[0].mxu0
        %v3110 = vadd.f32 0.0, %v3109
        %v3111 = vpop.f32.mrb[0].mxu0
        %3112 = vdwg.mxu0
        %3113 = vrot.lane.b32.xlu0 %v573, 72
        %v3114 = vpop.permute.xlu0 %3113
        %3115 = vrot.lane.b32.xlu0 %v578, 72
        %v3116 = vpop.permute.xlu0 %3115
        %v3120 = vsel %vm898, %v2938, 0
        %3122 = vmatprep.subr.mxu0 0.0
        %3123 = vmatpush1.msra.mxu0 %v3114
        %3124 = vmatprep.subr.mxu0 0.0
        %3125 = vmatpush1.msra.mxu0 %v3116
        %3126 = vmatprep.subr.mxu0 0.0
        %3127 = vmatpush1.msra.mxu0 0.0
        %3128 = vmatprep.subr.mxu0 0.0
        %3129 = vmatpush1.msra.mxu0 0.0
        %3130 = vmatprep.subr.mxu0 0.0
        %3131 = vmatpush1.msra.mxu0 0.0
        %3132 = vmatprep.subr.mxu0 0.0
        %3133 = vmatpush1.msra.mxu0 0.0
        %3134 = vmatprep.subr.mxu0 0.0
        %3135 = vmatpush1.msra.mxu0 0.0
        %3136 = vmatprep.subr.mxu0 0.0
        %3137 = vmatpush1.msra.mxu0 0.0
        %3138 = vmatprep.subr.mxu0 0.0
        %3139 = vmatpush1.msra.mxu0 0.0
        %3140 = vmatprep.subr.mxu0 0.0
        %3141 = vmatpush1.msra.mxu0 0.0
        %3142 = vmatprep.subr.mxu0 0.0
        %3143 = vmatpush1.msra.mxu0 0.0
        %3144 = vmatprep.subr.mxu0 0.0
        %3145 = vmatpush1.msra.mxu0 0.0
        %3146 = vmatprep.subr.mxu0 0.0
        %3147 = vmatpush1.msra.mxu0 0.0
        %3148 = vmatprep.subr.mxu0 0.0
        %3149 = vmatpush1.msra.mxu0 0.0
        %3150 = vmatprep.subr.mxu0 0.0
        %3151 = vmatpush1.msra.mxu0 0.0
        %3152 = vmatprep.subr.mxu0 0.0
        %3153 = vmatpush1.msra.mxu0 0.0
        %3154 = vmatprep.subr.mxu0 0.0
        %3155 = vmatpush1.msra.mxu0 0.0
        %3156 = vmatprep.subr.mxu0 0.0
        %3157 = vmatpush1.msra.mxu0 0.0
        %3158 = vmatprep.subr.mxu0 0.0
        %3159 = vmatpush1.msra.mxu0 0.0
        %3160 = vmatprep.subr.mxu0 0.0
        %3161 = vmatpush1.msra.mxu0 0.0
        %3162 = vmatprep.subr.mxu0 0.0
        %3163 = vmatpush1.msra.mxu0 0.0
        %3164 = vmatprep.subr.mxu0 0.0
        %3165 = vmatpush1.msra.mxu0 0.0
        %3166 = vmatprep.subr.mxu0 0.0
        %3167 = vmatpush1.msra.mxu0 0.0
        %3168 = vmatprep.subr.mxu0 0.0
        %3169 = vmatpush1.msra.mxu0 0.0
        %3170 = vmatprep.subr.mxu0 0.0
        %3171 = vmatpush1.msra.mxu0 0.0
        %3172 = vmatprep.subr.mxu0 0.0
        %3173 = vmatpush1.msra.mxu0 0.0
        %3174 = vmatprep.subr.mxu0 0.0
        %3175 = vmatpush1.msra.mxu0 0.0
        %3176 = vmatprep.subr.mxu0 0.0
        %3177 = vmatpush1.msra.mxu0 0.0
        %3178 = vmatprep.subr.mxu0 0.0
        %3179 = vmatpush1.msra.mxu0 0.0
        %3180 = vmatprep.subr.mxu0 0.0
        %3181 = vmatpush1.msra.mxu0 0.0
        %3182 = vmatprep.subr.mxu0 0.0
        %3183 = vmatpush1.msra.mxu0 0.0
        %3184 = vmatprep.subr.mxu0 0.0
        %3185 = vmatpush1.msra.mxu0 0.0
        %3186 = vmatprep.mubr.f32.mxu0 0.0
        %3187 = vmatmul.mubr.f32.gmra.mrb[0].mxu0 %v3120
        %v3188 = vpop.f32.mrb[0].mxu0
        %v3189 = vadd.f32 %v3034, %v3188
        %v3190 = vpop.f32.mrb[0].mxu0
        %3191 = vdwg.mxu0
        %3192 = vrot.lane.b32.xlu0 %v583, 72
        %v3193 = vpop.permute.xlu0 %3192
        %3194 = vrot.lane.b32.xlu0 %v588, 72
        %v3195 = vpop.permute.xlu0 %3194
        %v3199 = vsel %vm898, %v2940, 0
        %3201 = vmatprep.subr.mxu0 0.0
        %3202 = vmatpush1.msra.mxu0 %v3193
        %3203 = vmatprep.subr.mxu0 0.0
        %3204 = vmatpush1.msra.mxu0 %v3195
        %3205 = vmatprep.subr.mxu0 0.0
        %3206 = vmatpush1.msra.mxu0 0.0
        %3207 = vmatprep.subr.mxu0 0.0
        %3208 = vmatpush1.msra.mxu0 0.0
        %3209 = vmatprep.subr.mxu0 0.0
        %3210 = vmatpush1.msra.mxu0 0.0
        %3211 = vmatprep.subr.mxu0 0.0
        %3212 = vmatpush1.msra.mxu0 0.0
        %3213 = vmatprep.subr.mxu0 0.0
        %3214 = vmatpush1.msra.mxu0 0.0
        %3215 = vmatprep.subr.mxu0 0.0
        %3216 = vmatpush1.msra.mxu0 0.0
        %3217 = vmatprep.subr.mxu0 0.0
        %3218 = vmatpush1.msra.mxu0 0.0
        %3219 = vmatprep.subr.mxu0 0.0
        %3220 = vmatpush1.msra.mxu0 0.0
        %3221 = vmatprep.subr.mxu0 0.0
        %3222 = vmatpush1.msra.mxu0 0.0
        %3223 = vmatprep.subr.mxu0 0.0
        %3224 = vmatpush1.msra.mxu0 0.0
        %3225 = vmatprep.subr.mxu0 0.0
        %3226 = vmatpush1.msra.mxu0 0.0
        %3227 = vmatprep.subr.mxu0 0.0
        %3228 = vmatpush1.msra.mxu0 0.0
        %3229 = vmatprep.subr.mxu0 0.0
        %3230 = vmatpush1.msra.mxu0 0.0
        %3231 = vmatprep.subr.mxu0 0.0
        %3232 = vmatpush1.msra.mxu0 0.0
        %3233 = vmatprep.subr.mxu0 0.0
        %3234 = vmatpush1.msra.mxu0 0.0
        %3235 = vmatprep.subr.mxu0 0.0
        %3236 = vmatpush1.msra.mxu0 0.0
        %3237 = vmatprep.subr.mxu0 0.0
        %3238 = vmatpush1.msra.mxu0 0.0
        %3239 = vmatprep.subr.mxu0 0.0
        %3240 = vmatpush1.msra.mxu0 0.0
        %3241 = vmatprep.subr.mxu0 0.0
        %3242 = vmatpush1.msra.mxu0 0.0
        %3243 = vmatprep.subr.mxu0 0.0
        %3244 = vmatpush1.msra.mxu0 0.0
        %3245 = vmatprep.subr.mxu0 0.0
        %3246 = vmatpush1.msra.mxu0 0.0
        %3247 = vmatprep.subr.mxu0 0.0
        %3248 = vmatpush1.msra.mxu0 0.0
        %3249 = vmatprep.subr.mxu0 0.0
        %3250 = vmatpush1.msra.mxu0 0.0
        %3251 = vmatprep.subr.mxu0 0.0
        %3252 = vmatpush1.msra.mxu0 0.0
        %3253 = vmatprep.subr.mxu0 0.0
        %3254 = vmatpush1.msra.mxu0 0.0
        %3255 = vmatprep.subr.mxu0 0.0
        %3256 = vmatpush1.msra.mxu0 0.0
        %3257 = vmatprep.subr.mxu0 0.0
        %3258 = vmatpush1.msra.mxu0 0.0
        %3259 = vmatprep.subr.mxu0 0.0
        %3260 = vmatpush1.msra.mxu0 0.0
        %3261 = vmatprep.subr.mxu0 0.0
        %3262 = vmatpush1.msra.mxu0 0.0
        %3263 = vmatprep.subr.mxu0 0.0
        %3264 = vmatpush1.msra.mxu0 0.0
        %3265 = vmatprep.mubr.f32.mxu0 0.0
        %3266 = vmatmul.mubr.f32.gmra.mrb[0].mxu0 %v3199
        %v3267 = vpop.f32.mrb[0].mxu0
        %v3268 = vadd.f32 %v3110, %v3267
        %v3269 = vpop.f32.mrb[0].mxu0
        %3270 = vdwg.mxu0
        %v3271 = vrcp.pop %v2959
        %v3272 = vmul.f32 %v3189, %v3271
        %v3273 = vrcp.pop %v2960
        %v3274 = vmul.f32 %v3268, %v3273
        %3277 = vrot.lane.b32.xlu0 %v3272, 24
        %v3278 = vpop.permute.xlu0 %3277
        %3279 = vrot.lane.b32.xlu0 %v3274, 24
        %v3280 = vpop.permute.xlu0 %3279
        %vm3283 = vcmask 261312
        %3284 = vst.msk [vmem:[#allocation2] sm:$0xff] %vm3283, %v3278
        %3285 = vst.msk [vmem:[#allocation2 + $0x8] sm:$0xff] %vm3283, %v3280
        %v3286 = vld [vmem:[#allocation2] sm:$0xff]
        %v3287 = vld [vmem:[#allocation2 + $0x8] sm:$0xff]
        %v3288 = vld [vmem:[#allocation3] sm:$0xff]
        %v3289 = vld [vmem:[#allocation3 + $0x8] sm:$0xff]
        %v3290 = vld [vmem:[#allocation3 + $0x10] sm:$0xff]
        %v3291 = vld [vmem:[#allocation3 + $0x18] sm:$0xff]
        %v3293 = vsel %vm295, %v3286, 0
        %v3296 = vsel %vm295, %v3287, 0
        %3298 = vmatprep.subr.mxu0 0.0
        %3299 = vmatpush1.msra.mxu0 %v3288
        %3300 = vmatprep.subr.mxu0 0.0
        %3301 = vmatpush1.msra.mxu0 %v3289
        %3302 = vmatprep.subr.mxu0 0.0
        %3303 = vmatpush1.msra.mxu0 %v3290
        %3304 = vmatprep.subr.mxu0 0.0
        %3305 = vmatpush1.msra.mxu0 %v3291
        %3306 = vmatprep.subr.mxu0 0.0
        %3307 = vmatpush1.msra.mxu0 0.0
        %3308 = vmatprep.subr.mxu0 0.0
        %3309 = vmatpush1.msra.mxu0 0.0
        %3310 = vmatprep.subr.mxu0 0.0
        %3311 = vmatpush1.msra.mxu0 0.0
        %3312 = vmatprep.subr.mxu0 0.0
        %3313 = vmatpush1.msra.mxu0 0.0
        %3314 = vmatprep.subr.mxu0 0.0
        %3315 = vmatpush1.msra.mxu0 0.0
        %3316 = vmatprep.subr.mxu0 0.0
        %3317 = vmatpush1.msra.mxu0 0.0
        %3318 = vmatprep.subr.mxu0 0.0
        %3319 = vmatpush1.msra.mxu0 0.0
        %3320 = vmatprep.subr.mxu0 0.0
        %3321 = vmatpush1.msra.mxu0 0.0
        %3322 = vmatprep.subr.mxu0 0.0
        %3323 = vmatpush1.msra.mxu0 0.0
        %3324 = vmatprep.subr.mxu0 0.0
        %3325 = vmatpush1.msra.mxu0 0.0
        %3326 = vmatprep.subr.mxu0 0.0
        %3327 = vmatpush1.msra.mxu0 0.0
        %3328 = vmatprep.subr.mxu0 0.0
        %3329 = vmatpush1.msra.mxu0 0.0
        %3330 = vmatprep.subr.mxu0 0.0
        %3331 = vmatpush1.msra.mxu0 0.0
        %3332 = vmatprep.subr.mxu0 0.0
        %3333 = vmatpush1.msra.mxu0 0.0
        %3334 = vmatprep.subr.mxu0 0.0
        %3335 = vmatpush1.msra.mxu0 0.0
        %3336 = vmatprep.subr.mxu0 0.0
        %3337 = vmatpush1.msra.mxu0 0.0
        %3338 = vmatprep.subr.mxu0 0.0
        %3339 = vmatpush1.msra.mxu0 0.0
        %3340 = vmatprep.subr.mxu0 0.0
        %3341 = vmatpush1.msra.mxu0 0.0
        %3342 = vmatprep.subr.mxu0 0.0
        %3343 = vmatpush1.msra.mxu0 0.0
        %3344 = vmatprep.subr.mxu0 0.0
        %3345 = vmatpush1.msra.mxu0 0.0
        %3346 = vmatprep.subr.mxu0 0.0
        %3347 = vmatpush1.msra.mxu0 0.0
        %3348 = vmatprep.subr.mxu0 0.0
        %3349 = vmatpush1.msra.mxu0 0.0
        %3350 = vmatprep.subr.mxu0 0.0
        %3351 = vmatpush1.msra.mxu0 0.0
        %3352 = vmatprep.subr.mxu0 0.0
        %3353 = vmatpush1.msra.mxu0 0.0
        %3354 = vmatprep.subr.mxu0 0.0
        %3355 = vmatpush1.msra.mxu0 0.0
        %3356 = vmatprep.subr.mxu0 0.0
        %3357 = vmatpush1.msra.mxu0 0.0
        %3358 = vmatprep.subr.mxu0 0.0
        %3359 = vmatpush1.msra.mxu0 0.0
        %3360 = vmatprep.subr.mxu0 0.0
        %3361 = vmatpush1.msra.mxu0 0.0
        %3362 = vmatprep.mubr.f32.mxu0 0.0
        %3363 = vmatmul.mubr.f32.gmra.mrb[0].mxu0 %v3293
        %v3364 = vpop.f32.mrb[0].mxu0
        %v3365 = vadd.f32 0.0, %v3364
        %v3366 = vpop.f32.mrb[0].mxu0
        %3367 = vmatprep.mubr.f32.mxu0 0.0
        %3368 = vmatmul.mubr.f32.gmra.mrb[0].mxu0 %v3296
        %v3369 = vpop.f32.mrb[0].mxu0
        %v3370 = vadd.f32 0.0, %v3369
        %v3371 = vpop.f32.mrb[0].mxu0
        %3372 = vdwg.mxu0
        %3373 = vst.msk [vmem:[%s276] sm:$0xff] %vm295, %v3365
        %3374 = vst.msk [vmem:[%s276 + $0x8] sm:$0xff] %vm295, %v3370
        %s3375 = sand.u32 %s165, 1
        %s3376 = scalar_lea.sflag [#allocation5], %s3375
        %s3377 = sand.u32 %s165, 1
        %s3378 = smul.addr %s3377, 16
        %s3379 = scalar_lea.vmem [#allocation6], %s3378
        // Predicated region
        $region49: #{tpu_custom_call.1} parent=43 // pred_check
          %p3380 = pneg %p175
        $region50: #{tpu_custom_call.1} parent=43 // pred_check_branch
          %3382 = sbr.rel (%p3380) target = $region52
        $region51: #{tpu_custom_call.1} parent=43 // pred_region
          %s3383 = smul.u32 2, %s21
          %s3385 = ssub.s32 256, 256
          %3386 = vsyncadd %s3376, %s3385
          %s3387 = smul.addr %s3383, 128
          %s3388 = scalar_lea.hbm %s6, %s3387
          %s3389 = sshll.u32 %s3379, 4
          %s3390 = int_to_ptr.vmem [resolvable:$true] %s3389
          %3395 = dma.vmem_to_hbm [thread:$0]  %s3390, 256, %s3388, %s3376, 128, 128, 8
        $region52: #{tpu_custom_call.1} parent=43 // pred_fallthru
          _
      $region44: #{tpu_custom_call.1} parent=5 // pred_fallthru
        _
      %p3396 = scmp.le.s32.totalorder 2, %s16
      // Predicated region
      $region53: #{tpu_custom_call.1} parent=5 // pred_check
        %p3397 = pneg %p3396
      $region54: #{tpu_custom_call.1} parent=5 // pred_check_branch
        %3399 = sbr.rel (%p3397) target = $region56
      $region55: #{tpu_custom_call.1} parent=5 // pred_region
        %s3400 = ssub.s32 %s16, 2
        // Predicated region
        $region57: #{tpu_custom_call.1} parent=55 // pred_check
          %p3401 = pneg %p181
        $region58: #{tpu_custom_call.1} parent=55 // pred_check_branch
          %3403 = sbr.rel (%p3401) target = $region60
        $region59: #{tpu_custom_call.1} parent=55 // pred_region
          %s3404 = sand.u32 %s166, 1
          %s3405 = scalar_lea.sflag [#allocation5], %s3404
          %s3406 = sand.u32 %s166, 1
          %s3407 = smul.addr %s3406, 16
          %s3408 = scalar_lea.vmem [#allocation6], %s3407
          %3409 = dma.done %s3405, 256
        $region60: #{tpu_custom_call.1} parent=55 // pred_fallthru
          _
      $region56: #{tpu_custom_call.1} parent=5 // pred_fallthru
        _
    $region6: #{tpu_custom_call.1} parent=1 // loop_footer
      %s20 = sadd.s32 1, %s16
    $region7: #{tpu_custom_call.1} parent=1 // loop_footer_branch
      %15 = sbr.rel target = $region3
    $region8: #{tpu_custom_call.1} parent=1 // loop_exit
      _
    %3410 = vsyncpa [#allocation4], 1
    %s3411 = scalar_lea.sflag [#allocation4], 1
    %3412 = vsyncpa %s3411, 1
    %3413 = vsyncpa [#allocation5], 1
    %s3414 = scalar_lea.sflag [#allocation5], 1
    %3415 = vsyncpa %s3414, 1

</llo_original>
